<compile_context>
chip_gen: v7x
topology: tpu7x:2x2x1
jax: 0.10.0
libtpu: 0.0.40
codegen_flags: <defaults>
</compile_context>

<pallas_src>
import functools

import jax
import jax.numpy as jnp
from jax.experimental import pallas as pl
from jax.experimental.pallas import tpu as pltpu

BN_EPS = 1e-5


# ----------------------------- Pallas kernels -------------------------------

def _mm_bn_act_kernel(x_ref, w_ref, shift_ref, o_ref, *, apply_relu):
    # (tm, Kp) bf16 @ (Kp, tn) bf16 -> f32 on the MXU, + per-channel shift, ReLU.
    y = jnp.dot(x_ref[...], w_ref[...], preferred_element_type=jnp.float32)
    y = y + shift_ref[...]
    if apply_relu:
        y = jnp.maximum(y, 0.0)
    o_ref[...] = y.astype(o_ref.dtype)


def _mm_bn_relu_residual_kernel(x_ref, w_ref, shift_ref, id_ref, o_ref):
    # conv3 + BN3 + ReLU3 (last stage of `convs`), then fused residual add +
    # output ReLU -- exactly the reference: relu(relu(bn3(conv3)) + identity).
    y = jnp.dot(x_ref[...], w_ref[...], preferred_element_type=jnp.float32)
    y = jnp.maximum(y + shift_ref[...], 0.0)
    y = jnp.maximum(y + id_ref[...].astype(jnp.float32), 0.0)
    o_ref[...] = y.astype(o_ref.dtype)


def _conv3x3_kernel(ph_ref, w_ref, shift_ref, o_ref, *, stride, ho, wo):
    # ph_ref: (P, phr, phc, Cp) bf16 phases of the padded activation for one
    #         image (P = stride*stride); every tap is a *contiguous* window.
    # w_ref:  (9, Cp, tn) bf16 (BN scale folded);  shift_ref: (1, tn) f32.
    cp = w_ref.shape[1]
    tn = w_ref.shape[2]
    acc = jnp.zeros((ho * wo, tn), jnp.float32)
    for ky in range(3):
        for kx in range(3):
            phase = (ky % stride) * stride + (kx % stride)
            oy, ox = ky // stride, kx // stride
            patch = ph_ref[phase, oy:oy + ho, ox:ox + wo, :]      # (ho, wo, cp)
            acc = acc + jnp.dot(patch.reshape(ho * wo, cp),
                                w_ref[ky * 3 + kx],
                                preferred_element_type=jnp.float32)
    y = jnp.maximum(acc + shift_ref[...], 0.0)
    o_ref[0] = y.astype(o_ref.dtype)


# ------------------------------ helpers --------------------------------------

def _round_up(a, m):
    return (a + m - 1) // m * m


def _choose_m_tile(m, pref=512):
    """Largest tile <= pref that divides M exactly with >= 2 tiles (keeps both
    v7x TensorCores busy; 512/256-row blocks sit near the HBM roofline on
    v5e/v6e); fall back to a single unpadded tile, then to minimal padding."""
    for t in (512, 256, 128, 64, 32, 16):
        if t <= pref and m % t == 0 and m // t >= 2:
            return m, t
    if m % 16 == 0 and m <= pref:
        return m, m
    mp = _round_up(m, 16)
    if mp <= pref:
        return mp, mp
    return _round_up(m, 256), 256


def _vmem_limit_bytes(block_bytes):
    # Actual double-buffered block footprint + compiler scratch headroom.
    # Sized to the kernel's real need so co-resident XLA fusions keep VMEM
    # even on the 64 MiB v7x.
    return int(max(2 * block_bytes + (4 << 20), 8 << 20))


def _pad_last(x, target):
    pad = target - x.shape[-1]
    return x if pad == 0 else jnp.pad(x, ((0, 0), (0, pad)))


def _pad_rows(x, target):
    pad = target - x.shape[0]
    return x if pad == 0 else jnp.pad(x, ((0, pad), (0, 0)))


def _phase_decompose(x, stride):
    """x: (N, H, W, Cp) bf16.  Returns (phases, Ho, Wo) with
    phases[n*P + py*stride + px, r, c, :] == padded_x[n, r*stride+py, c*stride+px, :]
    (P = stride*stride).  Every 3x3 tap then reads a contiguous (Ho, Wo) window
    of one phase, so conv2 accumulates 9 tap-matmuls straight from VMEM with
    no im2col patch matrix in HBM."""
    n, h, w, cp = x.shape
    s = stride
    ho = (h - 1) // s + 1
    wo = (w - 1) // s + 1
    phr = ho + 2 // s
    phc = wo + 2 // s
    hp, wp = s * phr, s * phc
    xp = jnp.pad(x, ((0, 0), (1, hp - h - 1), (1, wp - w - 1), (0, 0)))
    xr = xp.reshape(n, phr, s, phc, s, cp)
    phases = jnp.transpose(xr, (0, 2, 4, 1, 3, 5)).reshape(n * s * s, phr, phc, cp)
    return phases, ho, wo


# ---------------------------- fused 1x1 matmul --------------------------------

def fused_matmul(lhs, layer, *, apply_relu, identity=None):
    """lhs: (M, Kp) bf16.  layer["w"]: (Kp, Np) bf16 (BN scale folded);
    layer["shift"]: (1, Np) f32.  identity: optional (M, Np) bf16 residual to
    fuse (conv3 path).  Returns (M, Np) bf16."""
    m, kp = lhs.shape
    w, shift = layer["w"], layer["shift"]
    assert w.shape[0] == kp, (w.shape, kp)
    np_ = w.shape[1]

    mp, tm = _choose_m_tile(m)
    # Full-N tile when the weight fits comfortably in VMEM: weight/shift
    # (and identity) blocks become grid-invariant, so weights are DMA'd once
    # and the LHS streams exactly once.
    tn = np_ if np_ <= 1024 else (256 if np_ % 256 == 0 else 128)
    grid = (mp // tm, np_ // tn)

    lhs_p = lhs if mp == m else _pad_rows(lhs, mp)
    in_specs = [
        pl.BlockSpec((tm, kp), lambda i, j: (i, 0)),
        pl.BlockSpec((kp, tn), lambda i, j: (0, j)),
        pl.BlockSpec((1, tn), lambda i, j: (0, j)),
    ]
    args = [lhs_p, w, shift]
    block_bytes = tm * kp * 2 + kp * tn * 2 + tn * 4 + tm * tn * 2
    bytes_accessed = (mp * kp + kp * np_ + mp * np_) * 2 + np_ * 4

    if identity is None:
        kernel = functools.partial(_mm_bn_act_kernel, apply_relu=apply_relu)
    else:
        assert apply_relu, "residual path fuses ReLU3 + add + out_ReLU"
        kernel = _mm_bn_relu_residual_kernel
        id_p = identity if mp == m else _pad_rows(identity, mp)
        in_specs.append(pl.BlockSpec((tm, tn), lambda i, j: (i, j)))
        args.append(id_p)
        block_bytes += tm * tn * 2
        bytes_accessed += mp * np_ * 2

    out = pl.pallas_call(
        kernel,
        out_shape=jax.ShapeDtypeStruct((mp, np_), jnp.bfloat16),
        grid_spec=pltpu.PrefetchScalarGridSpec(
            num_scalar_prefetch=0,
            grid=grid,
            in_specs=in_specs,
            out_specs=pl.BlockSpec((tm, tn), lambda i, j: (i, j)),
        ),
        compiler_params=pltpu.CompilerParams(
            dimension_semantics=("parallel", "parallel"),
            vmem_limit_bytes=_vmem_limit_bytes(block_bytes),
        ),
        cost_estimate=pl.CostEstimate(
            flops=2 * mp * kp * np_, transcendentals=0,
            bytes_accessed=bytes_accessed),
    )(*args)
    return out if mp == m else out[:m]


# ------------------------- fused 3x3 conv (tap loop) --------------------------

def conv3x3_bn_relu(phases, layer, *, stride, ho, wo):
    """phases: (N*P, phr, phc, Cp) bf16 from _phase_decompose.
    layer["w"]: (9, Cp, Np) bf16; layer["shift"]: (1, Np) f32.
    Returns (N*Ho*Wo, Np) bf16."""
    p = stride * stride
    n = phases.shape[0] // p
    _, phr, phc, cp = phases.shape
    w, shift = layer["w"], layer["shift"]
    assert w.shape[0] == 9 and w.shape[1] == cp, (w.shape, cp)
    np_ = w.shape[2]
    tn = np_ if np_ <= 1024 else (256 if np_ % 256 == 0 else 128)
    grid = (n, np_ // tn)

    block_bytes = (p * phr * phc * cp * 2 + 9 * cp * tn * 2 + tn * 4
                   + ho * wo * tn * 2)
    bytes_accessed = (n * p * phr * phc * cp + 9 * cp * np_
                      + n * ho * wo * np_) * 2 + np_ * 4

    out = pl.pallas_call(
        functools.partial(_conv3x3_kernel, stride=stride, ho=ho, wo=wo),
        out_shape=jax.ShapeDtypeStruct((n, ho * wo, np_), jnp.bfloat16),
        grid_spec=pltpu.PrefetchScalarGridSpec(
            num_scalar_prefetch=0,
            grid=grid,
            in_specs=[
                pl.BlockSpec((p, phr, phc, cp), lambda i, j: (i, 0, 0, 0)),
                pl.BlockSpec((9, cp, tn), lambda i, j: (0, 0, j)),
                pl.BlockSpec((1, tn), lambda i, j: (0, j)),
            ],
            out_specs=pl.BlockSpec((1, ho * wo, tn), lambda i, j: (i, 0, j)),
        ),
        compiler_params=pltpu.CompilerParams(
            dimension_semantics=("parallel", "parallel"),
            vmem_limit_bytes=_vmem_limit_bytes(block_bytes),
        ),
        cost_estimate=pl.CostEstimate(
            flops=2 * n * ho * wo * 9 * cp * np_, transcendentals=0,
            bytes_accessed=bytes_accessed),
        # TODO(synk): at large spatial resolutions the per-image phase block
        # should be row-tiled (halo rows) instead of whole-image.
    )(phases, w, shift)
    return out.reshape(n * ho * wo, np_)


# ------------------------------- ConvBlock -----------------------------------

def conv_block_forward(x_nchw, params, *, cfg):
    """Forward pass of ConvBlock.  x_nchw: (N, C, H, W) f32.  Returns NCHW f32."""
    stride = cfg["stride"]
    out_c = 4 * cfg["mid_channel"]

    x = jnp.transpose(x_nchw, (0, 2, 3, 1)).astype(jnp.bfloat16)   # NHWC bf16
    n, h, w, c = x.shape

    # conv1 (1x1) + BN + ReLU
    kp1 = params["c1"]["w"].shape[0]
    lhs1 = x.reshape(n * h * w, c)
    if c != kp1:
        lhs1 = _pad_last(lhs1, kp1)
    y1 = fused_matmul(lhs1, params["c1"], apply_relu=True)
    cp = y1.shape[1]                   # padded mid channels (= conv2's K/tap)

    # conv2 (3x3, stride, pad=1) + BN + ReLU  -- 9-tap in-VMEM accumulation.
    phases, ho, wo = _phase_decompose(y1.reshape(n, h, w, cp), stride)
    y2 = conv3x3_bn_relu(phases, params["c2"], stride=stride, ho=ho, wo=wo)

    # identity branch
    np3 = params["c3"]["w"].shape[1]
    if "ds" in params:
        # TODO(synk): the downsample stride/pad is still an XLA strided-slice;
        # it is the smallest activation tensor in the block.
        xs = x[:, ::stride, ::stride, :].reshape(n * ho * wo, c)
        kpd = params["ds"]["w"].shape[0]
        if c != kpd:
            xs = _pad_last(xs, kpd)
        identity = fused_matmul(xs, params["ds"], apply_relu=False)
    else:
        assert stride == 1 and c == out_c
        identity = x.reshape(n * h * w, c)
        if identity.shape[1] != np3:
            identity = _pad_last(identity, np3)

    # conv3 (1x1) + BN + ReLU (end of `convs`), fused with residual add +
    # out_ReLU.  y2's padded channels == c3's Kp, so it is the LHS directly.
    y3 = fused_matmul(y2, params["c3"], apply_relu=True, identity=identity)

    out = y3 if y3.shape[1] == out_c else y3[:, :out_c]
    out = out.reshape(n, ho, wo, out_c).astype(jnp.float32)
    return jnp.transpose(out, (0, 3, 1, 2))


# --------------------------- deterministic init -------------------------------

def init_conv_bn(key, kh, kw, cin, cout, *, k_align=128, n_align=128):
    """Conv(bias=False)+BN(eval), pre-packed for the MXU at init:
    weights -> (Cp, Np) bf16 for 1x1 or (9, Cp, Np) bf16 for 3x3, with the BN
    scale folded in; shift -> (1, Np) f32."""
    kw_, kg, kb = jax.random.split(key, 3)
    fan_in = kh * kw * cin
    w = jax.random.normal(kw_, (kh, kw, cin, cout), jnp.float32) * jnp.sqrt(
        2.0 / fan_in)
    gamma = 1.0 + 0.05 * jax.random.normal(kg, (cout,), jnp.float32)
    beta = 0.05 * jax.random.normal(kb, (cout,), jnp.float32)
    running_mean = jnp.zeros((cout,), jnp.float32)
    running_var = jnp.ones((cout,), jnp.float32)
    scale = gamma / jnp.sqrt(running_var + BN_EPS)
    shift = beta - running_mean * scale
    w_folded = (w * scale).reshape(kh * kw, cin, cout)   # fold BN scale
    cp = _round_up(cin, k_align)
    np_ = _round_up(cout, n_align)
    wp = jnp.zeros((kh * kw, cp, np_), jnp.float32)
    wp = wp.at[:, :cin, :cout].set(w_folded).astype(jnp.bfloat16)
    if kh * kw == 1:
        wp = wp.reshape(cp, np_)
    shift_p = jnp.zeros((1, np_), jnp.float32).at[0, :cout].set(shift)
    return {"w": wp, "shift": shift_p}


def make_conv_block(key, in_channel, mid_channel, stride=1, with_downsample=None):
    if with_downsample is None:
        with_downsample = (stride != 1) or (in_channel != 4 * mid_channel)
    keys = jax.random.split(key, 4)
    params = {
        # convs reading the external input use k_align=16 (no K pad copy when
        # the input channels are already a sublane multiple); inter-layer Ks
        # stay 128-aligned to match the producing kernel's lane-padded output.
        "c1": init_conv_bn(keys[0], 1, 1, in_channel, mid_channel, k_align=16),
        "c2": init_conv_bn(keys[1], 3, 3, mid_channel, mid_channel, k_align=128),
        "c3": init_conv_bn(keys[2], 1, 1, mid_channel, 4 * mid_channel,
                           k_align=128),
    }
    if with_downsample:
        params["ds"] = init_conv_bn(keys[3], 1, 1, in_channel, 4 * mid_channel,
                                    k_align=16)
    cfg = {"stride": stride, "mid_channel": mid_channel}
    return params, cfg


# ------------------------------- main -----------------------------------------

if __name__ == "__main__":
    key = jax.random.PRNGKey(0)
    kx, kb1, kb2 = jax.random.split(key, 3)

    # Stage-entry bottleneck: stride 2, with downsample branch.
    x = jax.random.normal(kx, (2, 64, 16, 16), jnp.float32)  # NCHW, like PyTorch
    params1, cfg1 = make_conv_block(kb1, in_channel=64, mid_channel=64, stride=2)
    fwd1 = jax.jit(functools.partial(conv_block_forward, cfg=cfg1))
    y1 = fwd1(x, params1)
    jax.block_until_ready(y1)
    assert y1.shape == (2, 256, 8, 8), y1.shape

    # Identity bottleneck: stride 1, no downsample (in_channel == 4*mid).
    params2, cfg2 = make_conv_block(kb2, in_channel=256, mid_channel=64, stride=1)
    fwd2 = jax.jit(functools.partial(conv_block_forward, cfg=cfg2))
    y2 = fwd2(y1, params2)
    jax.block_until_ready(y2)
    assert y2.shape == (2, 256, 8, 8), y2.shape

    print("KERNEL_OK")
</pallas_src>

<mosaic_0001>
module attributes {stable_mosaic.version = 11 : i64} {
  func.func @_mm_bn_act_kernel(%arg0: i32, %arg1: i32, %arg2: memref<256x64xbf16, #tpu.memory_space<vmem>>, %arg3: memref<64x128xbf16, #tpu.memory_space<vmem>>, %arg4: memref<1x128xf32, #tpu.memory_space<vmem>>, %arg5: memref<256x128xbf16, #tpu.memory_space<vmem>>) attributes {dimension_semantics = [#tpu.dimension_semantics<parallel>, #tpu.dimension_semantics<parallel>], iteration_bounds = array<i64: 2, 1>, scalar_prefetch = 0 : i64, scratch_operands = 0 : i64, tpu.core_type = #tpu.core_type<tc>, window_params = [{transform_indices = @transform_0, window_bounds = array<i64: 256, 64>}, {transform_indices = @transform_1, window_bounds = array<i64: 64, 128>}, {transform_indices = @transform_2, window_bounds = array<i64: 1, 128>}, {transform_indices = @transform_3, window_bounds = array<i64: 256, 128>}]} {
    %c0 = arith.constant 0 : index
    %c0_0 = arith.constant 0 : index
    %0 = vector.load %arg2[%c0, %c0_0] : memref<256x64xbf16, #tpu.memory_space<vmem>>, vector<256x64xbf16>
    %c0_1 = arith.constant 0 : index
    %c0_2 = arith.constant 0 : index
    %1 = vector.load %arg3[%c0_1, %c0_2] : memref<64x128xbf16, #tpu.memory_space<vmem>>, vector<64x128xbf16>
    %cst = arith.constant dense<0.000000e+00> : vector<256x128xf32>
    %2 = tpu.matmul %0, %1, %cst {dimension_numbers = #tpu.dot_dimension_numbers<[1], [0], [0], [1], [0, 0, 1, 1], [], []>} : vector<256x64xbf16>, vector<64x128xbf16>, vector<256x128xf32> -> vector<256x128xf32>
    %c0_3 = arith.constant 0 : index
    %c0_4 = arith.constant 0 : index
    %3 = vector.load %arg4[%c0_3, %c0_4] : memref<1x128xf32, #tpu.memory_space<vmem>>, vector<1x128xf32>
    %4 = vector.broadcast %3 : vector<1x128xf32> to vector<256x128xf32>
    %5 = arith.addf %2, %4 : vector<256x128xf32>
    %cst_5 = arith.constant 0.000000e+00 : f32
    %6 = vector.broadcast %cst_5 : f32 to vector<256x128xf32>
    %7 = arith.maximumf %5, %6 : vector<256x128xf32>
    %8 = arith.truncf %7 : vector<256x128xf32> to vector<256x128xbf16>
    %c0_6 = arith.constant 0 : index
    %c0_7 = arith.constant 0 : index
    %9 = vector.load %arg5[%c0_6, %c0_7] : memref<256x128xbf16, #tpu.memory_space<vmem>>, vector<256x128xbf16>
    tpu.vector_store %arg5[%c0_6, %c0_7], %8 {strides = array<i32>} : memref<256x128xbf16, #tpu.memory_space<vmem>>, vector<256x128xbf16>,
    return
  }
  func.func @transform_0(%arg0: i32, %arg1: i32) -> (i32, i32) {
    %c0_i32 = arith.constant 0 : i32
    %c0_i32_0 = arith.constant 0 : i32
    return %arg0, %c0_i32 : i32, i32
  }
  func.func @transform_1(%arg0: i32, %arg1: i32) -> (i32, i32) {
    %c0_i32 = arith.constant 0 : i32
    %c0_i32_0 = arith.constant 0 : i32
    return %c0_i32, %arg1 : i32, i32
  }
  func.func @transform_2(%arg0: i32, %arg1: i32) -> (i32, i32) {
    %c0_i32 = arith.constant 0 : i32
    %c0_i32_0 = arith.constant 0 : i32
    return %c0_i32, %arg1 : i32, i32
  }
  func.func @transform_3(%arg0: i32, %arg1: i32) -> (i32, i32) {
    %c0_i32 = arith.constant 0 : i32
    return %arg0, %arg1 : i32, i32
  }
}

module attributes {stable_mosaic.version = 11 : i64} {
  func.func @_conv3x3_kernel(%arg0: i32, %arg1: i32, %arg2: memref<4x9x9x128xbf16, #tpu.memory_space<vmem>>, %arg3: memref<9x128x128xbf16, #tpu.memory_space<vmem>>, %arg4: memref<1x128xf32, #tpu.memory_space<vmem>>, %arg5: memref<1x64x128xbf16, #tpu.memory_space<vmem>>) attributes {dimension_semantics = [#tpu.dimension_semantics<parallel>, #tpu.dimension_semantics<parallel>], iteration_bounds = array<i64: 2, 1>, scalar_prefetch = 0 : i64, scratch_operands = 0 : i64, tpu.core_type = #tpu.core_type<tc>, window_params = [{transform_indices = @transform_0, window_bounds = array<i64: 4, 9, 9, 128>}, {transform_indices = @transform_1, window_bounds = array<i64: 9, 128, 128>}, {transform_indices = @transform_2, window_bounds = array<i64: 1, 128>}, {transform_indices = @transform_3, window_bounds = array<i64: 1, 64, 128>}]} {
    %cst = arith.constant 0.000000e+00 : f32
    %0 = vector.broadcast %cst : f32 to vector<64x128xf32>
    %c0 = arith.constant 0 : index
    %c0_0 = arith.constant 0 : index
    %c0_1 = arith.constant 0 : index
    %c0_2 = arith.constant 0 : index
    %1 = vector.load %arg2[%c0, %c0_0, %c0_1, %c0_2] : memref<4x9x9x128xbf16, #tpu.memory_space<vmem>>, vector<1x8x8x128xbf16>
    %2 = vector.shape_cast %1 : vector<1x8x8x128xbf16> to vector<8x8x128xbf16>
    %3 = vector.shape_cast %2 : vector<8x8x128xbf16> to vector<64x128xbf16>
    %c0_3 = arith.constant 0 : index
    %c0_4 = arith.constant 0 : index
    %c0_5 = arith.constant 0 : index
    %4 = vector.load %arg3[%c0_3, %c0_4, %c0_5] : memref<9x128x128xbf16, #tpu.memory_space<vmem>>, vector<1x128x128xbf16>
    %5 = vector.shape_cast %4 : vector<1x128x128xbf16> to vector<128x128xbf16>
    %cst_6 = arith.constant dense<0.000000e+00> : vector<64x128xf32>
    %6 = tpu.matmul %3, %5, %cst_6 {dimension_numbers = #tpu.dot_dimension_numbers<[1], [0], [0], [1], [0, 0, 1, 1], [], []>} : vector<64x128xbf16>, vector<128x128xbf16>, vector<64x128xf32> -> vector<64x128xf32>
    %7 = arith.addf %0, %6 : vector<64x128xf32>
    %c1 = arith.constant 1 : index
    %c0_7 = arith.constant 0 : index
    %c0_8 = arith.constant 0 : index
    %c0_9 = arith.constant 0 : index
    %8 = vector.load %arg2[%c1, %c0_7, %c0_8, %c0_9] : memref<4x9x9x128xbf16, #tpu.memory_space<vmem>>, vector<1x8x8x128xbf16>
    %9 = vector.shape_cast %8 : vector<1x8x8x128xbf16> to vector<8x8x128xbf16>
    %10 = vector.shape_cast %9 : vector<8x8x128xbf16> to vector<64x128xbf16>
    %c1_10 = arith.constant 1 : index
    %c0_11 = arith.constant 0 : index
    %c0_12 = arith.constant 0 : index
    %11 = vector.load %arg3[%c1_10, %c0_11, %c0_12] : memref<9x128x128xbf16, #tpu.memory_space<vmem>>, vector<1x128x128xbf16>
    %12 = vector.shape_cast %11 : vector<1x128x128xbf16> to vector<128x128xbf16>
    %cst_13 = arith.constant dense<0.000000e+00> : vector<64x128xf32>
    %13 = tpu.matmul %10, %12, %cst_13 {dimension_numbers = #tpu.dot_dimension_numbers<[1], [0], [0], [1], [0, 0, 1, 1], [], []>} : vector<64x128xbf16>, vector<128x128xbf16>, vector<64x128xf32> -> vector<64x128xf32>
    %14 = arith.addf %7, %13 : vector<64x128xf32>
    %c0_14 = arith.constant 0 : index
    %c0_15 = arith.constant 0 : index
    %c1_16 = arith.constant 1 : index
    %c0_17 = arith.constant 0 : index
    %15 = vector.load %arg2[%c0_14, %c0_15, %c1_16, %c0_17] : memref<4x9x9x128xbf16, #tpu.memory_space<vmem>>, vector<1x8x8x128xbf16>
    %16 = vector.shape_cast %15 : vector<1x8x8x128xbf16> to vector<8x8x128xbf16>
    %17 = vector.shape_cast %16 : vector<8x8x128xbf16> to vector<64x128xbf16>
    %c2 = arith.constant 2 : index
    %c0_18 = arith.constant 0 : index
    %c0_19 = arith.constant 0 : index
    %18 = vector.load %arg3[%c2, %c0_18, %c0_19] : memref<9x128x128xbf16, #tpu.memory_space<vmem>>, vector<1x128x128xbf16>
    %19 = vector.shape_cast %18 : vector<1x128x128xbf16> to vector<128x128xbf16>
    %cst_20 = arith.constant dense<0.000000e+00> : vector<64x128xf32>
    %20 = tpu.matmul %17, %19, %cst_20 {dimension_numbers = #tpu.dot_dimension_numbers<[1], [0], [0], [1], [0, 0, 1, 1], [], []>} : vector<64x128xbf16>, vector<128x128xbf16>, vector<64x128xf32> -> vector<64x128xf32>
    %21 = arith.addf %14, %20 : vector<64x128xf32>
    %c2_21 = arith.constant 2 : index
    %c0_22 = arith.constant 0 : index
    %c0_23 = arith.constant 0 : index
    %c0_24 = arith.constant 0 : index
    %22 = vector.load %arg2[%c2_21, %c0_22, %c0_23, %c0_24] : memref<4x9x9x128xbf16, #tpu.memory_space<vmem>>, vector<1x8x8x128xbf16>
    %23 = vector.shape_cast %22 : vector<1x8x8x128xbf16> to vector<8x8x128xbf16>
    %24 = vector.shape_cast %23 : vector<8x8x128xbf16> to vector<64x128xbf16>
    %c3 = arith.constant 3 : index
    %c0_25 = arith.constant 0 : index
    %c0_26 = arith.constant 0 : index
    %25 = vector.load %arg3[%c3, %c0_25, %c0_26] : memref<9x128x128xbf16, #tpu.memory_space<vmem>>, vector<1x128x128xbf16>
    %26 = vector.shape_cast %25 : vector<1x128x128xbf16> to vector<128x128xbf16>
    %cst_27 = arith.constant dense<0.000000e+00> : vector<64x128xf32>
    %27 = tpu.matmul %24, %26, %cst_27 {dimension_numbers = #tpu.dot_dimension_numbers<[1], [0], [0], [1], [0, 0, 1, 1], [], []>} : vector<64x128xbf16>, vector<128x128xbf16>, vector<64x128xf32> -> vector<64x128xf32>
    %28 = arith.addf %21, %27 : vector<64x128xf32>
    %c3_28 = arith.constant 3 : index
    %c0_29 = arith.constant 0 : index
    %c0_30 = arith.constant 0 : index
    %c0_31 = arith.constant 0 : index
    %29 = vector.load %arg2[%c3_28, %c0_29, %c0_30, %c0_31] : memref<4x9x9x128xbf16, #tpu.memory_space<vmem>>, vector<1x8x8x128xbf16>
    %30 = vector.shape_cast %29 : vector<1x8x8x128xbf16> to vector<8x8x128xbf16>
    %31 = vector.shape_cast %30 : vector<8x8x128xbf16> to vector<64x128xbf16>
    %c4 = arith.constant 4 : index
    %c0_32 = arith.constant 0 : index
    %c0_33 = arith.constant 0 : index
    %32 = vector.load %arg3[%c4, %c0_32, %c0_33] : memref<9x128x128xbf16, #tpu.memory_space<vmem>>, vector<1x128x128xbf16>
    %33 = vector.shape_cast %32 : vector<1x128x128xbf16> to vector<128x128xbf16>
    %cst_34 = arith.constant dense<0.000000e+00> : vector<64x128xf32>
    %34 = tpu.matmul %31, %33, %cst_34 {dimension_numbers = #tpu.dot_dimension_numbers<[1], [0], [0], [1], [0, 0, 1, 1], [], []>} : vector<64x128xbf16>, vector<128x128xbf16>, vector<64x128xf32> -> vector<64x128xf32>
    %35 = arith.addf %28, %34 : vector<64x128xf32>
    %c2_35 = arith.constant 2 : index
    %c0_36 = arith.constant 0 : index
    %c1_37 = arith.constant 1 : index
    %c0_38 = arith.constant 0 : index
    %36 = vector.load %arg2[%c2_35, %c0_36, %c1_37, %c0_38] : memref<4x9x9x128xbf16, #tpu.memory_space<vmem>>, vector<1x8x8x128xbf16>
    %37 = vector.shape_cast %36 : vector<1x8x8x128xbf16> to vector<8x8x128xbf16>
    %38 = vector.shape_cast %37 : vector<8x8x128xbf16> to vector<64x128xbf16>
    %c5 = arith.constant 5 : index
    %c0_39 = arith.constant 0 : index
    %c0_40 = arith.constant 0 : index
    %39 = vector.load %arg3[%c5, %c0_39, %c0_40] : memref<9x128x128xbf16, #tpu.memory_space<vmem>>, vector<1x128x128xbf16>
    %40 = vector.shape_cast %39 : vector<1x128x128xbf16> to vector<128x128xbf16>
    %cst_41 = arith.constant dense<0.000000e+00> : vector<64x128xf32>
    %41 = tpu.matmul %38, %40, %cst_41 {dimension_numbers = #tpu.dot_dimension_numbers<[1], [0], [0], [1], [0, 0, 1, 1], [], []>} : vector<64x128xbf16>, vector<128x128xbf16>, vector<64x128xf32> -> vector<64x128xf32>
    %42 = arith.addf %35, %41 : vector<64x128xf32>
    %c0_42 = arith.constant 0 : index
    %c1_43 = arith.constant 1 : index
    %c0_44 = arith.constant 0 : index
    %c0_45 = arith.constant 0 : index
    %43 = vector.load %arg2[%c0_42, %c1_43, %c0_44, %c0_45] : memref<4x9x9x128xbf16, #tpu.memory_space<vmem>>, vector<1x8x8x128xbf16>
    %44 = vector.shape_cast %43 : vector<1x8x8x128xbf16> to vector<8x8x128xbf16>
    %45 = vector.shape_cast %44 : vector<8x8x128xbf16> to vector<64x128xbf16>
    %c6 = arith.constant 6 : index
    %c0_46 = arith.constant 0 : index
    %c0_47 = arith.constant 0 : index
    %46 = vector.load %arg3[%c6, %c0_46, %c0_47] : memref<9x128x128xbf16, #tpu.memory_space<vmem>>, vector<1x128x128xbf16>
    %47 = vector.shape_cast %46 : vector<1x128x128xbf16> to vector<128x128xbf16>
    %cst_48 = arith.constant dense<0.000000e+00> : vector<64x128xf32>
    %48 = tpu.matmul %45, %47, %cst_48 {dimension_numbers = #tpu.dot_dimension_numbers<[1], [0], [0], [1], [0, 0, 1, 1], [], []>} : vector<64x128xbf16>, vector<128x128xbf16>, vector<64x128xf32> -> vector<64x128xf32>
    %49 = arith.addf %42, %48 : vector<64x128xf32>
    %c1_49 = arith.constant 1 : index
    %c1_50 = arith.constant 1 : index
    %c0_51 = arith.constant 0 : index
    %c0_52 = arith.constant 0 : index
    %50 = vector.load %arg2[%c1_49, %c1_50, %c0_51, %c0_52] : memref<4x9x9x128xbf16, #tpu.memory_space<vmem>>, vector<1x8x8x128xbf16>
    %51 = vector.shape_cast %50 : vector<1x8x8x128xbf16> to vector<8x8x128xbf16>
    %52 = vector.shape_cast %51 : vector<8x8x128xbf16> to vector<64x128xbf16>
    %c7 = arith.constant 7 : index
    %c0_53 = arith.constant 0 : index
    %c0_54 = arith.constant 0 : index
    %53 = vector.load %arg3[%c7, %c0_53, %c0_54] : memref<9x128x128xbf16, #tpu.memory_space<vmem>>, vector<1x128x128xbf16>
    %54 = vector.shape_cast %53 : vector<1x128x128xbf16> to vector<128x128xbf16>
    %cst_55 = arith.constant dense<0.000000e+00> : vector<64x128xf32>
    %55 = tpu.matmul %52, %54, %cst_55 {dimension_numbers = #tpu.dot_dimension_numbers<[1], [0], [0], [1], [0, 0, 1, 1], [], []>} : vector<64x128xbf16>, vector<128x128xbf16>, vector<64x128xf32> -> vector<64x128xf32>
    %56 = arith.addf %49, %55 : vector<64x128xf32>
    %c0_56 = arith.constant 0 : index
    %c1_57 = arith.constant 1 : index
    %c1_58 = arith.constant 1 : index
    %c0_59 = arith.constant 0 : index
    %57 = vector.load %arg2[%c0_56, %c1_57, %c1_58, %c0_59] : memref<4x9x9x128xbf16, #tpu.memory_space<vmem>>, vector<1x8x8x128xbf16>
    %58 = vector.shape_cast %57 : vector<1x8x8x128xbf16> to vector<8x8x128xbf16>
    %59 = vector.shape_cast %58 : vector<8x8x128xbf16> to vector<64x128xbf16>
    %c8 = arith.constant 8 : index
    %c0_60 = arith.constant 0 : index
    %c0_61 = arith.constant 0 : index
    %60 = vector.load %arg3[%c8, %c0_60, %c0_61] : memref<9x128x128xbf16, #tpu.memory_space<vmem>>, vector<1x128x128xbf16>
    %61 = vector.shape_cast %60 : vector<1x128x128xbf16> to vector<128x128xbf16>
    %cst_62 = arith.constant dense<0.000000e+00> : vector<64x128xf32>
    %62 = tpu.matmul %59, %61, %cst_62 {dimension_numbers = #tpu.dot_dimension_numbers<[1], [0], [0], [1], [0, 0, 1, 1], [], []>} : vector<64x128xbf16>, vector<128x128xbf16>, vector<64x128xf32> -> vector<64x128xf32>
    %63 = arith.addf %56, %62 : vector<64x128xf32>
    %c0_63 = arith.constant 0 : index
    %c0_64 = arith.constant 0 : index
    %64 = vector.load %arg4[%c0_63, %c0_64] : memref<1x128xf32, #tpu.memory_space<vmem>>, vector<1x128xf32>
    %65 = vector.broadcast %64 : vector<1x128xf32> to vector<64x128xf32>
    %66 = arith.addf %63, %65 : vector<64x128xf32>
    %cst_65 = arith.constant 0.000000e+00 : f32
    %67 = vector.broadcast %cst_65 : f32 to vector<64x128xf32>
    %68 = arith.maximumf %66, %67 : vector<64x128xf32>
    %69 = arith.truncf %68 : vector<64x128xf32> to vector<64x128xbf16>
    %c0_66 = arith.constant 0 : index
    %c0_67 = arith.constant 0 : index
    %c0_68 = arith.constant 0 : index
    %70 = vector.load %arg5[%c0_66, %c0_67, %c0_68] : memref<1x64x128xbf16, #tpu.memory_space<vmem>>, vector<1x64x128xbf16>
    %71 = vector.shape_cast %70 : vector<1x64x128xbf16> to vector<64x128xbf16>
    %72 = vector.shape_cast %69 : vector<64x128xbf16> to vector<1x64x128xbf16>
    tpu.vector_store %arg5[%c0_66, %c0_67, %c0_68], %72 {strides = array<i32>} : memref<1x64x128xbf16, #tpu.memory_space<vmem>>, vector<1x64x128xbf16>,
    return
  }
  func.func @transform_0(%arg0: i32, %arg1: i32) -> (i32, i32, i32, i32) {
    %c0_i32 = arith.constant 0 : i32
    %c0_i32_0 = arith.constant 0 : i32
    %c0_i32_1 = arith.constant 0 : i32
    %c0_i32_2 = arith.constant 0 : i32
    return %arg0, %c0_i32, %c0_i32_0, %c0_i32_1 : i32, i32, i32, i32
  }
  func.func @transform_1(%arg0: i32, %arg1: i32) -> (i32, i32, i32) {
    %c0_i32 = arith.constant 0 : i32
    %c0_i32_0 = arith.constant 0 : i32
    %c0_i32_1 = arith.constant 0 : i32
    return %c0_i32, %c0_i32_0, %arg1 : i32, i32, i32
  }
  func.func @transform_2(%arg0: i32, %arg1: i32) -> (i32, i32) {
    %c0_i32 = arith.constant 0 : i32
    %c0_i32_0 = arith.constant 0 : i32
    return %c0_i32, %arg1 : i32, i32
  }
  func.func @transform_3(%arg0: i32, %arg1: i32) -> (i32, i32, i32) {
    %c0_i32 = arith.constant 0 : i32
    %c0_i32_0 = arith.constant 0 : i32
    return %arg0, %c0_i32, %arg1 : i32, i32, i32
  }
}

module attributes {stable_mosaic.version = 11 : i64} {
  func.func @_mm_bn_act_kernel(%arg0: i32, %arg1: i32, %arg2: memref<64x64xbf16, #tpu.memory_space<vmem>>, %arg3: memref<64x256xbf16, #tpu.memory_space<vmem>>, %arg4: memref<1x256xf32, #tpu.memory_space<vmem>>, %arg5: memref<64x256xbf16, #tpu.memory_space<vmem>>) attributes {dimension_semantics = [#tpu.dimension_semantics<parallel>, #tpu.dimension_semantics<parallel>], iteration_bounds = array<i64: 2, 1>, scalar_prefetch = 0 : i64, scratch_operands = 0 : i64, tpu.core_type = #tpu.core_type<tc>, window_params = [{transform_indices = @transform_0, window_bounds = array<i64: 64, 64>}, {transform_indices = @transform_1, window_bounds = array<i64: 64, 256>}, {transform_indices = @transform_2, window_bounds = array<i64: 1, 256>}, {transform_indices = @transform_3, window_bounds = array<i64: 64, 256>}]} {
    %c0 = arith.constant 0 : index
    %c0_0 = arith.constant 0 : index
    %0 = vector.load %arg2[%c0, %c0_0] : memref<64x64xbf16, #tpu.memory_space<vmem>>, vector<64x64xbf16>
    %c0_1 = arith.constant 0 : index
    %c0_2 = arith.constant 0 : index
    %1 = vector.load %arg3[%c0_1, %c0_2] : memref<64x256xbf16, #tpu.memory_space<vmem>>, vector<64x256xbf16>
    %cst = arith.constant dense<0.000000e+00> : vector<64x256xf32>
    %2 = tpu.matmul %0, %1, %cst {dimension_numbers = #tpu.dot_dimension_numbers<[1], [0], [0], [1], [0, 0, 1, 1], [], []>} : vector<64x64xbf16>, vector<64x256xbf16>, vector<64x256xf32> -> vector<64x256xf32>
    %c0_3 = arith.constant 0 : index
    %c0_4 = arith.constant 0 : index
    %3 = vector.load %arg4[%c0_3, %c0_4] : memref<1x256xf32, #tpu.memory_space<vmem>>, vector<1x256xf32>
    %4 = vector.broadcast %3 : vector<1x256xf32> to vector<64x256xf32>
    %5 = arith.addf %2, %4 : vector<64x256xf32>
    %6 = arith.truncf %5 : vector<64x256xf32> to vector<64x256xbf16>
    %c0_5 = arith.constant 0 : index
    %c0_6 = arith.constant 0 : index
    %7 = vector.load %arg5[%c0_5, %c0_6] : memref<64x256xbf16, #tpu.memory_space<vmem>>, vector<64x256xbf16>
    tpu.vector_store %arg5[%c0_5, %c0_6], %6 {strides = array<i32>} : memref<64x256xbf16, #tpu.memory_space<vmem>>, vector<64x256xbf16>,
    return
  }
  func.func @transform_0(%arg0: i32, %arg1: i32) -> (i32, i32) {
    %c0_i32 = arith.constant 0 : i32
    %c0_i32_0 = arith.constant 0 : i32
    return %arg0, %c0_i32 : i32, i32
  }
  func.func @transform_1(%arg0: i32, %arg1: i32) -> (i32, i32) {
    %c0_i32 = arith.constant 0 : i32
    %c0_i32_0 = arith.constant 0 : i32
    return %c0_i32, %arg1 : i32, i32
  }
  func.func @transform_2(%arg0: i32, %arg1: i32) -> (i32, i32) {
    %c0_i32 = arith.constant 0 : i32
    %c0_i32_0 = arith.constant 0 : i32
    return %c0_i32, %arg1 : i32, i32
  }
  func.func @transform_3(%arg0: i32, %arg1: i32) -> (i32, i32) {
    %c0_i32 = arith.constant 0 : i32
    return %arg0, %arg1 : i32, i32
  }
}

module attributes {stable_mosaic.version = 11 : i64} {
  func.func @_mm_bn_relu_residual_kernel(%arg0: i32, %arg1: i32, %arg2: memref<64x128xbf16, #tpu.memory_space<vmem>>, %arg3: memref<128x256xbf16, #tpu.memory_space<vmem>>, %arg4: memref<1x256xf32, #tpu.memory_space<vmem>>, %arg5: memref<64x256xbf16, #tpu.memory_space<vmem>>, %arg6: memref<64x256xbf16, #tpu.memory_space<vmem>>) attributes {dimension_semantics = [#tpu.dimension_semantics<parallel>, #tpu.dimension_semantics<parallel>], iteration_bounds = array<i64: 2, 1>, scalar_prefetch = 0 : i64, scratch_operands = 0 : i64, tpu.core_type = #tpu.core_type<tc>, window_params = [{transform_indices = @transform_0, window_bounds = array<i64: 64, 128>}, {transform_indices = @transform_1, window_bounds = array<i64: 128, 256>}, {transform_indices = @transform_2, window_bounds = array<i64: 1, 256>}, {transform_indices = @transform_3, window_bounds = array<i64: 64, 256>}, {transform_indices = @transform_4, window_bounds = array<i64: 64, 256>}]} {
    %c0 = arith.constant 0 : index
    %c0_0 = arith.constant 0 : index
    %0 = vector.load %arg2[%c0, %c0_0] : memref<64x128xbf16, #tpu.memory_space<vmem>>, vector<64x128xbf16>
    %c0_1 = arith.constant 0 : index
    %c0_2 = arith.constant 0 : index
    %1 = vector.load %arg3[%c0_1, %c0_2] : memref<128x256xbf16, #tpu.memory_space<vmem>>, vector<128x256xbf16>
    %cst = arith.constant dense<0.000000e+00> : vector<64x256xf32>
    %2 = tpu.matmul %0, %1, %cst {dimension_numbers = #tpu.dot_dimension_numbers<[1], [0], [0], [1], [0, 0, 1, 1], [], []>} : vector<64x128xbf16>, vector<128x256xbf16>, vector<64x256xf32> -> vector<64x256xf32>
    %c0_3 = arith.constant 0 : index
    %c0_4 = arith.constant 0 : index
    %3 = vector.load %arg4[%c0_3, %c0_4] : memref<1x256xf32, #tpu.memory_space<vmem>>, vector<1x256xf32>
    %4 = vector.broadcast %3 : vector<1x256xf32> to vector<64x256xf32>
    %5 = arith.addf %2, %4 : vector<64x256xf32>
    %cst_5 = arith.constant 0.000000e+00 : f32
    %6 = vector.broadcast %cst_5 : f32 to vector<64x256xf32>
    %7 = arith.maximumf %5, %6 : vector<64x256xf32>
    %c0_6 = arith.constant 0 : index
    %c0_7 = arith.constant 0 : index
    %8 = vector.load %arg5[%c0_6, %c0_7] : memref<64x256xbf16, #tpu.memory_space<vmem>>, vector<64x256xbf16>
    %9 = arith.extf %8 : vector<64x256xbf16> to vector<64x256xf32>
    %10 = arith.addf %7, %9 : vector<64x256xf32>
    %cst_8 = arith.constant 0.000000e+00 : f32
    %11 = vector.broadcast %cst_8 : f32 to vector<64x256xf32>
    %12 = arith.maximumf %10, %11 : vector<64x256xf32>
    %13 = arith.truncf %12 : vector<64x256xf32> to vector<64x256xbf16>
    %c0_9 = arith.constant 0 : index
    %c0_10 = arith.constant 0 : index
    %14 = vector.load %arg6[%c0_9, %c0_10] : memref<64x256xbf16, #tpu.memory_space<vmem>>, vector<64x256xbf16>
    tpu.vector_store %arg6[%c0_9, %c0_10], %13 {strides = array<i32>} : memref<64x256xbf16, #tpu.memory_space<vmem>>, vector<64x256xbf16>,
    return
  }
  func.func @transform_0(%arg0: i32, %arg1: i32) -> (i32, i32) {
    %c0_i32 = arith.constant 0 : i32
    %c0_i32_0 = arith.constant 0 : i32
    return %arg0, %c0_i32 : i32, i32
  }
  func.func @transform_1(%arg0: i32, %arg1: i32) -> (i32, i32) {
    %c0_i32 = arith.constant 0 : i32
    %c0_i32_0 = arith.constant 0 : i32
    return %c0_i32, %arg1 : i32, i32
  }
  func.func @transform_2(%arg0: i32, %arg1: i32) -> (i32, i32) {
    %c0_i32 = arith.constant 0 : i32
    %c0_i32_0 = arith.constant 0 : i32
    return %c0_i32, %arg1 : i32, i32
  }
  func.func @transform_3(%arg0: i32, %arg1: i32) -> (i32, i32) {
    %c0_i32 = arith.constant 0 : i32
    return %arg0, %arg1 : i32, i32
  }
  func.func @transform_4(%arg0: i32, %arg1: i32) -> (i32, i32) {
    %c0_i32 = arith.constant 0 : i32
    return %arg0, %arg1 : i32, i32
  }
}

</mosaic_0001>

<llo_original>
// kernel: conv_block_forward.4
$region0: #{conv_block_forward.4}
  #allocation0 [shape = 'u32[]', space=smem, size = 0x4, offset = 0x4, fixed_abs, tag = 'smem constant byte address 0x4 - core index']
  #allocation1 [shape = 'u32[144,128]{1,0:T(1,128)}', space=vmem, size = 0x12000, scoped, tag = 'internal scratch']
  %s0 = inlined_call_operand.vmem [shape: bf16[512,64], index: 0, kind: input, shape index: {}]
  %s1 = inlined_call_operand.vmem [shape: bf16[64,128], index: 1, kind: input, shape index: {}]
  %s2 = inlined_call_operand.vmem [shape: f32[1,128], index: 2, kind: input, shape index: {}]
  %s3 = inlined_call_operand.vmem [shape: bf16[512,128], index: 3, kind: output, shape index: {}]
  %s4 = sld [smem:[#allocation0]]
  $region45: #{conv_block_forward.4} parent=0
    _
  %s6 = ssub.s32 1, %s4
  %s7 = scalar_select 0, %s6, %s4
  loop: start=0, step=1, limit=4
  $region2: #{conv_block_forward.4} parent=0 // loop_pre_header
    _
  $region3: #{conv_block_forward.4} parent=0 // loop_header
    %s9 = sphi 0, %s13
    %p10 = scmp.ge.s32.totalorder %s9, 4
    %s16 = sphi 0, %s28
    %s17 = sphi 0, %s24
    %s18 = sphi 0, %s16
    %s19 = sphi 0, %s17
    %s20 = sphi 0, %s18
    %s21 = sphi 0, %s19
    %s31 = sphi 0, %s33
    %s34 = sphi 0, %s31
    %s35 = sphi 0, %s34
    %s51 = sphi 0, %s35
    %s57 = sphi 0, %s59
    %s60 = sphi 0, %s57
    %s61 = sphi 0, %s60
    %s77 = sphi 0, %s61
    %s83 = sphi 0, %s85
    %s86 = sphi 0, %s83
    %s87 = sphi 0, %s86
    %s103 = sphi 0, %s87
    %s111 = sphi 0, %s113
    %s114 = sphi 0, %s111
    %s115 = sphi 0, %s114
    %s131 = sphi 0, %s115
  $region4: #{conv_block_forward.4} parent=0 // loop_header_branch
    %12 = sbr.rel (%p10) target = $region8
  $region5: #{conv_block_forward.4} parent=0 // loop_body
    %s14 = ssub.s32 %s9, 1
    %s15 = ssub.s32 %s9, 2
    %s22 = sadd.s32 1, %s17
    %p23 = scmp.ge.s32.totalorder %s22, 1
    %s24 = scalar_select %p23, 0, %s22
    %s25 = sadd.s32 1, %s16
    %s26 = scalar_select %p23, %s25, %s16
    %p27 = scmp.ge.s32.totalorder %s26, 2
    %s28 = scalar_select %p27, 0, %s26
    %s29 = ssub.s32 %s16, %s28
    %p30 = scmp.eq.s32.totalorder %s29, 0
    %s32 = sadd.s32 %s31, 1
    %s33 = scalar_select %p30, %s31, %s32
    %p36 = pneg %p30
    %p37 = scmp.eq.s32.totalorder %s9, 1
    %p38 = por %p36, %p37
    %p39 = scmp.ne.s32.totalorder %s31, %s34
    %p40 = scmp.eq.s32.totalorder %s9, 0
    %p41 = por %p39, %p40
    %p42 = scmp.ne.s32.totalorder %s31, %s34
    %p43 = scmp.eq.s32.totalorder %s14, 1
    %p44 = por %p42, %p43
    %p45 = scmp.ne.s32.totalorder %s34, %s35
    %p46 = scmp.eq.s32.totalorder %s14, 0
    %p47 = por %p45, %p46
    %p48 = scmp.ne.s32.totalorder %s34, %s35
    %p49 = scmp.eq.s32.totalorder %s15, 1
    %p50 = por %p48, %p49
    %p52 = scmp.ne.s32.totalorder %s35, %s51
    %p53 = scmp.eq.s32.totalorder %s15, 0
    %p54 = por %p52, %p53
    %s55 = ssub.s32 %s17, %s24
    %p56 = scmp.eq.s32.totalorder %s55, 0
    %s58 = sadd.s32 %s57, 1
    %s59 = scalar_select %p56, %s57, %s58
    %p62 = pneg %p56
    %p63 = scmp.eq.s32.totalorder %s9, 1
    %p64 = por %p62, %p63
    %p65 = scmp.ne.s32.totalorder %s57, %s60
    %p66 = scmp.eq.s32.totalorder %s9, 0
    %p67 = por %p65, %p66
    %p68 = scmp.ne.s32.totalorder %s57, %s60
    %p69 = scmp.eq.s32.totalorder %s14, 1
    %p70 = por %p68, %p69
    %p71 = scmp.ne.s32.totalorder %s60, %s61
    %p72 = scmp.eq.s32.totalorder %s14, 0
    %p73 = por %p71, %p72
    %p74 = scmp.ne.s32.totalorder %s60, %s61
    %p75 = scmp.eq.s32.totalorder %s15, 1
    %p76 = por %p74, %p75
    %p78 = scmp.ne.s32.totalorder %s61, %s77
    %p79 = scmp.eq.s32.totalorder %s15, 0
    %p80 = por %p78, %p79
    %s81 = ssub.s32 %s17, %s24
    %p82 = scmp.eq.s32.totalorder %s81, 0
    %s84 = sadd.s32 %s83, 1
    %s85 = scalar_select %p82, %s83, %s84
    %p88 = pneg %p82
    %p89 = scmp.eq.s32.totalorder %s9, 1
    %p90 = por %p88, %p89
    %p91 = scmp.ne.s32.totalorder %s83, %s86
    %p92 = scmp.eq.s32.totalorder %s9, 0
    %p93 = por %p91, %p92
    %p94 = scmp.ne.s32.totalorder %s83, %s86
    %p95 = scmp.eq.s32.totalorder %s14, 1
    %p96 = por %p94, %p95
    %p97 = scmp.ne.s32.totalorder %s86, %s87
    %p98 = scmp.eq.s32.totalorder %s14, 0
    %p99 = por %p97, %p98
    %p100 = scmp.ne.s32.totalorder %s86, %s87
    %p101 = scmp.eq.s32.totalorder %s15, 1
    %p102 = por %p100, %p101
    %p104 = scmp.ne.s32.totalorder %s87, %s103
    %p105 = scmp.eq.s32.totalorder %s15, 0
    %p106 = por %p104, %p105
    %s107 = ssub.s32 %s16, %s28
    %s108 = ssub.s32 %s17, %s24
    %s109 = sor.u32 %s107, %s108
    %p110 = scmp.eq.s32.totalorder %s109, 0
    %s112 = sadd.s32 %s111, 1
    %s113 = scalar_select %p110, %s111, %s112
    %p116 = pneg %p110
    %p117 = scmp.eq.s32.totalorder %s9, 1
    %p118 = por %p116, %p117
    %p119 = scmp.ne.s32.totalorder %s111, %s114
    %p120 = scmp.eq.s32.totalorder %s9, 0
    %p121 = por %p119, %p120
    %p122 = scmp.ne.s32.totalorder %s111, %s114
    %p123 = scmp.eq.s32.totalorder %s14, 1
    %p124 = por %p122, %p123
    %p125 = scmp.ne.s32.totalorder %s114, %s115
    %p126 = scmp.eq.s32.totalorder %s14, 0
    %p127 = por %p125, %p126
    %p128 = scmp.ne.s32.totalorder %s114, %s115
    %p129 = scmp.eq.s32.totalorder %s15, 1
    %p130 = por %p128, %p129
    %p132 = scmp.ne.s32.totalorder %s115, %s131
    %p133 = scmp.eq.s32.totalorder %s15, 0
    %p134 = por %p132, %p133
    %p135 = scmp.le.s32.totalorder 1, %s9
    %p136 = scmp.lt.s32.totalorder %s9, 3
    %p137 = pnand %p135, %p136
    %p138 = pneg %p137
    // Predicated region
    $region9: #{conv_block_forward.4} parent=5 // pred_check
      _
    $region10: #{conv_block_forward.4} parent=5 // pred_check_branch
      %140 = sbr.rel (%p137) target = $region12
    $region11: #{conv_block_forward.4} parent=5 // pred_region
      %s141 = ssub.s32 %s9, 1
      // Predicated region
      $region13: #{conv_block_forward.4} parent=11 // pred_check
        %p142 = pneg %p73
      $region14: #{conv_block_forward.4} parent=11 // pred_check_branch
        %144 = sbr.rel (%p142) target = $region16
      $region15: #{conv_block_forward.4} parent=11 // pred_region
        %p145 = scmp.lt.s32.totalorder %s19, 0
        %s146 = scalar_select %p145, %s19, 0
        %s147 = smul.addr %s146, 4
        %s148 = scalar_lea.vmem %s1, %s147
      $region16: #{conv_block_forward.4} parent=11 // pred_fallthru
        _
      // Predicated region
      $region17: #{conv_block_forward.4} parent=11 // pred_check
        %p149 = pneg %p99
      $region18: #{conv_block_forward.4} parent=11 // pred_check_branch
        %151 = sbr.rel (%p149) target = $region20
      $region19: #{conv_block_forward.4} parent=11 // pred_region
        %p152 = scmp.lt.s32.totalorder %s19, 0
        %s153 = scalar_select %p152, %s19, 0
        %s154 = scalar_lea.vmem %s2, %s153
      $region20: #{conv_block_forward.4} parent=11 // pred_fallthru
        _
    $region12: #{conv_block_forward.4} parent=5 // pred_fallthru
      _
    %p155 = scmp.lt.s32.totalorder %s9, 2
    // Predicated region
    $region21: #{conv_block_forward.4} parent=5 // pred_check
      %p156 = pneg %p155
    $region22: #{conv_block_forward.4} parent=5 // pred_check_branch
      %158 = sbr.rel (%p156) target = $region24
    $region23: #{conv_block_forward.4} parent=5 // pred_region
      // Predicated region
      $region25: #{conv_block_forward.4} parent=23 // pred_check
        %p159 = pneg %p41
      $region26: #{conv_block_forward.4} parent=23 // pred_check_branch
        %161 = sbr.rel (%p159) target = $region28
      $region27: #{conv_block_forward.4} parent=23 // pred_region
        %s162 = smul.u32 32, %s16
        %p163 = scmp.lt.s32.totalorder %s162, 63
        %s164 = scalar_select %p163, %s162, 63
        %s165 = smul.addr %s164, 4
        %s166 = scalar_lea.vmem %s0, %s165
        %s167 = smul.u32 32, %s16
      $region28: #{conv_block_forward.4} parent=23 // pred_fallthru
        _
    $region24: #{conv_block_forward.4} parent=5 // pred_fallthru
      _
    %p168 = scmp.le.s32.totalorder 1, %s9
    %p169 = scmp.lt.s32.totalorder %s9, 3
    %p170 = pnand %p168, %p169
    %p171 = pneg %p170
    // Predicated region
    $region29: #{conv_block_forward.4} parent=5 // pred_check
      _
    $region30: #{conv_block_forward.4} parent=5 // pred_check_branch
      %173 = sbr.rel (%p170) target = $region32
    $region31: #{conv_block_forward.4} parent=5 // pred_region
      %s174 = ssub.s32 %s9, 1
      %s175 = smul.u32 32, %s18
      %p176 = scmp.lt.s32.totalorder %s175, 63
      %s177 = scalar_select %p176, %s175, 63
      %s178 = smul.addr %s177, 4
      %s179 = scalar_lea.vmem %s0, %s178
      %p180 = pneg %p47
      %p181 = pneg %p44
      %p182 = scmp.lt.s32.totalorder %s19, 0
      %s183 = scalar_select %p182, %s19, 0
      %s184 = smul.addr %s183, 4
      %s185 = scalar_lea.vmem %s1, %s184
      %p186 = pneg %p73
      %p187 = pneg %p70
      %p188 = scmp.lt.s32.totalorder %s19, 0
      %s189 = scalar_select %p188, %s19, 0
      %s190 = scalar_lea.vmem %s2, %s189
      %p191 = pneg %p99
      %p192 = pneg %p96
      %p193 = pneg %p127
      %p194 = pneg %p124
      %s195 = smul.u32 32, %s18
      %p196 = scmp.lt.s32.totalorder %s195, 63
      %s197 = scalar_select %p196, %s195, 63
      %p198 = scmp.lt.s32.totalorder %s19, 0
      %s199 = scalar_select %p198, %s19, 0
      %s200 = sadd.s32 %s199, %s197
      %s201 = smul.addr %s200, 4
      %s202 = scalar_lea.vmem %s3, %s201
      %s203 = smul.u32 32, %s18
      %p204 = scmp.lt.s32.totalorder %s203, 63
      %s205 = scalar_select %p204, %s203, 63
      %s206 = smul.addr %s205, 4
      %s207 = scalar_lea.vmem %s0, %s206
      %s208 = smul.u32 32, %s18
      %p209 = scmp.lt.s32.totalorder %s19, 0
      %s210 = scalar_select %p209, %s19, 0
      %s211 = smul.addr %s210, 4
      %s212 = scalar_lea.vmem %s1, %s211
      %p213 = scmp.lt.s32.totalorder %s19, 0
      %s214 = scalar_select %p213, %s19, 0
      %s215 = scalar_lea.vmem %s2, %s214
      %s216 = smul.u32 32, %s18
      %p217 = scmp.lt.s32.totalorder %s216, 63
      %s218 = scalar_select %p217, %s216, 63
      %p219 = scmp.lt.s32.totalorder %s19, 0
      %s220 = scalar_select %p219, %s19, 0
      %s221 = sadd.s32 %s220, %s218
      %s222 = smul.addr %s221, 4
      %s223 = scalar_lea.vmem %s3, %s222
      %s224 = smul.u32 32, %s18
      %v226 = vld [vmem:[%s207] sm:$0xf]
      %v227 = vld [vmem:[%s207 + $0x4] sm:$0xf]
      %v228 = vld [vmem:[%s207 + $0x8] sm:$0xf]
      %v229 = vld [vmem:[%s207 + $0xc] sm:$0xf]
      %v230 = vld [vmem:[%s207 + $0x10] sm:$0xf]
      %v231 = vld [vmem:[%s207 + $0x14] sm:$0xf]
      %v232 = vld [vmem:[%s207 + $0x18] sm:$0xf]
      %v233 = vld [vmem:[%s207 + $0x1c] sm:$0xf]
      %v234 = vld [vmem:[%s207 + $0x20] sm:$0xf]
      %v235 = vld [vmem:[%s207 + $0x24] sm:$0xf]
      %v236 = vld [vmem:[%s207 + $0x28] sm:$0xf]
      %v237 = vld [vmem:[%s207 + $0x2c] sm:$0xf]
      %v238 = vld [vmem:[%s207 + $0x30] sm:$0xf]
      %v239 = vld [vmem:[%s207 + $0x34] sm:$0xf]
      %v240 = vld [vmem:[%s207 + $0x38] sm:$0xf]
      %v241 = vld [vmem:[%s207 + $0x3c] sm:$0xf]
      %v242 = vld [vmem:[%s207 + $0x40] sm:$0xf]
      %v243 = vld [vmem:[%s207 + $0x44] sm:$0xf]
      %v244 = vld [vmem:[%s207 + $0x48] sm:$0xf]
      %v245 = vld [vmem:[%s207 + $0x4c] sm:$0xf]
      %v246 = vld [vmem:[%s207 + $0x50] sm:$0xf]
      %v247 = vld [vmem:[%s207 + $0x54] sm:$0xf]
      %v248 = vld [vmem:[%s207 + $0x58] sm:$0xf]
      %v249 = vld [vmem:[%s207 + $0x5c] sm:$0xf]
      %v250 = vld [vmem:[%s207 + $0x60] sm:$0xf]
      %v251 = vld [vmem:[%s207 + $0x64] sm:$0xf]
      %v252 = vld [vmem:[%s207 + $0x68] sm:$0xf]
      %v253 = vld [vmem:[%s207 + $0x6c] sm:$0xf]
      %v254 = vld [vmem:[%s207 + $0x70] sm:$0xf]
      %v255 = vld [vmem:[%s207 + $0x74] sm:$0xf]
      %v256 = vld [vmem:[%s207 + $0x78] sm:$0xf]
      %v257 = vld [vmem:[%s207 + $0x7c] sm:$0xf]
      %v258 = vld [vmem:[%s212] sm:$0xf]
      %v259 = vld [vmem:[%s212 + $0x4] sm:$0xf]
      %v260 = vld [vmem:[%s212 + $0x8] sm:$0xf]
      %v261 = vld [vmem:[%s212 + $0xc] sm:$0xf]
      %v262 = vld [vmem:[%s212 + $0x10] sm:$0xf]
      %v263 = vld [vmem:[%s212 + $0x14] sm:$0xf]
      %v264 = vld [vmem:[%s212 + $0x18] sm:$0xf]
      %v265 = vld [vmem:[%s212 + $0x1c] sm:$0xf]
      %v266 = vld [vmem:[%s215] sm:$0x1]
      %v268 = vlaneseq
      %v269 = vshrl.u32 %v268, 7
      %v270 = vsub.s32 0, %v269
      %v271 = vrot.slane %v266, %v270
      %v305 = vunpack.c.l.b16 %v226
      %v306 = vunpack.c.l.b16 %v227
      %v307 = vunpack.c.l.b16 %v228
      %v308 = vunpack.c.l.b16 %v229
      %v309 = vunpack.c.l.b16 %v230
      %v310 = vunpack.c.l.b16 %v231
      %v311 = vunpack.c.l.b16 %v232
      %v312 = vunpack.c.l.b16 %v233
      %v313 = vunpack.c.l.b16 %v234
      %v314 = vunpack.c.l.b16 %v235
      %v315 = vunpack.c.l.b16 %v236
      %v316 = vunpack.c.l.b16 %v237
      %v317 = vunpack.c.l.b16 %v238
      %v318 = vunpack.c.l.b16 %v239
      %v319 = vunpack.c.l.b16 %v240
      %v320 = vunpack.c.l.b16 %v241
      %v321 = vunpack.c.l.b16 %v242
      %v322 = vunpack.c.l.b16 %v243
      %v323 = vunpack.c.l.b16 %v244
      %v324 = vunpack.c.l.b16 %v245
      %v325 = vunpack.c.l.b16 %v246
      %v326 = vunpack.c.l.b16 %v247
      %v327 = vunpack.c.l.b16 %v248
      %v328 = vunpack.c.l.b16 %v249
      %v329 = vunpack.c.l.b16 %v250
      %v330 = vunpack.c.l.b16 %v251
      %v331 = vunpack.c.l.b16 %v252
      %v332 = vunpack.c.l.b16 %v253
      %v333 = vunpack.c.l.b16 %v254
      %v334 = vunpack.c.l.b16 %v255
      %v335 = vunpack.c.l.b16 %v256
      %v336 = vunpack.c.l.b16 %v257
      %v337 = vpack.c.b16 %v306, %v305
      %v338 = vpack.c.b16 %v308, %v307
      %v339 = vpack.c.b16 %v310, %v309
      %v340 = vpack.c.b16 %v312, %v311
      %v341 = vpack.c.b16 %v314, %v313
      %v342 = vpack.c.b16 %v316, %v315
      %v343 = vpack.c.b16 %v318, %v317
      %v344 = vpack.c.b16 %v320, %v319
      %v345 = vpack.c.b16 %v322, %v321
      %v346 = vpack.c.b16 %v324, %v323
      %v347 = vpack.c.b16 %v326, %v325
      %v348 = vpack.c.b16 %v328, %v327
      %v349 = vpack.c.b16 %v330, %v329
      %v350 = vpack.c.b16 %v332, %v331
      %v351 = vpack.c.b16 %v334, %v333
      %v352 = vpack.c.b16 %v336, %v335
      %v361 = vunpack.c.l.b16 %v258
      %v362 = vunpack.c.l.b16 %v259
      %v363 = vunpack.c.l.b16 %v260
      %v364 = vunpack.c.l.b16 %v261
      %v365 = vunpack.c.l.b16 %v262
      %v366 = vunpack.c.l.b16 %v263
      %v367 = vunpack.c.l.b16 %v264
      %v368 = vunpack.c.l.b16 %v265
      %v369 = vpack.c.b16 %v362, %v361
      %v370 = vpack.c.b16 %v364, %v363
      %v371 = vpack.c.b16 %v366, %v365
      %v372 = vpack.c.b16 %v368, %v367
      %vm377 = vcmask 523264
      %v379 = vsel %vm377, %v337, 0
      %v382 = vsel %vm377, %v338, 0
      %v385 = vsel %vm377, %v339, 0
      %v388 = vsel %vm377, %v340, 0
      %v391 = vsel %vm377, %v341, 0
      %v394 = vsel %vm377, %v342, 0
      %v397 = vsel %vm377, %v343, 0
      %v400 = vsel %vm377, %v344, 0
      %v403 = vsel %vm377, %v345, 0
      %v406 = vsel %vm377, %v346, 0
      %v409 = vsel %vm377, %v347, 0
      %v412 = vsel %vm377, %v348, 0
      %v415 = vsel %vm377, %v349, 0
      %v418 = vsel %vm377, %v350, 0
      %v421 = vsel %vm377, %v351, 0
      %v424 = vsel %vm377, %v352, 0
      %426 = vmatprep.subr.bf16.mxu0 0
      %427 = vmatpush1.bf16.msra.mxu0 %v369
      %428 = vmatprep.subr.bf16.mxu0 0
      %429 = vmatpush1.bf16.msra.mxu0 %v370
      %430 = vmatprep.subr.bf16.mxu0 0
      %431 = vmatpush1.bf16.msra.mxu0 %v371
      %432 = vmatprep.subr.bf16.mxu0 0
      %433 = vmatpush1.bf16.msra.mxu0 %v372
      %434 = vmatprep.subr.bf16.mxu0 0
      %435 = vmatpush1.bf16.msra.mxu0 0
      %436 = vmatprep.subr.bf16.mxu0 0
      %437 = vmatpush1.bf16.msra.mxu0 0
      %438 = vmatprep.subr.bf16.mxu0 0
      %439 = vmatpush1.bf16.msra.mxu0 0
      %440 = vmatprep.subr.bf16.mxu0 0
      %441 = vmatpush1.bf16.msra.mxu0 0
      %442 = vmatprep.subr.bf16.mxu0 0
      %443 = vmatpush1.bf16.msra.mxu0 0
      %444 = vmatprep.subr.bf16.mxu0 0
      %445 = vmatpush1.bf16.msra.mxu0 0
      %446 = vmatprep.subr.bf16.mxu0 0
      %447 = vmatpush1.bf16.msra.mxu0 0
      %448 = vmatprep.subr.bf16.mxu0 0
      %449 = vmatpush1.bf16.msra.mxu0 0
      %450 = vmatprep.subr.bf16.mxu0 0
      %451 = vmatpush1.bf16.msra.mxu0 0
      %452 = vmatprep.subr.bf16.mxu0 0
      %453 = vmatpush1.bf16.msra.mxu0 0
      %454 = vmatprep.subr.bf16.mxu0 0
      %455 = vmatpush1.bf16.msra.mxu0 0
      %456 = vmatprep.subr.bf16.mxu0 0
      %457 = vmatpush1.bf16.msra.mxu0 0
      %458 = vmatprep.mubr.bf16.mxu0 0
      %459 = vmatmul.mubr.bf16.gmra.mrb[0].mxu0 %v379
      %v460 = vpop.f32.mrb[0].mxu0
      %v461 = vadd.f32 %v271, %v460
      %v462 = vpop.f32.mrb[0].mxu0
      %v463 = vpop.f32.mrb[0].mxu0
      %v464 = vadd.f32 %v271, %v463
      %v465 = vpop.f32.mrb[0].mxu0
      %466 = vmatprep.mubr.bf16.mxu0 0
      %467 = vmatmul.mubr.bf16.gmra.mrb[0].mxu0 %v382
      %v468 = vpop.f32.mrb[0].mxu0
      %v469 = vadd.f32 %v271, %v468
      %v470 = vpop.f32.mrb[0].mxu0
      %v471 = vpop.f32.mrb[0].mxu0
      %v472 = vadd.f32 %v271, %v471
      %v473 = vpop.f32.mrb[0].mxu0
      %474 = vmatprep.mubr.bf16.mxu0 0
      %475 = vmatmul.mubr.bf16.gmra.mrb[0].mxu0 %v385
      %v476 = vpop.f32.mrb[0].mxu0
      %v477 = vadd.f32 %v271, %v476
      %v478 = vpop.f32.mrb[0].mxu0
      %v479 = vpop.f32.mrb[0].mxu0
      %v480 = vadd.f32 %v271, %v479
      %v481 = vpop.f32.mrb[0].mxu0
      %482 = vmatprep.mubr.bf16.mxu0 0
      %483 = vmatmul.mubr.bf16.gmra.mrb[0].mxu0 %v388
      %v484 = vpop.f32.mrb[0].mxu0
      %v485 = vadd.f32 %v271, %v484
      %v486 = vpop.f32.mrb[0].mxu0
      %v487 = vpop.f32.mrb[0].mxu0
      %v488 = vadd.f32 %v271, %v487
      %v489 = vpop.f32.mrb[0].mxu0
      %490 = vmatprep.mubr.bf16.mxu0 0
      %491 = vmatmul.mubr.bf16.gmra.mrb[0].mxu0 %v391
      %v492 = vpop.f32.mrb[0].mxu0
      %v493 = vadd.f32 %v271, %v492
      %v494 = vpop.f32.mrb[0].mxu0
      %v495 = vpop.f32.mrb[0].mxu0
      %v496 = vadd.f32 %v271, %v495
      %v497 = vpop.f32.mrb[0].mxu0
      %498 = vmatprep.mubr.bf16.mxu0 0
      %499 = vmatmul.mubr.bf16.gmra.mrb[0].mxu0 %v394
      %v500 = vpop.f32.mrb[0].mxu0
      %v501 = vadd.f32 %v271, %v500
      %v502 = vpop.f32.mrb[0].mxu0
      %v503 = vpop.f32.mrb[0].mxu0
      %v504 = vadd.f32 %v271, %v503
      %v505 = vpop.f32.mrb[0].mxu0
      %506 = vmatprep.mubr.bf16.mxu0 0
      %507 = vmatmul.mubr.bf16.gmra.mrb[0].mxu0 %v397
      %v508 = vpop.f32.mrb[0].mxu0
      %v509 = vadd.f32 %v271, %v508
      %v510 = vpop.f32.mrb[0].mxu0
      %v511 = vpop.f32.mrb[0].mxu0
      %v512 = vadd.f32 %v271, %v511
      %v513 = vpop.f32.mrb[0].mxu0
      %514 = vmatprep.mubr.bf16.mxu0 0
      %515 = vmatmul.mubr.bf16.gmra.mrb[0].mxu0 %v400
      %v516 = vpop.f32.mrb[0].mxu0
      %v517 = vadd.f32 %v271, %v516
      %v518 = vpop.f32.mrb[0].mxu0
      %v519 = vpop.f32.mrb[0].mxu0
      %v520 = vadd.f32 %v271, %v519
      %v521 = vpop.f32.mrb[0].mxu0
      %522 = vmatprep.mubr.bf16.mxu0 0
      %523 = vmatmul.mubr.bf16.gmra.mrb[0].mxu0 %v403
      %v524 = vpop.f32.mrb[0].mxu0
      %v525 = vadd.f32 %v271, %v524
      %v526 = vpop.f32.mrb[0].mxu0
      %v527 = vpop.f32.mrb[0].mxu0
      %v528 = vadd.f32 %v271, %v527
      %v529 = vpop.f32.mrb[0].mxu0
      %530 = vmatprep.mubr.bf16.mxu0 0
      %531 = vmatmul.mubr.bf16.gmra.mrb[0].mxu0 %v406
      %v532 = vpop.f32.mrb[0].mxu0
      %v533 = vadd.f32 %v271, %v532
      %v534 = vpop.f32.mrb[0].mxu0
      %v535 = vpop.f32.mrb[0].mxu0
      %v536 = vadd.f32 %v271, %v535
      %v537 = vpop.f32.mrb[0].mxu0
      %538 = vmatprep.mubr.bf16.mxu0 0
      %539 = vmatmul.mubr.bf16.gmra.mrb[0].mxu0 %v409
      %v540 = vpop.f32.mrb[0].mxu0
      %v541 = vadd.f32 %v271, %v540
      %v542 = vpop.f32.mrb[0].mxu0
      %v543 = vpop.f32.mrb[0].mxu0
      %v544 = vadd.f32 %v271, %v543
      %v545 = vpop.f32.mrb[0].mxu0
      %546 = vmatprep.mubr.bf16.mxu0 0
      %547 = vmatmul.mubr.bf16.gmra.mrb[0].mxu0 %v412
      %v548 = vpop.f32.mrb[0].mxu0
      %v549 = vadd.f32 %v271, %v548
      %v550 = vpop.f32.mrb[0].mxu0
      %v551 = vpop.f32.mrb[0].mxu0
      %v552 = vadd.f32 %v271, %v551
      %v553 = vpop.f32.mrb[0].mxu0
      %554 = vmatprep.mubr.bf16.mxu0 0
      %555 = vmatmul.mubr.bf16.gmra.mrb[0].mxu0 %v415
      %v556 = vpop.f32.mrb[0].mxu0
      %v557 = vadd.f32 %v271, %v556
      %v558 = vpop.f32.mrb[0].mxu0
      %v559 = vpop.f32.mrb[0].mxu0
      %v560 = vadd.f32 %v271, %v559
      %v561 = vpop.f32.mrb[0].mxu0
      %562 = vmatprep.mubr.bf16.mxu0 0
      %563 = vmatmul.mubr.bf16.gmra.mrb[0].mxu0 %v418
      %v564 = vpop.f32.mrb[0].mxu0
      %v565 = vadd.f32 %v271, %v564
      %v566 = vpop.f32.mrb[0].mxu0
      %v567 = vpop.f32.mrb[0].mxu0
      %v568 = vadd.f32 %v271, %v567
      %v569 = vpop.f32.mrb[0].mxu0
      %570 = vmatprep.mubr.bf16.mxu0 0
      %571 = vmatmul.mubr.bf16.gmra.mrb[0].mxu0 %v421
      %v572 = vpop.f32.mrb[0].mxu0
      %v573 = vadd.f32 %v271, %v572
      %v574 = vpop.f32.mrb[0].mxu0
      %v575 = vpop.f32.mrb[0].mxu0
      %v576 = vadd.f32 %v271, %v575
      %v577 = vpop.f32.mrb[0].mxu0
      %578 = vmatprep.mubr.bf16.mxu0 0
      %579 = vmatmul.mubr.bf16.gmra.mrb[0].mxu0 %v424
      %v580 = vpop.f32.mrb[0].mxu0
      %v581 = vadd.f32 %v271, %v580
      %v582 = vpop.f32.mrb[0].mxu0
      %v583 = vpop.f32.mrb[0].mxu0
      %v584 = vadd.f32 %v271, %v583
      %v585 = vpop.f32.mrb[0].mxu0
      %586 = vdwg.mxu0
      %v587 = vmax.f32 %v461, 0.0
      %v588 = vmax.f32 %v464, 0.0
      %v589 = vmax.f32 %v469, 0.0
      %v590 = vmax.f32 %v472, 0.0
      %v591 = vmax.f32 %v477, 0.0
      %v592 = vmax.f32 %v480, 0.0
      %v593 = vmax.f32 %v485, 0.0
      %v594 = vmax.f32 %v488, 0.0
      %v595 = vmax.f32 %v493, 0.0
      %v596 = vmax.f32 %v496, 0.0
      %v597 = vmax.f32 %v501, 0.0
      %v598 = vmax.f32 %v504, 0.0
      %v599 = vmax.f32 %v509, 0.0
      %v600 = vmax.f32 %v512, 0.0
      %v601 = vmax.f32 %v517, 0.0
      %v602 = vmax.f32 %v520, 0.0
      %v603 = vmax.f32 %v525, 0.0
      %v604 = vmax.f32 %v528, 0.0
      %v605 = vmax.f32 %v533, 0.0
      %v606 = vmax.f32 %v536, 0.0
      %v607 = vmax.f32 %v541, 0.0
      %v608 = vmax.f32 %v544, 0.0
      %v609 = vmax.f32 %v549, 0.0
      %v610 = vmax.f32 %v552, 0.0
      %v611 = vmax.f32 %v557, 0.0
      %v612 = vmax.f32 %v560, 0.0
      %v613 = vmax.f32 %v565, 0.0
      %v614 = vmax.f32 %v568, 0.0
      %v615 = vmax.f32 %v573, 0.0
      %v616 = vmax.f32 %v576, 0.0
      %v617 = vmax.f32 %v581, 0.0
      %v618 = vmax.f32 %v584, 0.0
      %v619 = vpack.c.bf16 %v588, %v587
      %v620 = vpack.c.bf16 %v590, %v589
      %v621 = vpack.c.bf16 %v592, %v591
      %v622 = vpack.c.bf16 %v594, %v593
      %v623 = vpack.c.bf16 %v596, %v595
      %v624 = vpack.c.bf16 %v598, %v597
      %v625 = vpack.c.bf16 %v600, %v599
      %v626 = vpack.c.bf16 %v602, %v601
      %v627 = vpack.c.bf16 %v604, %v603
      %v628 = vpack.c.bf16 %v606, %v605
      %v629 = vpack.c.bf16 %v608, %v607
      %v630 = vpack.c.bf16 %v610, %v609
      %v631 = vpack.c.bf16 %v612, %v611
      %v632 = vpack.c.bf16 %v614, %v613
      %v633 = vpack.c.bf16 %v616, %v615
      %v634 = vpack.c.bf16 %v618, %v617
      %v651 = vunpack.c.l.b16 %v619
      %v652 = vunpack.c.h.b16 %v619
      %v653 = vunpack.c.l.b16 %v620
      %v654 = vunpack.c.h.b16 %v620
      %v655 = vunpack.c.l.b16 %v621
      %v656 = vunpack.c.h.b16 %v621
      %v657 = vunpack.c.l.b16 %v622
      %v658 = vunpack.c.h.b16 %v622
      %v659 = vunpack.c.l.b16 %v623
      %v660 = vunpack.c.h.b16 %v623
      %v661 = vunpack.c.l.b16 %v624
      %v662 = vunpack.c.h.b16 %v624
      %v663 = vunpack.c.l.b16 %v625
      %v664 = vunpack.c.h.b16 %v625
      %v665 = vunpack.c.l.b16 %v626
      %v666 = vunpack.c.h.b16 %v626
      %v667 = vunpack.c.l.b16 %v627
      %v668 = vunpack.c.h.b16 %v627
      %v669 = vunpack.c.l.b16 %v628
      %v670 = vunpack.c.h.b16 %v628
      %v671 = vunpack.c.l.b16 %v629
      %v672 = vunpack.c.h.b16 %v629
      %v673 = vunpack.c.l.b16 %v630
      %v674 = vunpack.c.h.b16 %v630
      %v675 = vunpack.c.l.b16 %v631
      %v676 = vunpack.c.h.b16 %v631
      %v677 = vunpack.c.l.b16 %v632
      %v678 = vunpack.c.h.b16 %v632
      %v679 = vunpack.c.l.b16 %v633
      %v680 = vunpack.c.h.b16 %v633
      %v681 = vunpack.c.l.b16 %v634
      %v682 = vunpack.c.h.b16 %v634
      %v683 = vpack.c.b16 %v651, %v651
      %v684 = vpack.c.b16 %v652, %v652
      %v685 = vpack.c.b16 %v653, %v653
      %v686 = vpack.c.b16 %v654, %v654
      %v687 = vpack.c.b16 %v655, %v655
      %v688 = vpack.c.b16 %v656, %v656
      %v689 = vpack.c.b16 %v657, %v657
      %v690 = vpack.c.b16 %v658, %v658
      %v691 = vpack.c.b16 %v659, %v659
      %v692 = vpack.c.b16 %v660, %v660
      %v693 = vpack.c.b16 %v661, %v661
      %v694 = vpack.c.b16 %v662, %v662
      %v695 = vpack.c.b16 %v663, %v663
      %v696 = vpack.c.b16 %v664, %v664
      %v697 = vpack.c.b16 %v665, %v665
      %v698 = vpack.c.b16 %v666, %v666
      %v699 = vpack.c.b16 %v667, %v667
      %v700 = vpack.c.b16 %v668, %v668
      %v701 = vpack.c.b16 %v669, %v669
      %v702 = vpack.c.b16 %v670, %v670
      %v703 = vpack.c.b16 %v671, %v671
      %v704 = vpack.c.b16 %v672, %v672
      %v705 = vpack.c.b16 %v673, %v673
      %v706 = vpack.c.b16 %v674, %v674
      %v707 = vpack.c.b16 %v675, %v675
      %v708 = vpack.c.b16 %v676, %v676
      %v709 = vpack.c.b16 %v677, %v677
      %v710 = vpack.c.b16 %v678, %v678
      %v711 = vpack.c.b16 %v679, %v679
      %v712 = vpack.c.b16 %v680, %v680
      %v713 = vpack.c.b16 %v681, %v681
      %v714 = vpack.c.b16 %v682, %v682
      %747 = vst [vmem:[%s223] sm:$0xf] %v683
      %748 = vst [vmem:[%s223 + $0x4] sm:$0xf] %v684
      %749 = vst [vmem:[%s223 + $0x8] sm:$0xf] %v685
      %750 = vst [vmem:[%s223 + $0xc] sm:$0xf] %v686
      %751 = vst [vmem:[%s223 + $0x10] sm:$0xf] %v687
      %752 = vst [vmem:[%s223 + $0x14] sm:$0xf] %v688
      %753 = vst [vmem:[%s223 + $0x18] sm:$0xf] %v689
      %754 = vst [vmem:[%s223 + $0x1c] sm:$0xf] %v690
      %755 = vst [vmem:[%s223 + $0x20] sm:$0xf] %v691
      %756 = vst [vmem:[%s223 + $0x24] sm:$0xf] %v692
      %757 = vst [vmem:[%s223 + $0x28] sm:$0xf] %v693
      %758 = vst [vmem:[%s223 + $0x2c] sm:$0xf] %v694
      %759 = vst [vmem:[%s223 + $0x30] sm:$0xf] %v695
      %760 = vst [vmem:[%s223 + $0x34] sm:$0xf] %v696
      %761 = vst [vmem:[%s223 + $0x38] sm:$0xf] %v697
      %762 = vst [vmem:[%s223 + $0x3c] sm:$0xf] %v698
      %763 = vst [vmem:[%s223 + $0x40] sm:$0xf] %v699
      %764 = vst [vmem:[%s223 + $0x44] sm:$0xf] %v700
      %765 = vst [vmem:[%s223 + $0x48] sm:$0xf] %v701
      %766 = vst [vmem:[%s223 + $0x4c] sm:$0xf] %v702
      %767 = vst [vmem:[%s223 + $0x50] sm:$0xf] %v703
      %768 = vst [vmem:[%s223 + $0x54] sm:$0xf] %v704
      %769 = vst [vmem:[%s223 + $0x58] sm:$0xf] %v705
      %770 = vst [vmem:[%s223 + $0x5c] sm:$0xf] %v706
      %771 = vst [vmem:[%s223 + $0x60] sm:$0xf] %v707
      %772 = vst [vmem:[%s223 + $0x64] sm:$0xf] %v708
      %773 = vst [vmem:[%s223 + $0x68] sm:$0xf] %v709
      %774 = vst [vmem:[%s223 + $0x6c] sm:$0xf] %v710
      %775 = vst [vmem:[%s223 + $0x70] sm:$0xf] %v711
      %776 = vst [vmem:[%s223 + $0x74] sm:$0xf] %v712
      %777 = vst [vmem:[%s223 + $0x78] sm:$0xf] %v713
      %778 = vst [vmem:[%s223 + $0x7c] sm:$0xf] %v714
      %s779 = smul.u32 32, %s18
      %p780 = scmp.lt.s32.totalorder %s779, 63
      %s781 = scalar_select %p780, %s779, 63
      %p782 = scmp.lt.s32.totalorder %s19, 0
      %s783 = scalar_select %p782, %s19, 0
      %s784 = sadd.s32 %s783, %s781
      %s785 = smul.addr %s784, 4
      %s786 = scalar_lea.vmem %s3, %s785
      // Predicated region
      $region33: #{conv_block_forward.4} parent=31 // pred_check
        %p787 = pneg %p124
      $region34: #{conv_block_forward.4} parent=31 // pred_check_branch
        %789 = sbr.rel (%p787) target = $region36
      $region35: #{conv_block_forward.4} parent=31 // pred_region
        %s790 = smul.u32 32, %s18
      $region36: #{conv_block_forward.4} parent=31 // pred_fallthru
        _
    $region32: #{conv_block_forward.4} parent=5 // pred_fallthru
      _
    %p791 = scmp.le.s32.totalorder 2, %s9
    // Predicated region
    $region37: #{conv_block_forward.4} parent=5 // pred_check
      %p792 = pneg %p791
    $region38: #{conv_block_forward.4} parent=5 // pred_check_branch
      %794 = sbr.rel (%p792) target = $region40
    $region39: #{conv_block_forward.4} parent=5 // pred_region
      %s795 = ssub.s32 %s9, 2
      // Predicated region
      $region41: #{conv_block_forward.4} parent=39 // pred_check
        %p796 = pneg %p130
      $region42: #{conv_block_forward.4} parent=39 // pred_check_branch
        %798 = sbr.rel (%p796) target = $region44
      $region43: #{conv_block_forward.4} parent=39 // pred_region
        %s799 = smul.u32 32, %s20
        %p800 = scmp.lt.s32.totalorder %s799, 63
        %s801 = scalar_select %p800, %s799, 63
        %p802 = scmp.lt.s32.totalorder %s21, 0
        %s803 = scalar_select %p802, %s21, 0
        %s804 = sadd.s32 %s803, %s801
        %s805 = smul.addr %s804, 4
        %s806 = scalar_lea.vmem %s3, %s805
      $region44: #{conv_block_forward.4} parent=39 // pred_fallthru
        _
    $region40: #{conv_block_forward.4} parent=5 // pred_fallthru
      _
  $region6: #{conv_block_forward.4} parent=0 // loop_footer
    %s13 = sadd.s32 1, %s9
  $region7: #{conv_block_forward.4} parent=0 // loop_footer_branch
    %8 = sbr.rel target = $region3
  $region8: #{conv_block_forward.4} parent=0 // loop_exit
    _

// kernel: conv_block_forward.6
$region0: #{conv_block_forward.6}
  #allocation0 [shape = 'u32[]', space=smem, size = 0x4, offset = 0x4, fixed_abs, tag = 'smem constant byte address 0x4 - core index']
  #allocation1 [shape = 'u32[144,128]{1,0:T(1,128)}', space=vmem, size = 0x12000, scoped, tag = 'internal scratch']
  %s0 = inlined_call_operand.vmem [shape: bf16[128,64], index: 0, kind: input, shape index: {}]
  %s1 = inlined_call_operand.vmem [shape: bf16[64,256], index: 1, kind: input, shape index: {}]
  %s2 = inlined_call_operand.vmem [shape: f32[1,256], index: 2, kind: input, shape index: {}]
  %s3 = inlined_call_operand.vmem [shape: bf16[128,256], index: 3, kind: output, shape index: {}]
  %s4 = sld [smem:[#allocation0]]
  $region45: #{conv_block_forward.6} parent=0
    _
  %s6 = ssub.s32 1, %s4
  %s7 = scalar_select 0, %s6, %s4
  loop: start=0, step=1, limit=4
  $region2: #{conv_block_forward.6} parent=0 // loop_pre_header
    _
  $region3: #{conv_block_forward.6} parent=0 // loop_header
    %s9 = sphi 0, %s13
    %p10 = scmp.ge.s32.totalorder %s9, 4
    %s16 = sphi 0, %s28
    %s17 = sphi 0, %s24
    %s18 = sphi 0, %s16
    %s19 = sphi 0, %s17
    %s20 = sphi 0, %s18
    %s21 = sphi 0, %s19
    %s31 = sphi 0, %s33
    %s34 = sphi 0, %s31
    %s35 = sphi 0, %s34
    %s51 = sphi 0, %s35
    %s57 = sphi 0, %s59
    %s60 = sphi 0, %s57
    %s61 = sphi 0, %s60
    %s77 = sphi 0, %s61
    %s83 = sphi 0, %s85
    %s86 = sphi 0, %s83
    %s87 = sphi 0, %s86
    %s103 = sphi 0, %s87
    %s111 = sphi 0, %s113
    %s114 = sphi 0, %s111
    %s115 = sphi 0, %s114
    %s131 = sphi 0, %s115
  $region4: #{conv_block_forward.6} parent=0 // loop_header_branch
    %12 = sbr.rel (%p10) target = $region8
  $region5: #{conv_block_forward.6} parent=0 // loop_body
    %s14 = ssub.s32 %s9, 1
    %s15 = ssub.s32 %s9, 2
    %s22 = sadd.s32 1, %s17
    %p23 = scmp.ge.s32.totalorder %s22, 1
    %s24 = scalar_select %p23, 0, %s22
    %s25 = sadd.s32 1, %s16
    %s26 = scalar_select %p23, %s25, %s16
    %p27 = scmp.ge.s32.totalorder %s26, 2
    %s28 = scalar_select %p27, 0, %s26
    %s29 = ssub.s32 %s16, %s28
    %p30 = scmp.eq.s32.totalorder %s29, 0
    %s32 = sadd.s32 %s31, 1
    %s33 = scalar_select %p30, %s31, %s32
    %p36 = pneg %p30
    %p37 = scmp.eq.s32.totalorder %s9, 1
    %p38 = por %p36, %p37
    %p39 = scmp.ne.s32.totalorder %s31, %s34
    %p40 = scmp.eq.s32.totalorder %s9, 0
    %p41 = por %p39, %p40
    %p42 = scmp.ne.s32.totalorder %s31, %s34
    %p43 = scmp.eq.s32.totalorder %s14, 1
    %p44 = por %p42, %p43
    %p45 = scmp.ne.s32.totalorder %s34, %s35
    %p46 = scmp.eq.s32.totalorder %s14, 0
    %p47 = por %p45, %p46
    %p48 = scmp.ne.s32.totalorder %s34, %s35
    %p49 = scmp.eq.s32.totalorder %s15, 1
    %p50 = por %p48, %p49
    %p52 = scmp.ne.s32.totalorder %s35, %s51
    %p53 = scmp.eq.s32.totalorder %s15, 0
    %p54 = por %p52, %p53
    %s55 = ssub.s32 %s17, %s24
    %p56 = scmp.eq.s32.totalorder %s55, 0
    %s58 = sadd.s32 %s57, 1
    %s59 = scalar_select %p56, %s57, %s58
    %p62 = pneg %p56
    %p63 = scmp.eq.s32.totalorder %s9, 1
    %p64 = por %p62, %p63
    %p65 = scmp.ne.s32.totalorder %s57, %s60
    %p66 = scmp.eq.s32.totalorder %s9, 0
    %p67 = por %p65, %p66
    %p68 = scmp.ne.s32.totalorder %s57, %s60
    %p69 = scmp.eq.s32.totalorder %s14, 1
    %p70 = por %p68, %p69
    %p71 = scmp.ne.s32.totalorder %s60, %s61
    %p72 = scmp.eq.s32.totalorder %s14, 0
    %p73 = por %p71, %p72
    %p74 = scmp.ne.s32.totalorder %s60, %s61
    %p75 = scmp.eq.s32.totalorder %s15, 1
    %p76 = por %p74, %p75
    %p78 = scmp.ne.s32.totalorder %s61, %s77
    %p79 = scmp.eq.s32.totalorder %s15, 0
    %p80 = por %p78, %p79
    %s81 = ssub.s32 %s17, %s24
    %p82 = scmp.eq.s32.totalorder %s81, 0
    %s84 = sadd.s32 %s83, 1
    %s85 = scalar_select %p82, %s83, %s84
    %p88 = pneg %p82
    %p89 = scmp.eq.s32.totalorder %s9, 1
    %p90 = por %p88, %p89
    %p91 = scmp.ne.s32.totalorder %s83, %s86
    %p92 = scmp.eq.s32.totalorder %s9, 0
    %p93 = por %p91, %p92
    %p94 = scmp.ne.s32.totalorder %s83, %s86
    %p95 = scmp.eq.s32.totalorder %s14, 1
    %p96 = por %p94, %p95
    %p97 = scmp.ne.s32.totalorder %s86, %s87
    %p98 = scmp.eq.s32.totalorder %s14, 0
    %p99 = por %p97, %p98
    %p100 = scmp.ne.s32.totalorder %s86, %s87
    %p101 = scmp.eq.s32.totalorder %s15, 1
    %p102 = por %p100, %p101
    %p104 = scmp.ne.s32.totalorder %s87, %s103
    %p105 = scmp.eq.s32.totalorder %s15, 0
    %p106 = por %p104, %p105
    %s107 = ssub.s32 %s16, %s28
    %s108 = ssub.s32 %s17, %s24
    %s109 = sor.u32 %s107, %s108
    %p110 = scmp.eq.s32.totalorder %s109, 0
    %s112 = sadd.s32 %s111, 1
    %s113 = scalar_select %p110, %s111, %s112
    %p116 = pneg %p110
    %p117 = scmp.eq.s32.totalorder %s9, 1
    %p118 = por %p116, %p117
    %p119 = scmp.ne.s32.totalorder %s111, %s114
    %p120 = scmp.eq.s32.totalorder %s9, 0
    %p121 = por %p119, %p120
    %p122 = scmp.ne.s32.totalorder %s111, %s114
    %p123 = scmp.eq.s32.totalorder %s14, 1
    %p124 = por %p122, %p123
    %p125 = scmp.ne.s32.totalorder %s114, %s115
    %p126 = scmp.eq.s32.totalorder %s14, 0
    %p127 = por %p125, %p126
    %p128 = scmp.ne.s32.totalorder %s114, %s115
    %p129 = scmp.eq.s32.totalorder %s15, 1
    %p130 = por %p128, %p129
    %p132 = scmp.ne.s32.totalorder %s115, %s131
    %p133 = scmp.eq.s32.totalorder %s15, 0
    %p134 = por %p132, %p133
    %p135 = scmp.le.s32.totalorder 1, %s9
    %p136 = scmp.lt.s32.totalorder %s9, 3
    %p137 = pnand %p135, %p136
    %p138 = pneg %p137
    // Predicated region
    $region9: #{conv_block_forward.6} parent=5 // pred_check
      _
    $region10: #{conv_block_forward.6} parent=5 // pred_check_branch
      %140 = sbr.rel (%p137) target = $region12
    $region11: #{conv_block_forward.6} parent=5 // pred_region
      %s141 = ssub.s32 %s9, 1
      // Predicated region
      $region13: #{conv_block_forward.6} parent=11 // pred_check
        %p142 = pneg %p73
      $region14: #{conv_block_forward.6} parent=11 // pred_check_branch
        %144 = sbr.rel (%p142) target = $region16
      $region15: #{conv_block_forward.6} parent=11 // pred_region
        %s145 = smul.u32 2, %s19
        %p146 = scmp.lt.s32.totalorder %s145, 1
        %s147 = scalar_select %p146, %s145, 1
        %s148 = smul.addr %s147, 4
        %s149 = scalar_lea.vmem %s1, %s148
        %s150 = smul.u32 2, %s19
      $region16: #{conv_block_forward.6} parent=11 // pred_fallthru
        _
      // Predicated region
      $region17: #{conv_block_forward.6} parent=11 // pred_check
        %p151 = pneg %p99
      $region18: #{conv_block_forward.6} parent=11 // pred_check_branch
        %153 = sbr.rel (%p151) target = $region20
      $region19: #{conv_block_forward.6} parent=11 // pred_region
        %s154 = smul.u32 2, %s19
        %p155 = scmp.lt.s32.totalorder %s154, 1
        %s156 = scalar_select %p155, %s154, 1
        %s157 = scalar_lea.vmem %s2, %s156
        %s158 = smul.u32 2, %s19
      $region20: #{conv_block_forward.6} parent=11 // pred_fallthru
        _
    $region12: #{conv_block_forward.6} parent=5 // pred_fallthru
      _
    %p159 = scmp.lt.s32.totalorder %s9, 2
    // Predicated region
    $region21: #{conv_block_forward.6} parent=5 // pred_check
      %p160 = pneg %p159
    $region22: #{conv_block_forward.6} parent=5 // pred_check_branch
      %162 = sbr.rel (%p160) target = $region24
    $region23: #{conv_block_forward.6} parent=5 // pred_region
      // Predicated region
      $region25: #{conv_block_forward.6} parent=23 // pred_check
        %p163 = pneg %p41
      $region26: #{conv_block_forward.6} parent=23 // pred_check_branch
        %165 = sbr.rel (%p163) target = $region28
      $region27: #{conv_block_forward.6} parent=23 // pred_region
        %s166 = smul.u32 8, %s16
        %p167 = scmp.lt.s32.totalorder %s166, 15
        %s168 = scalar_select %p167, %s166, 15
        %s169 = smul.addr %s168, 4
        %s170 = scalar_lea.vmem %s0, %s169
        %s171 = smul.u32 8, %s16
      $region28: #{conv_block_forward.6} parent=23 // pred_fallthru
        _
    $region24: #{conv_block_forward.6} parent=5 // pred_fallthru
      _
    %p172 = scmp.le.s32.totalorder 1, %s9
    %p173 = scmp.lt.s32.totalorder %s9, 3
    %p174 = pnand %p172, %p173
    %p175 = pneg %p174
    // Predicated region
    $region29: #{conv_block_forward.6} parent=5 // pred_check
      _
    $region30: #{conv_block_forward.6} parent=5 // pred_check_branch
      %177 = sbr.rel (%p174) target = $region32
    $region31: #{conv_block_forward.6} parent=5 // pred_region
      %s178 = ssub.s32 %s9, 1
      %s179 = smul.u32 8, %s18
      %p180 = scmp.lt.s32.totalorder %s179, 15
      %s181 = scalar_select %p180, %s179, 15
      %s182 = smul.addr %s181, 4
      %s183 = scalar_lea.vmem %s0, %s182
      %p184 = pneg %p47
      %p185 = pneg %p44
      %s186 = smul.u32 2, %s19
      %p187 = scmp.lt.s32.totalorder %s186, 1
      %s188 = scalar_select %p187, %s186, 1
      %s189 = smul.addr %s188, 4
      %s190 = scalar_lea.vmem %s1, %s189
      %p191 = pneg %p73
      %p192 = pneg %p70
      %s193 = smul.u32 2, %s19
      %p194 = scmp.lt.s32.totalorder %s193, 1
      %s195 = scalar_select %p194, %s193, 1
      %s196 = scalar_lea.vmem %s2, %s195
      %p197 = pneg %p99
      %p198 = pneg %p96
      %p199 = pneg %p127
      %p200 = pneg %p124
      %s201 = smul.u32 8, %s18
      %s202 = smul.u32 2, %s19
      %p203 = scmp.lt.s32.totalorder %s201, 15
      %s204 = scalar_select %p203, %s201, 15
      %p205 = scmp.lt.s32.totalorder %s202, 1
      %s206 = scalar_select %p205, %s202, 1
      %s207 = smul.addr %s204, 2
      %s208 = sadd.s32 %s206, %s207
      %s209 = smul.addr %s208, 4
      %s210 = scalar_lea.vmem %s3, %s209
      %s211 = smul.u32 8, %s18
      %p212 = scmp.lt.s32.totalorder %s211, 15
      %s213 = scalar_select %p212, %s211, 15
      %s214 = smul.addr %s213, 4
      %s215 = scalar_lea.vmem %s0, %s214
      %s216 = smul.u32 8, %s18
      %s217 = smul.u32 2, %s19
      %p218 = scmp.lt.s32.totalorder %s217, 1
      %s219 = scalar_select %p218, %s217, 1
      %s220 = smul.addr %s219, 4
      %s221 = scalar_lea.vmem %s1, %s220
      %s222 = smul.u32 2, %s19
      %s223 = smul.u32 2, %s19
      %p224 = scmp.lt.s32.totalorder %s223, 1
      %s225 = scalar_select %p224, %s223, 1
      %s226 = scalar_lea.vmem %s2, %s225
      %s227 = smul.u32 2, %s19
      %s228 = smul.u32 8, %s18
      %s229 = smul.u32 2, %s19
      %p230 = scmp.lt.s32.totalorder %s228, 15
      %s231 = scalar_select %p230, %s228, 15
      %p232 = scmp.lt.s32.totalorder %s229, 1
      %s233 = scalar_select %p232, %s229, 1
      %s234 = smul.addr %s231, 2
      %s235 = sadd.s32 %s233, %s234
      %s236 = smul.addr %s235, 4
      %s237 = scalar_lea.vmem %s3, %s236
      %s238 = smul.u32 8, %s18
      %s239 = smul.u32 2, %s19
      %v241 = vld [vmem:[%s215] sm:$0xf]
      %v242 = vld [vmem:[%s215 + $0x4] sm:$0xf]
      %v243 = vld [vmem:[%s215 + $0x8] sm:$0xf]
      %v244 = vld [vmem:[%s215 + $0xc] sm:$0xf]
      %v245 = vld [vmem:[%s215 + $0x10] sm:$0xf]
      %v246 = vld [vmem:[%s215 + $0x14] sm:$0xf]
      %v247 = vld [vmem:[%s215 + $0x18] sm:$0xf]
      %v248 = vld [vmem:[%s215 + $0x1c] sm:$0xf]
      %v249 = vld [vmem:[%s221] sm:$0xff]
      %v250 = vld [vmem:[%s221 + $0x8] sm:$0xff]
      %v251 = vld [vmem:[%s221 + $0x10] sm:$0xff]
      %v252 = vld [vmem:[%s221 + $0x18] sm:$0xff]
      %v253 = vld [vmem:[%s221 + $0x20] sm:$0xff]
      %v254 = vld [vmem:[%s221 + $0x28] sm:$0xff]
      %v255 = vld [vmem:[%s221 + $0x30] sm:$0xff]
      %v256 = vld [vmem:[%s221 + $0x38] sm:$0xff]
      %v257 = vld [vmem:[%s226] sm:$0x3]
      %v259 = vlaneseq
      %v260 = vshrl.u32 %v259, 7
      %v261 = vsub.s32 0, %v260
      %v262 = vrot.slane %v257, %v261
      %v263 = vlaneseq
      %v264 = vshrl.u32 %v263, 7
      %v265 = vsub.s32 1, %v264
      %v266 = vrot.slane %v257, %v265
      %v277 = vunpack.c.l.b16 %v241
      %v278 = vunpack.c.l.b16 %v242
      %v279 = vunpack.c.l.b16 %v243
      %v280 = vunpack.c.l.b16 %v244
      %v281 = vunpack.c.l.b16 %v245
      %v282 = vunpack.c.l.b16 %v246
      %v283 = vunpack.c.l.b16 %v247
      %v284 = vunpack.c.l.b16 %v248
      %v285 = vpack.c.b16 %v278, %v277
      %v286 = vpack.c.b16 %v280, %v279
      %v287 = vpack.c.b16 %v282, %v281
      %v288 = vpack.c.b16 %v284, %v283
      %v297 = vunpack.c.l.b16 %v249
      %v298 = vunpack.c.h.b16 %v249
      %v299 = vunpack.c.l.b16 %v250
      %v300 = vunpack.c.h.b16 %v250
      %v301 = vunpack.c.l.b16 %v251
      %v302 = vunpack.c.h.b16 %v251
      %v303 = vunpack.c.l.b16 %v252
      %v304 = vunpack.c.h.b16 %v252
      %v305 = vunpack.c.l.b16 %v253
      %v306 = vunpack.c.h.b16 %v253
      %v307 = vunpack.c.l.b16 %v254
      %v308 = vunpack.c.h.b16 %v254
      %v309 = vunpack.c.l.b16 %v255
      %v310 = vunpack.c.h.b16 %v255
      %v311 = vunpack.c.l.b16 %v256
      %v312 = vunpack.c.h.b16 %v256
      %v313 = vpack.c.b16 %v299, %v297
      %v314 = vpack.c.b16 %v300, %v298
      %v315 = vpack.c.b16 %v303, %v301
      %v316 = vpack.c.b16 %v304, %v302
      %v317 = vpack.c.b16 %v307, %v305
      %v318 = vpack.c.b16 %v308, %v306
      %v319 = vpack.c.b16 %v311, %v309
      %v320 = vpack.c.b16 %v312, %v310
      %vm329 = vcmask 523264
      %v331 = vsel %vm329, %v285, 0
      %v334 = vsel %vm329, %v286, 0
      %v337 = vsel %vm329, %v287, 0
      %v340 = vsel %vm329, %v288, 0
      %342 = vmatprep.subr.bf16.mxu0 %v314
      %343 = vmatpush1.bf16.msra.mxu0 %v313
      %344 = vmatprep.subr.bf16.mxu0 %v316
      %345 = vmatpush1.bf16.msra.mxu0 %v315
      %346 = vmatprep.subr.bf16.mxu0 %v318
      %347 = vmatpush1.bf16.msra.mxu0 %v317
      %348 = vmatprep.subr.bf16.mxu0 %v320
      %349 = vmatpush1.bf16.msra.mxu0 %v319
      %350 = vmatprep.subr.bf16.mxu0 0
      %351 = vmatpush1.bf16.msra.mxu0 0
      %352 = vmatprep.subr.bf16.mxu0 0
      %353 = vmatpush1.bf16.msra.mxu0 0
      %354 = vmatprep.subr.bf16.mxu0 0
      %355 = vmatpush1.bf16.msra.mxu0 0
      %356 = vmatprep.subr.bf16.mxu0 0
      %357 = vmatpush1.bf16.msra.mxu0 0
      %358 = vmatprep.subr.bf16.mxu0 0
      %359 = vmatpush1.bf16.msra.mxu0 0
      %360 = vmatprep.subr.bf16.mxu0 0
      %361 = vmatpush1.bf16.msra.mxu0 0
      %362 = vmatprep.subr.bf16.mxu0 0
      %363 = vmatpush1.bf16.msra.mxu0 0
      %364 = vmatprep.subr.bf16.mxu0 0
      %365 = vmatpush1.bf16.msra.mxu0 0
      %366 = vmatprep.subr.bf16.mxu0 0
      %367 = vmatpush1.bf16.msra.mxu0 0
      %368 = vmatprep.subr.bf16.mxu0 0
      %369 = vmatpush1.bf16.msra.mxu0 0
      %370 = vmatprep.subr.bf16.mxu0 0
      %371 = vmatpush1.bf16.msra.mxu0 0
      %372 = vmatprep.subr.bf16.mxu0 0
      %373 = vmatpush1.bf16.msra.mxu0 0
      %374 = vmatprep.mubr.bf16.mxu0 0
      %375 = vmatmul.mubr.bf16.gmra.mrb[0].mxu0 %v331
      %v376 = vpop.f32.mrb[0].mxu0
      %v377 = vadd.f32 %v262, %v376
      %v378 = vpop.f32.mrb[0].mxu0
      %v379 = vadd.f32 %v266, %v378
      %v380 = vpop.f32.mrb[0].mxu0
      %v381 = vadd.f32 %v262, %v380
      %v382 = vpop.f32.mrb[0].mxu0
      %v383 = vadd.f32 %v266, %v382
      %384 = vmatprep.mubr.bf16.mxu0 0
      %385 = vmatmul.mubr.bf16.gmra.mrb[0].mxu0 %v334
      %v386 = vpop.f32.mrb[0].mxu0
      %v387 = vadd.f32 %v262, %v386
      %v388 = vpop.f32.mrb[0].mxu0
      %v389 = vadd.f32 %v266, %v388
      %v390 = vpop.f32.mrb[0].mxu0
      %v391 = vadd.f32 %v262, %v390
      %v392 = vpop.f32.mrb[0].mxu0
      %v393 = vadd.f32 %v266, %v392
      %394 = vmatprep.mubr.bf16.mxu0 0
      %395 = vmatmul.mubr.bf16.gmra.mrb[0].mxu0 %v337
      %v396 = vpop.f32.mrb[0].mxu0
      %v397 = vadd.f32 %v262, %v396
      %v398 = vpop.f32.mrb[0].mxu0
      %v399 = vadd.f32 %v266, %v398
      %v400 = vpop.f32.mrb[0].mxu0
      %v401 = vadd.f32 %v262, %v400
      %v402 = vpop.f32.mrb[0].mxu0
      %v403 = vadd.f32 %v266, %v402
      %404 = vmatprep.mubr.bf16.mxu0 0
      %405 = vmatmul.mubr.bf16.gmra.mrb[0].mxu0 %v340
      %v406 = vpop.f32.mrb[0].mxu0
      %v407 = vadd.f32 %v262, %v406
      %v408 = vpop.f32.mrb[0].mxu0
      %v409 = vadd.f32 %v266, %v408
      %v410 = vpop.f32.mrb[0].mxu0
      %v411 = vadd.f32 %v262, %v410
      %v412 = vpop.f32.mrb[0].mxu0
      %v413 = vadd.f32 %v266, %v412
      %414 = vdwg.mxu0
      %v415 = vpack.c.bf16 %v381, %v377
      %v416 = vpack.c.bf16 %v383, %v379
      %v417 = vpack.c.bf16 %v391, %v387
      %v418 = vpack.c.bf16 %v393, %v389
      %v419 = vpack.c.bf16 %v401, %v397
      %v420 = vpack.c.bf16 %v403, %v399
      %v421 = vpack.c.bf16 %v411, %v407
      %v422 = vpack.c.bf16 %v413, %v409
      %v431 = vunpack.c.l.b16 %v415
      %v432 = vunpack.c.l.b16 %v416
      %v433 = vunpack.c.h.b16 %v415
      %v434 = vunpack.c.h.b16 %v416
      %v435 = vunpack.c.l.b16 %v417
      %v436 = vunpack.c.l.b16 %v418
      %v437 = vunpack.c.h.b16 %v417
      %v438 = vunpack.c.h.b16 %v418
      %v439 = vunpack.c.l.b16 %v419
      %v440 = vunpack.c.l.b16 %v420
      %v441 = vunpack.c.h.b16 %v419
      %v442 = vunpack.c.h.b16 %v420
      %v443 = vunpack.c.l.b16 %v421
      %v444 = vunpack.c.l.b16 %v422
      %v445 = vunpack.c.h.b16 %v421
      %v446 = vunpack.c.h.b16 %v422
      %v447 = vpack.c.b16 %v432, %v431
      %v448 = vpack.c.b16 %v434, %v433
      %v449 = vpack.c.b16 %v436, %v435
      %v450 = vpack.c.b16 %v438, %v437
      %v451 = vpack.c.b16 %v440, %v439
      %v452 = vpack.c.b16 %v442, %v441
      %v453 = vpack.c.b16 %v444, %v443
      %v454 = vpack.c.b16 %v446, %v445
      %463 = vst [vmem:[%s237] sm:$0xff] %v447
      %464 = vst [vmem:[%s237 + $0x8] sm:$0xff] %v448
      %465 = vst [vmem:[%s237 + $0x10] sm:$0xff] %v449
      %466 = vst [vmem:[%s237 + $0x18] sm:$0xff] %v450
      %467 = vst [vmem:[%s237 + $0x20] sm:$0xff] %v451
      %468 = vst [vmem:[%s237 + $0x28] sm:$0xff] %v452
      %469 = vst [vmem:[%s237 + $0x30] sm:$0xff] %v453
      %470 = vst [vmem:[%s237 + $0x38] sm:$0xff] %v454
      %s471 = smul.u32 8, %s18
      %s472 = smul.u32 2, %s19
      %p473 = scmp.lt.s32.totalorder %s471, 15
      %s474 = scalar_select %p473, %s471, 15
      %p475 = scmp.lt.s32.totalorder %s472, 1
      %s476 = scalar_select %p475, %s472, 1
      %s477 = smul.addr %s474, 2
      %s478 = sadd.s32 %s476, %s477
      %s479 = smul.addr %s478, 4
      %s480 = scalar_lea.vmem %s3, %s479
      // Predicated region
      $region33: #{conv_block_forward.6} parent=31 // pred_check
        %p481 = pneg %p124
      $region34: #{conv_block_forward.6} parent=31 // pred_check_branch
        %483 = sbr.rel (%p481) target = $region36
      $region35: #{conv_block_forward.6} parent=31 // pred_region
        %s484 = smul.u32 8, %s18
        %s485 = smul.u32 2, %s19
      $region36: #{conv_block_forward.6} parent=31 // pred_fallthru
        _
    $region32: #{conv_block_forward.6} parent=5 // pred_fallthru
      _
    %p486 = scmp.le.s32.totalorder 2, %s9
    // Predicated region
    $region37: #{conv_block_forward.6} parent=5 // pred_check
      %p487 = pneg %p486
    $region38: #{conv_block_forward.6} parent=5 // pred_check_branch
      %489 = sbr.rel (%p487) target = $region40
    $region39: #{conv_block_forward.6} parent=5 // pred_region
      %s490 = ssub.s32 %s9, 2
      // Predicated region
      $region41: #{conv_block_forward.6} parent=39 // pred_check
        %p491 = pneg %p130
      $region42: #{conv_block_forward.6} parent=39 // pred_check_branch
        %493 = sbr.rel (%p491) target = $region44
      $region43: #{conv_block_forward.6} parent=39 // pred_region
        %s494 = smul.u32 8, %s20
        %s495 = smul.u32 2, %s21
        %p496 = scmp.lt.s32.totalorder %s494, 15
        %s497 = scalar_select %p496, %s494, 15
        %p498 = scmp.lt.s32.totalorder %s495, 1
        %s499 = scalar_select %p498, %s495, 1
        %s500 = smul.addr %s497, 2
        %s501 = sadd.s32 %s499, %s500
        %s502 = smul.addr %s501, 4
        %s503 = scalar_lea.vmem %s3, %s502
      $region44: #{conv_block_forward.6} parent=39 // pred_fallthru
        _
    $region40: #{conv_block_forward.6} parent=5 // pred_fallthru
      _
  $region6: #{conv_block_forward.6} parent=0 // loop_footer
    %s13 = sadd.s32 1, %s9
  $region7: #{conv_block_forward.6} parent=0 // loop_footer_branch
    %8 = sbr.rel target = $region3
  $region8: #{conv_block_forward.6} parent=0 // loop_exit
    _

// kernel: conv_block_forward.7
$region0: #{conv_block_forward.7}
  #allocation0 [shape = 'u32[]', space=smem, size = 0x4, offset = 0x4, fixed_abs, tag = 'smem constant byte address 0x4 - core index']
  #allocation1 [shape = 'u32[144,128]{1,0:T(1,128)}', space=vmem, size = 0x12000, scoped, tag = 'internal scratch']
  %s0 = inlined_call_operand.vmem [shape: bf16[128,128], index: 0, kind: input, shape index: {}]
  %s1 = inlined_call_operand.vmem [shape: bf16[128,256], index: 1, kind: input, shape index: {}]
  %s2 = inlined_call_operand.vmem [shape: f32[1,256], index: 2, kind: input, shape index: {}]
  %s3 = inlined_call_operand.vmem [shape: bf16[128,256], index: 3, kind: input, shape index: {}]
  %s4 = inlined_call_operand.vmem [shape: bf16[128,256], index: 4, kind: output, shape index: {}]
  %s5 = sld [smem:[#allocation0]]
  $region49: #{conv_block_forward.7} parent=0
    _
  %s7 = ssub.s32 1, %s5
  %s8 = scalar_select 0, %s7, %s5
  loop: start=0, step=1, limit=4
  $region2: #{conv_block_forward.7} parent=0 // loop_pre_header
    _
  $region3: #{conv_block_forward.7} parent=0 // loop_header
    %s10 = sphi 0, %s14
    %p11 = scmp.ge.s32.totalorder %s10, 4
    %s17 = sphi 0, %s29
    %s18 = sphi 0, %s25
    %s19 = sphi 0, %s17
    %s20 = sphi 0, %s18
    %s21 = sphi 0, %s19
    %s22 = sphi 0, %s20
    %s32 = sphi 0, %s34
    %s35 = sphi 0, %s32
    %s36 = sphi 0, %s35
    %s52 = sphi 0, %s36
    %s58 = sphi 0, %s60
    %s61 = sphi 0, %s58
    %s62 = sphi 0, %s61
    %s78 = sphi 0, %s62
    %s84 = sphi 0, %s86
    %s87 = sphi 0, %s84
    %s88 = sphi 0, %s87
    %s104 = sphi 0, %s88
    %s112 = sphi 0, %s114
    %s115 = sphi 0, %s112
    %s116 = sphi 0, %s115
    %s132 = sphi 0, %s116
    %s140 = sphi 0, %s142
    %s143 = sphi 0, %s140
    %s144 = sphi 0, %s143
    %s160 = sphi 0, %s144
  $region4: #{conv_block_forward.7} parent=0 // loop_header_branch
    %13 = sbr.rel (%p11) target = $region8
  $region5: #{conv_block_forward.7} parent=0 // loop_body
    %s15 = ssub.s32 %s10, 1
    %s16 = ssub.s32 %s10, 2
    %s23 = sadd.s32 1, %s18
    %p24 = scmp.ge.s32.totalorder %s23, 1
    %s25 = scalar_select %p24, 0, %s23
    %s26 = sadd.s32 1, %s17
    %s27 = scalar_select %p24, %s26, %s17
    %p28 = scmp.ge.s32.totalorder %s27, 2
    %s29 = scalar_select %p28, 0, %s27
    %s30 = ssub.s32 %s17, %s29
    %p31 = scmp.eq.s32.totalorder %s30, 0
    %s33 = sadd.s32 %s32, 1
    %s34 = scalar_select %p31, %s32, %s33
    %p37 = pneg %p31
    %p38 = scmp.eq.s32.totalorder %s10, 1
    %p39 = por %p37, %p38
    %p40 = scmp.ne.s32.totalorder %s32, %s35
    %p41 = scmp.eq.s32.totalorder %s10, 0
    %p42 = por %p40, %p41
    %p43 = scmp.ne.s32.totalorder %s32, %s35
    %p44 = scmp.eq.s32.totalorder %s15, 1
    %p45 = por %p43, %p44
    %p46 = scmp.ne.s32.totalorder %s35, %s36
    %p47 = scmp.eq.s32.totalorder %s15, 0
    %p48 = por %p46, %p47
    %p49 = scmp.ne.s32.totalorder %s35, %s36
    %p50 = scmp.eq.s32.totalorder %s16, 1
    %p51 = por %p49, %p50
    %p53 = scmp.ne.s32.totalorder %s36, %s52
    %p54 = scmp.eq.s32.totalorder %s16, 0
    %p55 = por %p53, %p54
    %s56 = ssub.s32 %s18, %s25
    %p57 = scmp.eq.s32.totalorder %s56, 0
    %s59 = sadd.s32 %s58, 1
    %s60 = scalar_select %p57, %s58, %s59
    %p63 = pneg %p57
    %p64 = scmp.eq.s32.totalorder %s10, 1
    %p65 = por %p63, %p64
    %p66 = scmp.ne.s32.totalorder %s58, %s61
    %p67 = scmp.eq.s32.totalorder %s10, 0
    %p68 = por %p66, %p67
    %p69 = scmp.ne.s32.totalorder %s58, %s61
    %p70 = scmp.eq.s32.totalorder %s15, 1
    %p71 = por %p69, %p70
    %p72 = scmp.ne.s32.totalorder %s61, %s62
    %p73 = scmp.eq.s32.totalorder %s15, 0
    %p74 = por %p72, %p73
    %p75 = scmp.ne.s32.totalorder %s61, %s62
    %p76 = scmp.eq.s32.totalorder %s16, 1
    %p77 = por %p75, %p76
    %p79 = scmp.ne.s32.totalorder %s62, %s78
    %p80 = scmp.eq.s32.totalorder %s16, 0
    %p81 = por %p79, %p80
    %s82 = ssub.s32 %s18, %s25
    %p83 = scmp.eq.s32.totalorder %s82, 0
    %s85 = sadd.s32 %s84, 1
    %s86 = scalar_select %p83, %s84, %s85
    %p89 = pneg %p83
    %p90 = scmp.eq.s32.totalorder %s10, 1
    %p91 = por %p89, %p90
    %p92 = scmp.ne.s32.totalorder %s84, %s87
    %p93 = scmp.eq.s32.totalorder %s10, 0
    %p94 = por %p92, %p93
    %p95 = scmp.ne.s32.totalorder %s84, %s87
    %p96 = scmp.eq.s32.totalorder %s15, 1
    %p97 = por %p95, %p96
    %p98 = scmp.ne.s32.totalorder %s87, %s88
    %p99 = scmp.eq.s32.totalorder %s15, 0
    %p100 = por %p98, %p99
    %p101 = scmp.ne.s32.totalorder %s87, %s88
    %p102 = scmp.eq.s32.totalorder %s16, 1
    %p103 = por %p101, %p102
    %p105 = scmp.ne.s32.totalorder %s88, %s104
    %p106 = scmp.eq.s32.totalorder %s16, 0
    %p107 = por %p105, %p106
    %s108 = ssub.s32 %s17, %s29
    %s109 = ssub.s32 %s18, %s25
    %s110 = sor.u32 %s108, %s109
    %p111 = scmp.eq.s32.totalorder %s110, 0
    %s113 = sadd.s32 %s112, 1
    %s114 = scalar_select %p111, %s112, %s113
    %p117 = pneg %p111
    %p118 = scmp.eq.s32.totalorder %s10, 1
    %p119 = por %p117, %p118
    %p120 = scmp.ne.s32.totalorder %s112, %s115
    %p121 = scmp.eq.s32.totalorder %s10, 0
    %p122 = por %p120, %p121
    %p123 = scmp.ne.s32.totalorder %s112, %s115
    %p124 = scmp.eq.s32.totalorder %s15, 1
    %p125 = por %p123, %p124
    %p126 = scmp.ne.s32.totalorder %s115, %s116
    %p127 = scmp.eq.s32.totalorder %s15, 0
    %p128 = por %p126, %p127
    %p129 = scmp.ne.s32.totalorder %s115, %s116
    %p130 = scmp.eq.s32.totalorder %s16, 1
    %p131 = por %p129, %p130
    %p133 = scmp.ne.s32.totalorder %s116, %s132
    %p134 = scmp.eq.s32.totalorder %s16, 0
    %p135 = por %p133, %p134
    %s136 = ssub.s32 %s17, %s29
    %s137 = ssub.s32 %s18, %s25
    %s138 = sor.u32 %s136, %s137
    %p139 = scmp.eq.s32.totalorder %s138, 0
    %s141 = sadd.s32 %s140, 1
    %s142 = scalar_select %p139, %s140, %s141
    %p145 = pneg %p139
    %p146 = scmp.eq.s32.totalorder %s10, 1
    %p147 = por %p145, %p146
    %p148 = scmp.ne.s32.totalorder %s140, %s143
    %p149 = scmp.eq.s32.totalorder %s10, 0
    %p150 = por %p148, %p149
    %p151 = scmp.ne.s32.totalorder %s140, %s143
    %p152 = scmp.eq.s32.totalorder %s15, 1
    %p153 = por %p151, %p152
    %p154 = scmp.ne.s32.totalorder %s143, %s144
    %p155 = scmp.eq.s32.totalorder %s15, 0
    %p156 = por %p154, %p155
    %p157 = scmp.ne.s32.totalorder %s143, %s144
    %p158 = scmp.eq.s32.totalorder %s16, 1
    %p159 = por %p157, %p158
    %p161 = scmp.ne.s32.totalorder %s144, %s160
    %p162 = scmp.eq.s32.totalorder %s16, 0
    %p163 = por %p161, %p162
    %p164 = scmp.le.s32.totalorder 1, %s10
    %p165 = scmp.lt.s32.totalorder %s10, 3
    %p166 = pnand %p164, %p165
    %p167 = pneg %p166
    // Predicated region
    $region9: #{conv_block_forward.7} parent=5 // pred_check
      _
    $region10: #{conv_block_forward.7} parent=5 // pred_check_branch
      %169 = sbr.rel (%p166) target = $region12
    $region11: #{conv_block_forward.7} parent=5 // pred_region
      %s170 = ssub.s32 %s10, 1
      // Predicated region
      $region13: #{conv_block_forward.7} parent=11 // pred_check
        %p171 = pneg %p74
      $region14: #{conv_block_forward.7} parent=11 // pred_check_branch
        %173 = sbr.rel (%p171) target = $region16
      $region15: #{conv_block_forward.7} parent=11 // pred_region
        %s174 = smul.u32 2, %s20
        %p175 = scmp.lt.s32.totalorder %s174, 1
        %s176 = scalar_select %p175, %s174, 1
        %s177 = smul.addr %s176, 4
        %s178 = scalar_lea.vmem %s1, %s177
        %s179 = smul.u32 2, %s20
      $region16: #{conv_block_forward.7} parent=11 // pred_fallthru
        _
      // Predicated region
      $region17: #{conv_block_forward.7} parent=11 // pred_check
        %p180 = pneg %p100
      $region18: #{conv_block_forward.7} parent=11 // pred_check_branch
        %182 = sbr.rel (%p180) target = $region20
      $region19: #{conv_block_forward.7} parent=11 // pred_region
        %s183 = smul.u32 2, %s20
        %p184 = scmp.lt.s32.totalorder %s183, 1
        %s185 = scalar_select %p184, %s183, 1
        %s186 = scalar_lea.vmem %s2, %s185
        %s187 = smul.u32 2, %s20
      $region20: #{conv_block_forward.7} parent=11 // pred_fallthru
        _
    $region12: #{conv_block_forward.7} parent=5 // pred_fallthru
      _
    %p188 = scmp.lt.s32.totalorder %s10, 2
    // Predicated region
    $region21: #{conv_block_forward.7} parent=5 // pred_check
      %p189 = pneg %p188
    $region22: #{conv_block_forward.7} parent=5 // pred_check_branch
      %191 = sbr.rel (%p189) target = $region24
    $region23: #{conv_block_forward.7} parent=5 // pred_region
      // Predicated region
      $region25: #{conv_block_forward.7} parent=23 // pred_check
        %p192 = pneg %p42
      $region26: #{conv_block_forward.7} parent=23 // pred_check_branch
        %194 = sbr.rel (%p192) target = $region28
      $region27: #{conv_block_forward.7} parent=23 // pred_region
        %s195 = smul.u32 8, %s17
        %p196 = scmp.lt.s32.totalorder %s195, 15
        %s197 = scalar_select %p196, %s195, 15
        %s198 = smul.addr %s197, 4
        %s199 = scalar_lea.vmem %s0, %s198
        %s200 = smul.u32 8, %s17
      $region28: #{conv_block_forward.7} parent=23 // pred_fallthru
        _
      // Predicated region
      $region29: #{conv_block_forward.7} parent=23 // pred_check
        %p201 = pneg %p122
      $region30: #{conv_block_forward.7} parent=23 // pred_check_branch
        %203 = sbr.rel (%p201) target = $region32
      $region31: #{conv_block_forward.7} parent=23 // pred_region
        %s204 = smul.u32 8, %s17
        %s205 = smul.u32 2, %s18
        %p206 = scmp.lt.s32.totalorder %s204, 15
        %s207 = scalar_select %p206, %s204, 15
        %p208 = scmp.lt.s32.totalorder %s205, 1
        %s209 = scalar_select %p208, %s205, 1
        %s210 = smul.addr %s207, 2
        %s211 = sadd.s32 %s209, %s210
        %s212 = smul.addr %s211, 4
        %s213 = scalar_lea.vmem %s3, %s212
        %s214 = smul.u32 8, %s17
        %s215 = smul.u32 2, %s18
      $region32: #{conv_block_forward.7} parent=23 // pred_fallthru
        _
    $region24: #{conv_block_forward.7} parent=5 // pred_fallthru
      _
    %p216 = scmp.le.s32.totalorder 1, %s10
    %p217 = scmp.lt.s32.totalorder %s10, 3
    %p218 = pnand %p216, %p217
    %p219 = pneg %p218
    // Predicated region
    $region33: #{conv_block_forward.7} parent=5 // pred_check
      _
    $region34: #{conv_block_forward.7} parent=5 // pred_check_branch
      %221 = sbr.rel (%p218) target = $region36
    $region35: #{conv_block_forward.7} parent=5 // pred_region
      %s222 = ssub.s32 %s10, 1
      %s223 = smul.u32 8, %s19
      %p224 = scmp.lt.s32.totalorder %s223, 15
      %s225 = scalar_select %p224, %s223, 15
      %s226 = smul.addr %s225, 4
      %s227 = scalar_lea.vmem %s0, %s226
      %p228 = pneg %p48
      %p229 = pneg %p45
      %s230 = smul.u32 2, %s20
      %p231 = scmp.lt.s32.totalorder %s230, 1
      %s232 = scalar_select %p231, %s230, 1
      %s233 = smul.addr %s232, 4
      %s234 = scalar_lea.vmem %s1, %s233
      %p235 = pneg %p74
      %p236 = pneg %p71
      %s237 = smul.u32 2, %s20
      %p238 = scmp.lt.s32.totalorder %s237, 1
      %s239 = scalar_select %p238, %s237, 1
      %s240 = scalar_lea.vmem %s2, %s239
      %p241 = pneg %p100
      %p242 = pneg %p97
      %s243 = smul.u32 8, %s19
      %s244 = smul.u32 2, %s20
      %p245 = scmp.lt.s32.totalorder %s243, 15
      %s246 = scalar_select %p245, %s243, 15
      %p247 = scmp.lt.s32.totalorder %s244, 1
      %s248 = scalar_select %p247, %s244, 1
      %s249 = smul.addr %s246, 2
      %s250 = sadd.s32 %s248, %s249
      %s251 = smul.addr %s250, 4
      %s252 = scalar_lea.vmem %s3, %s251
      %p253 = pneg %p128
      %p254 = pneg %p125
      %p255 = pneg %p156
      %p256 = pneg %p153
      %s257 = smul.u32 8, %s19
      %s258 = smul.u32 2, %s20
      %p259 = scmp.lt.s32.totalorder %s257, 15
      %s260 = scalar_select %p259, %s257, 15
      %p261 = scmp.lt.s32.totalorder %s258, 1
      %s262 = scalar_select %p261, %s258, 1
      %s263 = smul.addr %s260, 2
      %s264 = sadd.s32 %s262, %s263
      %s265 = smul.addr %s264, 4
      %s266 = scalar_lea.vmem %s4, %s265
      %s267 = smul.u32 8, %s19
      %p268 = scmp.lt.s32.totalorder %s267, 15
      %s269 = scalar_select %p268, %s267, 15
      %s270 = smul.addr %s269, 4
      %s271 = scalar_lea.vmem %s0, %s270
      %s272 = smul.u32 8, %s19
      %s273 = smul.u32 2, %s20
      %p274 = scmp.lt.s32.totalorder %s273, 1
      %s275 = scalar_select %p274, %s273, 1
      %s276 = smul.addr %s275, 4
      %s277 = scalar_lea.vmem %s1, %s276
      %s278 = smul.u32 2, %s20
      %s279 = smul.u32 2, %s20
      %p280 = scmp.lt.s32.totalorder %s279, 1
      %s281 = scalar_select %p280, %s279, 1
      %s282 = scalar_lea.vmem %s2, %s281
      %s283 = smul.u32 2, %s20
      %s284 = smul.u32 8, %s19
      %s285 = smul.u32 2, %s20
      %p286 = scmp.lt.s32.totalorder %s284, 15
      %s287 = scalar_select %p286, %s284, 15
      %p288 = scmp.lt.s32.totalorder %s285, 1
      %s289 = scalar_select %p288, %s285, 1
      %s290 = smul.addr %s287, 2
      %s291 = sadd.s32 %s289, %s290
      %s292 = smul.addr %s291, 4
      %s293 = scalar_lea.vmem %s3, %s292
      %s294 = smul.u32 8, %s19
      %s295 = smul.u32 2, %s20
      %s296 = smul.u32 8, %s19
      %s297 = smul.u32 2, %s20
      %p298 = scmp.lt.s32.totalorder %s296, 15
      %s299 = scalar_select %p298, %s296, 15
      %p300 = scmp.lt.s32.totalorder %s297, 1
      %s301 = scalar_select %p300, %s297, 1
      %s302 = smul.addr %s299, 2
      %s303 = sadd.s32 %s301, %s302
      %s304 = smul.addr %s303, 4
      %s305 = scalar_lea.vmem %s4, %s304
      %s306 = smul.u32 8, %s19
      %s307 = smul.u32 2, %s20
      %v309 = vld [vmem:[%s271] sm:$0xf]
      %v310 = vld [vmem:[%s271 + $0x4] sm:$0xf]
      %v311 = vld [vmem:[%s271 + $0x8] sm:$0xf]
      %v312 = vld [vmem:[%s271 + $0xc] sm:$0xf]
      %v313 = vld [vmem:[%s271 + $0x10] sm:$0xf]
      %v314 = vld [vmem:[%s271 + $0x14] sm:$0xf]
      %v315 = vld [vmem:[%s271 + $0x18] sm:$0xf]
      %v316 = vld [vmem:[%s271 + $0x1c] sm:$0xf]
      %v317 = vld [vmem:[%s277] sm:$0xff]
      %v318 = vld [vmem:[%s277 + $0x8] sm:$0xff]
      %v319 = vld [vmem:[%s277 + $0x10] sm:$0xff]
      %v320 = vld [vmem:[%s277 + $0x18] sm:$0xff]
      %v321 = vld [vmem:[%s277 + $0x20] sm:$0xff]
      %v322 = vld [vmem:[%s277 + $0x28] sm:$0xff]
      %v323 = vld [vmem:[%s277 + $0x30] sm:$0xff]
      %v324 = vld [vmem:[%s277 + $0x38] sm:$0xff]
      %v325 = vld [vmem:[%s277 + $0x40] sm:$0xff]
      %v326 = vld [vmem:[%s277 + $0x48] sm:$0xff]
      %v327 = vld [vmem:[%s277 + $0x50] sm:$0xff]
      %v328 = vld [vmem:[%s277 + $0x58] sm:$0xff]
      %v329 = vld [vmem:[%s277 + $0x60] sm:$0xff]
      %v330 = vld [vmem:[%s277 + $0x68] sm:$0xff]
      %v331 = vld [vmem:[%s277 + $0x70] sm:$0xff]
      %v332 = vld [vmem:[%s277 + $0x78] sm:$0xff]
      %v333 = vld [vmem:[%s282] sm:$0x3]
      %v335 = vlaneseq
      %v336 = vshrl.u32 %v335, 7
      %v337 = vsub.s32 0, %v336
      %v338 = vrot.slane %v333, %v337
      %v339 = vlaneseq
      %v340 = vshrl.u32 %v339, 7
      %v341 = vsub.s32 1, %v340
      %v342 = vrot.slane %v333, %v341
      %v353 = vunpack.c.l.b16 %v309
      %v354 = vunpack.c.l.b16 %v310
      %v355 = vunpack.c.l.b16 %v311
      %v356 = vunpack.c.l.b16 %v312
      %v357 = vunpack.c.l.b16 %v313
      %v358 = vunpack.c.l.b16 %v314
      %v359 = vunpack.c.l.b16 %v315
      %v360 = vunpack.c.l.b16 %v316
      %v361 = vpack.c.b16 %v354, %v353
      %v362 = vpack.c.b16 %v356, %v355
      %v363 = vpack.c.b16 %v358, %v357
      %v364 = vpack.c.b16 %v360, %v359
      %v385 = vunpack.c.l.b16 %v317
      %v386 = vunpack.c.h.b16 %v317
      %v387 = vunpack.c.l.b16 %v318
      %v388 = vunpack.c.h.b16 %v318
      %v389 = vunpack.c.l.b16 %v319
      %v390 = vunpack.c.h.b16 %v319
      %v391 = vunpack.c.l.b16 %v320
      %v392 = vunpack.c.h.b16 %v320
      %v393 = vunpack.c.l.b16 %v321
      %v394 = vunpack.c.h.b16 %v321
      %v395 = vunpack.c.l.b16 %v322
      %v396 = vunpack.c.h.b16 %v322
      %v397 = vunpack.c.l.b16 %v323
      %v398 = vunpack.c.h.b16 %v323
      %v399 = vunpack.c.l.b16 %v324
      %v400 = vunpack.c.h.b16 %v324
      %v401 = vunpack.c.l.b16 %v325
      %v402 = vunpack.c.h.b16 %v325
      %v403 = vunpack.c.l.b16 %v326
      %v404 = vunpack.c.h.b16 %v326
      %v405 = vunpack.c.l.b16 %v327
      %v406 = vunpack.c.h.b16 %v327
      %v407 = vunpack.c.l.b16 %v328
      %v408 = vunpack.c.h.b16 %v328
      %v409 = vunpack.c.l.b16 %v329
      %v410 = vunpack.c.h.b16 %v329
      %v411 = vunpack.c.l.b16 %v330
      %v412 = vunpack.c.h.b16 %v330
      %v413 = vunpack.c.l.b16 %v331
      %v414 = vunpack.c.h.b16 %v331
      %v415 = vunpack.c.l.b16 %v332
      %v416 = vunpack.c.h.b16 %v332
      %v417 = vpack.c.b16 %v387, %v385
      %v418 = vpack.c.b16 %v388, %v386
      %v419 = vpack.c.b16 %v391, %v389
      %v420 = vpack.c.b16 %v392, %v390
      %v421 = vpack.c.b16 %v395, %v393
      %v422 = vpack.c.b16 %v396, %v394
      %v423 = vpack.c.b16 %v399, %v397
      %v424 = vpack.c.b16 %v400, %v398
      %v425 = vpack.c.b16 %v403, %v401
      %v426 = vpack.c.b16 %v404, %v402
      %v427 = vpack.c.b16 %v407, %v405
      %v428 = vpack.c.b16 %v408, %v406
      %v429 = vpack.c.b16 %v411, %v409
      %v430 = vpack.c.b16 %v412, %v410
      %v431 = vpack.c.b16 %v415, %v413
      %v432 = vpack.c.b16 %v416, %v414
      %449 = vmatprep.subr.bf16.mxu0 %v418
      %450 = vmatpush1.bf16.msra.mxu0 %v417
      %451 = vmatprep.subr.bf16.mxu0 %v420
      %452 = vmatpush1.bf16.msra.mxu0 %v419
      %453 = vmatprep.subr.bf16.mxu0 %v422
      %454 = vmatpush1.bf16.msra.mxu0 %v421
      %455 = vmatprep.subr.bf16.mxu0 %v424
      %456 = vmatpush1.bf16.msra.mxu0 %v423
      %457 = vmatprep.subr.bf16.mxu0 %v426
      %458 = vmatpush1.bf16.msra.mxu0 %v425
      %459 = vmatprep.subr.bf16.mxu0 %v428
      %460 = vmatpush1.bf16.msra.mxu0 %v427
      %461 = vmatprep.subr.bf16.mxu0 %v430
      %462 = vmatpush1.bf16.msra.mxu0 %v429
      %463 = vmatprep.subr.bf16.mxu0 %v432
      %464 = vmatpush1.bf16.msra.mxu0 %v431
      %465 = vmatprep.subr.bf16.mxu0 0
      %466 = vmatpush1.bf16.msra.mxu0 0
      %467 = vmatprep.subr.bf16.mxu0 0
      %468 = vmatpush1.bf16.msra.mxu0 0
      %469 = vmatprep.subr.bf16.mxu0 0
      %470 = vmatpush1.bf16.msra.mxu0 0
      %471 = vmatprep.subr.bf16.mxu0 0
      %472 = vmatpush1.bf16.msra.mxu0 0
      %473 = vmatprep.subr.bf16.mxu0 0
      %474 = vmatpush1.bf16.msra.mxu0 0
      %475 = vmatprep.subr.bf16.mxu0 0
      %476 = vmatpush1.bf16.msra.mxu0 0
      %477 = vmatprep.subr.bf16.mxu0 0
      %478 = vmatpush1.bf16.msra.mxu0 0
      %479 = vmatprep.subr.bf16.mxu0 0
      %480 = vmatpush1.bf16.msra.mxu0 0
      %481 = vmatprep.mubr.bf16.mxu0 0
      %482 = vmatmul.mubr.bf16.gmra.mrb[0].mxu0 %v361
      %v483 = vpop.f32.mrb[0].mxu0
      %v484 = vadd.f32 %v338, %v483
      %v485 = vpop.f32.mrb[0].mxu0
      %v486 = vadd.f32 %v342, %v485
      %v487 = vpop.f32.mrb[0].mxu0
      %v488 = vadd.f32 %v338, %v487
      %v489 = vpop.f32.mrb[0].mxu0
      %v490 = vadd.f32 %v342, %v489
      %491 = vmatprep.mubr.bf16.mxu0 0
      %492 = vmatmul.mubr.bf16.gmra.mrb[0].mxu0 %v362
      %v493 = vpop.f32.mrb[0].mxu0
      %v494 = vadd.f32 %v338, %v493
      %v495 = vpop.f32.mrb[0].mxu0
      %v496 = vadd.f32 %v342, %v495
      %v497 = vpop.f32.mrb[0].mxu0
      %v498 = vadd.f32 %v338, %v497
      %v499 = vpop.f32.mrb[0].mxu0
      %v500 = vadd.f32 %v342, %v499
      %501 = vmatprep.mubr.bf16.mxu0 0
      %502 = vmatmul.mubr.bf16.gmra.mrb[0].mxu0 %v363
      %v503 = vpop.f32.mrb[0].mxu0
      %v504 = vadd.f32 %v338, %v503
      %v505 = vpop.f32.mrb[0].mxu0
      %v506 = vadd.f32 %v342, %v505
      %v507 = vpop.f32.mrb[0].mxu0
      %v508 = vadd.f32 %v338, %v507
      %v509 = vpop.f32.mrb[0].mxu0
      %v510 = vadd.f32 %v342, %v509
      %511 = vmatprep.mubr.bf16.mxu0 0
      %512 = vmatmul.mubr.bf16.gmra.mrb[0].mxu0 %v364
      %v513 = vpop.f32.mrb[0].mxu0
      %v514 = vadd.f32 %v338, %v513
      %v515 = vpop.f32.mrb[0].mxu0
      %v516 = vadd.f32 %v342, %v515
      %v517 = vpop.f32.mrb[0].mxu0
      %v518 = vadd.f32 %v338, %v517
      %v519 = vpop.f32.mrb[0].mxu0
      %v520 = vadd.f32 %v342, %v519
      %521 = vdwg.mxu0
      %v522 = vmax.f32 %v484, 0.0
      %v523 = vmax.f32 %v486, 0.0
      %v524 = vmax.f32 %v488, 0.0
      %v525 = vmax.f32 %v490, 0.0
      %v526 = vmax.f32 %v494, 0.0
      %v527 = vmax.f32 %v496, 0.0
      %v528 = vmax.f32 %v498, 0.0
      %v529 = vmax.f32 %v500, 0.0
      %v530 = vmax.f32 %v504, 0.0
      %v531 = vmax.f32 %v506, 0.0
      %v532 = vmax.f32 %v508, 0.0
      %v533 = vmax.f32 %v510, 0.0
      %v534 = vmax.f32 %v514, 0.0
      %v535 = vmax.f32 %v516, 0.0
      %v536 = vmax.f32 %v518, 0.0
      %v537 = vmax.f32 %v520, 0.0
      %v538 = vld [vmem:[%s293] sm:$0xff]
      %v539 = vld [vmem:[%s293 + $0x8] sm:$0xff]
      %v540 = vld [vmem:[%s293 + $0x10] sm:$0xff]
      %v541 = vld [vmem:[%s293 + $0x18] sm:$0xff]
      %v542 = vld [vmem:[%s293 + $0x20] sm:$0xff]
      %v543 = vld [vmem:[%s293 + $0x28] sm:$0xff]
      %v544 = vld [vmem:[%s293 + $0x30] sm:$0xff]
      %v545 = vld [vmem:[%s293 + $0x38] sm:$0xff]
      %v546 = vunpack.c.l.bf16 %v538
      %v547 = vunpack.c.h.bf16 %v538
      %v548 = vunpack.c.l.bf16 %v539
      %v549 = vunpack.c.h.bf16 %v539
      %v550 = vunpack.c.l.bf16 %v540
      %v551 = vunpack.c.h.bf16 %v540
      %v552 = vunpack.c.l.bf16 %v541
      %v553 = vunpack.c.h.bf16 %v541
      %v554 = vunpack.c.l.bf16 %v542
      %v555 = vunpack.c.h.bf16 %v542
      %v556 = vunpack.c.l.bf16 %v543
      %v557 = vunpack.c.h.bf16 %v543
      %v558 = vunpack.c.l.bf16 %v544
      %v559 = vunpack.c.h.bf16 %v544
      %v560 = vunpack.c.l.bf16 %v545
      %v561 = vunpack.c.h.bf16 %v545
      %v562 = vadd.f32 %v522, %v546
      %v563 = vadd.f32 %v523, %v547
      %v564 = vadd.f32 %v524, %v548
      %v565 = vadd.f32 %v525, %v549
      %v566 = vadd.f32 %v526, %v550
      %v567 = vadd.f32 %v527, %v551
      %v568 = vadd.f32 %v528, %v552
      %v569 = vadd.f32 %v529, %v553
      %v570 = vadd.f32 %v530, %v554
      %v571 = vadd.f32 %v531, %v555
      %v572 = vadd.f32 %v532, %v556
      %v573 = vadd.f32 %v533, %v557
      %v574 = vadd.f32 %v534, %v558
      %v575 = vadd.f32 %v535, %v559
      %v576 = vadd.f32 %v536, %v560
      %v577 = vadd.f32 %v537, %v561
      %v578 = vmax.f32 %v562, 0.0
      %v579 = vmax.f32 %v563, 0.0
      %v580 = vmax.f32 %v564, 0.0
      %v581 = vmax.f32 %v565, 0.0
      %v582 = vmax.f32 %v566, 0.0
      %v583 = vmax.f32 %v567, 0.0
      %v584 = vmax.f32 %v568, 0.0
      %v585 = vmax.f32 %v569, 0.0
      %v586 = vmax.f32 %v570, 0.0
      %v587 = vmax.f32 %v571, 0.0
      %v588 = vmax.f32 %v572, 0.0
      %v589 = vmax.f32 %v573, 0.0
      %v590 = vmax.f32 %v574, 0.0
      %v591 = vmax.f32 %v575, 0.0
      %v592 = vmax.f32 %v576, 0.0
      %v593 = vmax.f32 %v577, 0.0
      %v594 = vpack.c.bf16 %v580, %v578
      %v595 = vpack.c.bf16 %v581, %v579
      %v596 = vpack.c.bf16 %v584, %v582
      %v597 = vpack.c.bf16 %v585, %v583
      %v598 = vpack.c.bf16 %v588, %v586
      %v599 = vpack.c.bf16 %v589, %v587
      %v600 = vpack.c.bf16 %v592, %v590
      %v601 = vpack.c.bf16 %v593, %v591
      %v610 = vunpack.c.l.b16 %v594
      %v611 = vunpack.c.l.b16 %v595
      %v612 = vunpack.c.h.b16 %v594
      %v613 = vunpack.c.h.b16 %v595
      %v614 = vunpack.c.l.b16 %v596
      %v615 = vunpack.c.l.b16 %v597
      %v616 = vunpack.c.h.b16 %v596
      %v617 = vunpack.c.h.b16 %v597
      %v618 = vunpack.c.l.b16 %v598
      %v619 = vunpack.c.l.b16 %v599
      %v620 = vunpack.c.h.b16 %v598
      %v621 = vunpack.c.h.b16 %v599
      %v622 = vunpack.c.l.b16 %v600
      %v623 = vunpack.c.l.b16 %v601
      %v624 = vunpack.c.h.b16 %v600
      %v625 = vunpack.c.h.b16 %v601
      %v626 = vpack.c.b16 %v611, %v610
      %v627 = vpack.c.b16 %v613, %v612
      %v628 = vpack.c.b16 %v615, %v614
      %v629 = vpack.c.b16 %v617, %v616
      %v630 = vpack.c.b16 %v619, %v618
      %v631 = vpack.c.b16 %v621, %v620
      %v632 = vpack.c.b16 %v623, %v622
      %v633 = vpack.c.b16 %v625, %v624
      %642 = vst [vmem:[%s305] sm:$0xff] %v626
      %643 = vst [vmem:[%s305 + $0x8] sm:$0xff] %v627
      %644 = vst [vmem:[%s305 + $0x10] sm:$0xff] %v628
      %645 = vst [vmem:[%s305 + $0x18] sm:$0xff] %v629
      %646 = vst [vmem:[%s305 + $0x20] sm:$0xff] %v630
      %647 = vst [vmem:[%s305 + $0x28] sm:$0xff] %v631
      %648 = vst [vmem:[%s305 + $0x30] sm:$0xff] %v632
      %649 = vst [vmem:[%s305 + $0x38] sm:$0xff] %v633
      %s650 = smul.u32 8, %s19
      %s651 = smul.u32 2, %s20
      %p652 = scmp.lt.s32.totalorder %s650, 15
      %s653 = scalar_select %p652, %s650, 15
      %p654 = scmp.lt.s32.totalorder %s651, 1
      %s655 = scalar_select %p654, %s651, 1
      %s656 = smul.addr %s653, 2
      %s657 = sadd.s32 %s655, %s656
      %s658 = smul.addr %s657, 4
      %s659 = scalar_lea.vmem %s4, %s658
      // Predicated region
      $region37: #{conv_block_forward.7} parent=35 // pred_check
        %p660 = pneg %p153
      $region38: #{conv_block_forward.7} parent=35 // pred_check_branch
        %662 = sbr.rel (%p660) target = $region40
      $region39: #{conv_block_forward.7} parent=35 // pred_region
        %s663 = smul.u32 8, %s19
        %s664 = smul.u32 2, %s20
      $region40: #{conv_block_forward.7} parent=35 // pred_fallthru
        _
    $region36: #{conv_block_forward.7} parent=5 // pred_fallthru
      _
    %p665 = scmp.le.s32.totalorder 2, %s10
    // Predicated region
    $region41: #{conv_block_forward.7} parent=5 // pred_check
      %p666 = pneg %p665
    $region42: #{conv_block_forward.7} parent=5 // pred_check_branch
      %668 = sbr.rel (%p666) target = $region44
    $region43: #{conv_block_forward.7} parent=5 // pred_region
      %s669 = ssub.s32 %s10, 2
      // Predicated region
      $region45: #{conv_block_forward.7} parent=43 // pred_check
        %p670 = pneg %p159
      $region46: #{conv_block_forward.7} parent=43 // pred_check_branch
        %672 = sbr.rel (%p670) target = $region48
      $region47: #{conv_block_forward.7} parent=43 // pred_region
        %s673 = smul.u32 8, %s21
        %s674 = smul.u32 2, %s22
        %p675 = scmp.lt.s32.totalorder %s673, 15
        %s676 = scalar_select %p675, %s673, 15
        %p677 = scmp.lt.s32.totalorder %s674, 1
        %s678 = scalar_select %p677, %s674, 1
        %s679 = smul.addr %s676, 2
        %s680 = sadd.s32 %s678, %s679
        %s681 = smul.addr %s680, 4
        %s682 = scalar_lea.vmem %s4, %s681
      $region48: #{conv_block_forward.7} parent=43 // pred_fallthru
        _
    $region44: #{conv_block_forward.7} parent=5 // pred_fallthru
      _
  $region6: #{conv_block_forward.7} parent=0 // loop_footer
    %s14 = sadd.s32 1, %s10
  $region7: #{conv_block_forward.7} parent=0 // loop_footer_branch
    %9 = sbr.rel target = $region3
  $region8: #{conv_block_forward.7} parent=0 // loop_exit
    _

// kernel: conv_block_forward.5
$region0: #{conv_block_forward.5}
  #allocation0 [shape = 'u32[]', space=smem, size = 0x4, offset = 0x4, fixed_abs, tag = 'smem constant byte address 0x4 - core index']
  #allocation1 [shape = 'u32[144,128]{1,0:T(1,128)}', space=vmem, size = 0x12000, scoped, tag = 'internal scratch']
  %s0 = inlined_call_operand.vmem [shape: bf16[8,9,9,128], index: 0, kind: input, shape index: {}]
  %s1 = inlined_call_operand.vmem [shape: bf16[9,128,128], index: 1, kind: input, shape index: {}]
  %s2 = inlined_call_operand.vmem [shape: f32[1,128], index: 2, kind: input, shape index: {}]
  %s3 = inlined_call_operand.vmem [shape: bf16[2,64,128], index: 3, kind: output, shape index: {}]
  %s4 = sld [smem:[#allocation0]]
  $region45: #{conv_block_forward.5} parent=0
    _
  %s6 = ssub.s32 1, %s4
  %s7 = scalar_select 0, %s6, %s4
  loop: start=0, step=1, limit=4
  $region2: #{conv_block_forward.5} parent=0 // loop_pre_header
    _
  $region3: #{conv_block_forward.5} parent=0 // loop_header
    %s9 = sphi 0, %s13
    %p10 = scmp.ge.s32.totalorder %s9, 4
    %s16 = sphi 0, %s28
    %s17 = sphi 0, %s24
    %s18 = sphi 0, %s16
    %s19 = sphi 0, %s17
    %s20 = sphi 0, %s18
    %s21 = sphi 0, %s19
    %s31 = sphi 0, %s33
    %s34 = sphi 0, %s31
    %s35 = sphi 0, %s34
    %s51 = sphi 0, %s35
    %s57 = sphi 0, %s59
    %s60 = sphi 0, %s57
    %s61 = sphi 0, %s60
    %s77 = sphi 0, %s61
    %s83 = sphi 0, %s85
    %s86 = sphi 0, %s83
    %s87 = sphi 0, %s86
    %s103 = sphi 0, %s87
    %s111 = sphi 0, %s113
    %s114 = sphi 0, %s111
    %s115 = sphi 0, %s114
    %s131 = sphi 0, %s115
  $region4: #{conv_block_forward.5} parent=0 // loop_header_branch
    %12 = sbr.rel (%p10) target = $region8
  $region5: #{conv_block_forward.5} parent=0 // loop_body
    %s14 = ssub.s32 %s9, 1
    %s15 = ssub.s32 %s9, 2
    %s22 = sadd.s32 1, %s17
    %p23 = scmp.ge.s32.totalorder %s22, 1
    %s24 = scalar_select %p23, 0, %s22
    %s25 = sadd.s32 1, %s16
    %s26 = scalar_select %p23, %s25, %s16
    %p27 = scmp.ge.s32.totalorder %s26, 2
    %s28 = scalar_select %p27, 0, %s26
    %s29 = ssub.s32 %s16, %s28
    %p30 = scmp.eq.s32.totalorder %s29, 0
    %s32 = sadd.s32 %s31, 1
    %s33 = scalar_select %p30, %s31, %s32
    %p36 = pneg %p30
    %p37 = scmp.eq.s32.totalorder %s9, 1
    %p38 = por %p36, %p37
    %p39 = scmp.ne.s32.totalorder %s31, %s34
    %p40 = scmp.eq.s32.totalorder %s9, 0
    %p41 = por %p39, %p40
    %p42 = scmp.ne.s32.totalorder %s31, %s34
    %p43 = scmp.eq.s32.totalorder %s14, 1
    %p44 = por %p42, %p43
    %p45 = scmp.ne.s32.totalorder %s34, %s35
    %p46 = scmp.eq.s32.totalorder %s14, 0
    %p47 = por %p45, %p46
    %p48 = scmp.ne.s32.totalorder %s34, %s35
    %p49 = scmp.eq.s32.totalorder %s15, 1
    %p50 = por %p48, %p49
    %p52 = scmp.ne.s32.totalorder %s35, %s51
    %p53 = scmp.eq.s32.totalorder %s15, 0
    %p54 = por %p52, %p53
    %s55 = ssub.s32 %s17, %s24
    %p56 = scmp.eq.s32.totalorder %s55, 0
    %s58 = sadd.s32 %s57, 1
    %s59 = scalar_select %p56, %s57, %s58
    %p62 = pneg %p56
    %p63 = scmp.eq.s32.totalorder %s9, 1
    %p64 = por %p62, %p63
    %p65 = scmp.ne.s32.totalorder %s57, %s60
    %p66 = scmp.eq.s32.totalorder %s9, 0
    %p67 = por %p65, %p66
    %p68 = scmp.ne.s32.totalorder %s57, %s60
    %p69 = scmp.eq.s32.totalorder %s14, 1
    %p70 = por %p68, %p69
    %p71 = scmp.ne.s32.totalorder %s60, %s61
    %p72 = scmp.eq.s32.totalorder %s14, 0
    %p73 = por %p71, %p72
    %p74 = scmp.ne.s32.totalorder %s60, %s61
    %p75 = scmp.eq.s32.totalorder %s15, 1
    %p76 = por %p74, %p75
    %p78 = scmp.ne.s32.totalorder %s61, %s77
    %p79 = scmp.eq.s32.totalorder %s15, 0
    %p80 = por %p78, %p79
    %s81 = ssub.s32 %s17, %s24
    %p82 = scmp.eq.s32.totalorder %s81, 0
    %s84 = sadd.s32 %s83, 1
    %s85 = scalar_select %p82, %s83, %s84
    %p88 = pneg %p82
    %p89 = scmp.eq.s32.totalorder %s9, 1
    %p90 = por %p88, %p89
    %p91 = scmp.ne.s32.totalorder %s83, %s86
    %p92 = scmp.eq.s32.totalorder %s9, 0
    %p93 = por %p91, %p92
    %p94 = scmp.ne.s32.totalorder %s83, %s86
    %p95 = scmp.eq.s32.totalorder %s14, 1
    %p96 = por %p94, %p95
    %p97 = scmp.ne.s32.totalorder %s86, %s87
    %p98 = scmp.eq.s32.totalorder %s14, 0
    %p99 = por %p97, %p98
    %p100 = scmp.ne.s32.totalorder %s86, %s87
    %p101 = scmp.eq.s32.totalorder %s15, 1
    %p102 = por %p100, %p101
    %p104 = scmp.ne.s32.totalorder %s87, %s103
    %p105 = scmp.eq.s32.totalorder %s15, 0
    %p106 = por %p104, %p105
    %s107 = ssub.s32 %s16, %s28
    %s108 = ssub.s32 %s17, %s24
    %s109 = sor.u32 %s107, %s108
    %p110 = scmp.eq.s32.totalorder %s109, 0
    %s112 = sadd.s32 %s111, 1
    %s113 = scalar_select %p110, %s111, %s112
    %p116 = pneg %p110
    %p117 = scmp.eq.s32.totalorder %s9, 1
    %p118 = por %p116, %p117
    %p119 = scmp.ne.s32.totalorder %s111, %s114
    %p120 = scmp.eq.s32.totalorder %s9, 0
    %p121 = por %p119, %p120
    %p122 = scmp.ne.s32.totalorder %s111, %s114
    %p123 = scmp.eq.s32.totalorder %s14, 1
    %p124 = por %p122, %p123
    %p125 = scmp.ne.s32.totalorder %s114, %s115
    %p126 = scmp.eq.s32.totalorder %s14, 0
    %p127 = por %p125, %p126
    %p128 = scmp.ne.s32.totalorder %s114, %s115
    %p129 = scmp.eq.s32.totalorder %s15, 1
    %p130 = por %p128, %p129
    %p132 = scmp.ne.s32.totalorder %s115, %s131
    %p133 = scmp.eq.s32.totalorder %s15, 0
    %p134 = por %p132, %p133
    %p135 = scmp.le.s32.totalorder 1, %s9
    %p136 = scmp.lt.s32.totalorder %s9, 3
    %p137 = pnand %p135, %p136
    %p138 = pneg %p137
    // Predicated region
    $region9: #{conv_block_forward.5} parent=5 // pred_check
      _
    $region10: #{conv_block_forward.5} parent=5 // pred_check_branch
      %140 = sbr.rel (%p137) target = $region12
    $region11: #{conv_block_forward.5} parent=5 // pred_region
      %s141 = ssub.s32 %s9, 1
      // Predicated region
      $region13: #{conv_block_forward.5} parent=11 // pred_check
        %p142 = pneg %p73
      $region14: #{conv_block_forward.5} parent=11 // pred_check_branch
        %144 = sbr.rel (%p142) target = $region16
      $region15: #{conv_block_forward.5} parent=11 // pred_region
        %p145 = scmp.lt.s32.totalorder %s19, 0
        %s146 = scalar_select %p145, %s19, 0
        %s147 = smul.addr %s146, 4
        %s148 = scalar_lea.vmem %s1, %s147
      $region16: #{conv_block_forward.5} parent=11 // pred_fallthru
        _
      // Predicated region
      $region17: #{conv_block_forward.5} parent=11 // pred_check
        %p149 = pneg %p99
      $region18: #{conv_block_forward.5} parent=11 // pred_check_branch
        %151 = sbr.rel (%p149) target = $region20
      $region19: #{conv_block_forward.5} parent=11 // pred_region
        %p152 = scmp.lt.s32.totalorder %s19, 0
        %s153 = scalar_select %p152, %s19, 0
        %s154 = scalar_lea.vmem %s2, %s153
      $region20: #{conv_block_forward.5} parent=11 // pred_fallthru
        _
    $region12: #{conv_block_forward.5} parent=5 // pred_fallthru
      _
    %p155 = scmp.lt.s32.totalorder %s9, 2
    // Predicated region
    $region21: #{conv_block_forward.5} parent=5 // pred_check
      %p156 = pneg %p155
    $region22: #{conv_block_forward.5} parent=5 // pred_check_branch
      %158 = sbr.rel (%p156) target = $region24
    $region23: #{conv_block_forward.5} parent=5 // pred_region
      // Predicated region
      $region25: #{conv_block_forward.5} parent=23 // pred_check
        %p159 = pneg %p41
      $region26: #{conv_block_forward.5} parent=23 // pred_check_branch
        %161 = sbr.rel (%p159) target = $region28
      $region27: #{conv_block_forward.5} parent=23 // pred_region
        %s162 = smul.u32 4, %s16
        %p163 = scmp.lt.s32.totalorder %s162, 7
        %s164 = scalar_select %p163, %s162, 7
        %s165 = smul.addr %s164, 18
        %s166 = smul.addr %s165, 4
        %s167 = scalar_lea.vmem %s0, %s166
        %s168 = smul.u32 4, %s16
      $region28: #{conv_block_forward.5} parent=23 // pred_fallthru
        _
    $region24: #{conv_block_forward.5} parent=5 // pred_fallthru
      _
    %p169 = scmp.le.s32.totalorder 1, %s9
    %p170 = scmp.lt.s32.totalorder %s9, 3
    %p171 = pnand %p169, %p170
    %p172 = pneg %p171
    // Predicated region
    $region29: #{conv_block_forward.5} parent=5 // pred_check
      _
    $region30: #{conv_block_forward.5} parent=5 // pred_check_branch
      %174 = sbr.rel (%p171) target = $region32
    $region31: #{conv_block_forward.5} parent=5 // pred_region
      %s175 = ssub.s32 %s9, 1
      %s176 = smul.u32 4, %s18
      %p177 = scmp.lt.s32.totalorder %s176, 7
      %s178 = scalar_select %p177, %s176, 7
      %s179 = smul.addr %s178, 18
      %s180 = smul.addr %s179, 4
      %s181 = scalar_lea.vmem %s0, %s180
      %p182 = pneg %p47
      %p183 = pneg %p44
      %p184 = scmp.lt.s32.totalorder %s19, 0
      %s185 = scalar_select %p184, %s19, 0
      %s186 = smul.addr %s185, 4
      %s187 = scalar_lea.vmem %s1, %s186
      %p188 = pneg %p73
      %p189 = pneg %p70
      %p190 = scmp.lt.s32.totalorder %s19, 0
      %s191 = scalar_select %p190, %s19, 0
      %s192 = scalar_lea.vmem %s2, %s191
      %p193 = pneg %p99
      %p194 = pneg %p96
      %p195 = pneg %p127
      %p196 = pneg %p124
      %p197 = scmp.lt.s32.totalorder %s18, 1
      %s198 = scalar_select %p197, %s18, 1
      %p199 = scmp.lt.s32.totalorder %s19, 0
      %s200 = scalar_select %p199, %s19, 0
      %s201 = smul.addr %s198, 8
      %s202 = sadd.s32 %s200, %s201
      %s203 = smul.addr %s202, 4
      %s204 = scalar_lea.vmem %s3, %s203
      %s205 = smul.u32 4, %s18
      %p206 = scmp.lt.s32.totalorder %s205, 7
      %s207 = scalar_select %p206, %s205, 7
      %s208 = smul.addr %s207, 18
      %s209 = smul.addr %s208, 4
      %s210 = scalar_lea.vmem %s0, %s209
      %s211 = smul.u32 4, %s18
      %p212 = scmp.lt.s32.totalorder %s19, 0
      %s213 = scalar_select %p212, %s19, 0
      %s214 = smul.addr %s213, 4
      %s215 = scalar_lea.vmem %s1, %s214
      %p216 = scmp.lt.s32.totalorder %s19, 0
      %s217 = scalar_select %p216, %s19, 0
      %s218 = scalar_lea.vmem %s2, %s217
      %p219 = scmp.lt.s32.totalorder %s18, 1
      %s220 = scalar_select %p219, %s18, 1
      %p221 = scmp.lt.s32.totalorder %s19, 0
      %s222 = scalar_select %p221, %s19, 0
      %s223 = smul.addr %s220, 8
      %s224 = sadd.s32 %s222, %s223
      %s225 = smul.addr %s224, 4
      %s226 = scalar_lea.vmem %s3, %s225
      %v228 = vld [vmem:[%s210] sm:$0xf]
      %v229 = vld [vmem:[%s210 + $0x8] sm:$0xf]
      %v230 = vld [vmem:[%s210 + $0x10] sm:$0xf]
      %v231 = vld [vmem:[%s210 + $0x18] sm:$0xf]
      %v232 = vld [vmem:[%s210 + $0x20] sm:$0xf]
      %v233 = vld [vmem:[%s210 + $0x28] sm:$0xf]
      %v234 = vld [vmem:[%s210 + $0x30] sm:$0xf]
      %v235 = vld [vmem:[%s210 + $0x38] sm:$0xf]
      %v236 = vld [vmem:[%s215] sm:$0xf]
      %v237 = vld [vmem:[%s215 + $0x4] sm:$0xf]
      %v238 = vld [vmem:[%s215 + $0x8] sm:$0xf]
      %v239 = vld [vmem:[%s215 + $0xc] sm:$0xf]
      %v240 = vld [vmem:[%s215 + $0x10] sm:$0xf]
      %v241 = vld [vmem:[%s215 + $0x14] sm:$0xf]
      %v242 = vld [vmem:[%s215 + $0x18] sm:$0xf]
      %v243 = vld [vmem:[%s215 + $0x1c] sm:$0xf]
      %v244 = vld [vmem:[%s215 + $0x20] sm:$0xf]
      %v245 = vld [vmem:[%s215 + $0x24] sm:$0xf]
      %v246 = vld [vmem:[%s215 + $0x28] sm:$0xf]
      %v247 = vld [vmem:[%s215 + $0x2c] sm:$0xf]
      %v248 = vld [vmem:[%s215 + $0x30] sm:$0xf]
      %v249 = vld [vmem:[%s215 + $0x34] sm:$0xf]
      %v250 = vld [vmem:[%s215 + $0x38] sm:$0xf]
      %v251 = vld [vmem:[%s215 + $0x3c] sm:$0xf]
      %s252 = scalar_lea.vmem %s210, 72
      %v253 = vld [vmem:[%s252] sm:$0xf]
      %v254 = vld [vmem:[%s252 + $0x8] sm:$0xf]
      %v255 = vld [vmem:[%s252 + $0x10] sm:$0xf]
      %v256 = vld [vmem:[%s252 + $0x18] sm:$0xf]
      %v257 = vld [vmem:[%s252 + $0x20] sm:$0xf]
      %v258 = vld [vmem:[%s252 + $0x28] sm:$0xf]
      %v259 = vld [vmem:[%s252 + $0x30] sm:$0xf]
      %v260 = vld [vmem:[%s252 + $0x38] sm:$0xf]
      %s261 = scalar_lea.vmem %s215, 64
      %v262 = vld [vmem:[%s261] sm:$0xf]
      %v263 = vld [vmem:[%s261 + $0x4] sm:$0xf]
      %v264 = vld [vmem:[%s261 + $0x8] sm:$0xf]
      %v265 = vld [vmem:[%s261 + $0xc] sm:$0xf]
      %v266 = vld [vmem:[%s261 + $0x10] sm:$0xf]
      %v267 = vld [vmem:[%s261 + $0x14] sm:$0xf]
      %v268 = vld [vmem:[%s261 + $0x18] sm:$0xf]
      %v269 = vld [vmem:[%s261 + $0x1c] sm:$0xf]
      %v270 = vld [vmem:[%s261 + $0x20] sm:$0xf]
      %v271 = vld [vmem:[%s261 + $0x24] sm:$0xf]
      %v272 = vld [vmem:[%s261 + $0x28] sm:$0xf]
      %v273 = vld [vmem:[%s261 + $0x2c] sm:$0xf]
      %v274 = vld [vmem:[%s261 + $0x30] sm:$0xf]
      %v275 = vld [vmem:[%s261 + $0x34] sm:$0xf]
      %v276 = vld [vmem:[%s261 + $0x38] sm:$0xf]
      %v277 = vld [vmem:[%s261 + $0x3c] sm:$0xf]
      %v286 = vunpack.c.l.b16 %v253
      %v287 = vunpack.c.l.b16 %v254
      %v288 = vunpack.c.l.b16 %v255
      %v289 = vunpack.c.l.b16 %v256
      %v290 = vunpack.c.l.b16 %v257
      %v291 = vunpack.c.l.b16 %v258
      %v292 = vunpack.c.l.b16 %v259
      %v293 = vunpack.c.l.b16 %v260
      %v294 = vpack.c.b16 %v287, %v286
      %v295 = vpack.c.b16 %v289, %v288
      %v296 = vpack.c.b16 %v291, %v290
      %v297 = vpack.c.b16 %v293, %v292
      %v318 = vunpack.c.l.b16 %v262
      %v319 = vunpack.c.l.b16 %v263
      %v320 = vunpack.c.l.b16 %v264
      %v321 = vunpack.c.l.b16 %v265
      %v322 = vunpack.c.l.b16 %v266
      %v323 = vunpack.c.l.b16 %v267
      %v324 = vunpack.c.l.b16 %v268
      %v325 = vunpack.c.l.b16 %v269
      %v326 = vunpack.c.l.b16 %v270
      %v327 = vunpack.c.l.b16 %v271
      %v328 = vunpack.c.l.b16 %v272
      %v329 = vunpack.c.l.b16 %v273
      %v330 = vunpack.c.l.b16 %v274
      %v331 = vunpack.c.l.b16 %v275
      %v332 = vunpack.c.l.b16 %v276
      %v333 = vunpack.c.l.b16 %v277
      %v334 = vpack.c.b16 %v319, %v318
      %v335 = vpack.c.b16 %v321, %v320
      %v336 = vpack.c.b16 %v323, %v322
      %v337 = vpack.c.b16 %v325, %v324
      %v338 = vpack.c.b16 %v327, %v326
      %v339 = vpack.c.b16 %v329, %v328
      %v340 = vpack.c.b16 %v331, %v330
      %v341 = vpack.c.b16 %v333, %v332
      %350 = vmatprep.subr.bf16.mxu0 0
      %351 = vmatpush1.bf16.msra.mxu0 %v334
      %352 = vmatprep.subr.bf16.mxu0 0
      %353 = vmatpush1.bf16.msra.mxu0 %v335
      %354 = vmatprep.subr.bf16.mxu0 0
      %355 = vmatpush1.bf16.msra.mxu0 %v336
      %356 = vmatprep.subr.bf16.mxu0 0
      %357 = vmatpush1.bf16.msra.mxu0 %v337
      %358 = vmatprep.subr.bf16.mxu0 0
      %359 = vmatpush1.bf16.msra.mxu0 %v338
      %360 = vmatprep.subr.bf16.mxu0 0
      %361 = vmatpush1.bf16.msra.mxu0 %v339
      %362 = vmatprep.subr.bf16.mxu0 0
      %363 = vmatpush1.bf16.msra.mxu0 %v340
      %364 = vmatprep.subr.bf16.mxu0 0
      %365 = vmatpush1.bf16.msra.mxu0 %v341
      %366 = vmatprep.subr.bf16.mxu0 0
      %367 = vmatpush1.bf16.msra.mxu0 0
      %368 = vmatprep.subr.bf16.mxu0 0
      %369 = vmatpush1.bf16.msra.mxu0 0
      %370 = vmatprep.subr.bf16.mxu0 0
      %371 = vmatpush1.bf16.msra.mxu0 0
      %372 = vmatprep.subr.bf16.mxu0 0
      %373 = vmatpush1.bf16.msra.mxu0 0
      %374 = vmatprep.subr.bf16.mxu0 0
      %375 = vmatpush1.bf16.msra.mxu0 0
      %376 = vmatprep.subr.bf16.mxu0 0
      %377 = vmatpush1.bf16.msra.mxu0 0
      %378 = vmatprep.subr.bf16.mxu0 0
      %379 = vmatpush1.bf16.msra.mxu0 0
      %380 = vmatprep.subr.bf16.mxu0 0
      %381 = vmatpush1.bf16.msra.mxu0 0
      %382 = vmatprep.mubr.bf16.mxu0 0
      %383 = vmatmul.mubr.bf16.gmra.mrb[0].mxu0 %v294
      %v384 = vpop.f32.mrb[0].mxu0
      %v385 = vadd.f32 0.0, %v384
      %v386 = vpop.f32.mrb[0].mxu0
      %v387 = vpop.f32.mrb[0].mxu0
      %v388 = vadd.f32 0.0, %v387
      %v389 = vpop.f32.mrb[0].mxu0
      %390 = vmatprep.mubr.bf16.mxu0 0
      %391 = vmatmul.mubr.bf16.gmra.mrb[0].mxu0 %v295
      %v392 = vpop.f32.mrb[0].mxu0
      %v393 = vadd.f32 0.0, %v392
      %v394 = vpop.f32.mrb[0].mxu0
      %v395 = vpop.f32.mrb[0].mxu0
      %v396 = vadd.f32 0.0, %v395
      %v397 = vpop.f32.mrb[0].mxu0
      %398 = vmatprep.mubr.bf16.mxu0 0
      %399 = vmatmul.mubr.bf16.gmra.mrb[0].mxu0 %v296
      %v400 = vpop.f32.mrb[0].mxu0
      %v401 = vadd.f32 0.0, %v400
      %v402 = vpop.f32.mrb[0].mxu0
      %v403 = vpop.f32.mrb[0].mxu0
      %v404 = vadd.f32 0.0, %v403
      %v405 = vpop.f32.mrb[0].mxu0
      %406 = vmatprep.mubr.bf16.mxu0 0
      %407 = vmatmul.mubr.bf16.gmra.mrb[0].mxu0 %v297
      %v408 = vpop.f32.mrb[0].mxu0
      %v409 = vadd.f32 0.0, %v408
      %v410 = vpop.f32.mrb[0].mxu0
      %v411 = vpop.f32.mrb[0].mxu0
      %v412 = vadd.f32 0.0, %v411
      %v413 = vpop.f32.mrb[0].mxu0
      %414 = vdwg.mxu0
      %v423 = vunpack.c.l.b16 %v228
      %v424 = vunpack.c.l.b16 %v229
      %v425 = vunpack.c.l.b16 %v230
      %v426 = vunpack.c.l.b16 %v231
      %v427 = vunpack.c.l.b16 %v232
      %v428 = vunpack.c.l.b16 %v233
      %v429 = vunpack.c.l.b16 %v234
      %v430 = vunpack.c.l.b16 %v235
      %v431 = vpack.c.b16 %v424, %v423
      %v432 = vpack.c.b16 %v426, %v425
      %v433 = vpack.c.b16 %v428, %v427
      %v434 = vpack.c.b16 %v430, %v429
      %v455 = vunpack.c.l.b16 %v236
      %v456 = vunpack.c.l.b16 %v237
      %v457 = vunpack.c.l.b16 %v238
      %v458 = vunpack.c.l.b16 %v239
      %v459 = vunpack.c.l.b16 %v240
      %v460 = vunpack.c.l.b16 %v241
      %v461 = vunpack.c.l.b16 %v242
      %v462 = vunpack.c.l.b16 %v243
      %v463 = vunpack.c.l.b16 %v244
      %v464 = vunpack.c.l.b16 %v245
      %v465 = vunpack.c.l.b16 %v246
      %v466 = vunpack.c.l.b16 %v247
      %v467 = vunpack.c.l.b16 %v248
      %v468 = vunpack.c.l.b16 %v249
      %v469 = vunpack.c.l.b16 %v250
      %v470 = vunpack.c.l.b16 %v251
      %v471 = vpack.c.b16 %v456, %v455
      %v472 = vpack.c.b16 %v458, %v457
      %v473 = vpack.c.b16 %v460, %v459
      %v474 = vpack.c.b16 %v462, %v461
      %v475 = vpack.c.b16 %v464, %v463
      %v476 = vpack.c.b16 %v466, %v465
      %v477 = vpack.c.b16 %v468, %v467
      %v478 = vpack.c.b16 %v470, %v469
      %487 = vmatprep.subr.bf16.mxu0 0
      %488 = vmatpush1.bf16.msra.mxu0 %v471
      %489 = vmatprep.subr.bf16.mxu0 0
      %490 = vmatpush1.bf16.msra.mxu0 %v472
      %491 = vmatprep.subr.bf16.mxu0 0
      %492 = vmatpush1.bf16.msra.mxu0 %v473
      %493 = vmatprep.subr.bf16.mxu0 0
      %494 = vmatpush1.bf16.msra.mxu0 %v474
      %495 = vmatprep.subr.bf16.mxu0 0
      %496 = vmatpush1.bf16.msra.mxu0 %v475
      %497 = vmatprep.subr.bf16.mxu0 0
      %498 = vmatpush1.bf16.msra.mxu0 %v476
      %499 = vmatprep.subr.bf16.mxu0 0
      %500 = vmatpush1.bf16.msra.mxu0 %v477
      %501 = vmatprep.subr.bf16.mxu0 0
      %502 = vmatpush1.bf16.msra.mxu0 %v478
      %503 = vmatprep.subr.bf16.mxu0 0
      %504 = vmatpush1.bf16.msra.mxu0 0
      %505 = vmatprep.subr.bf16.mxu0 0
      %506 = vmatpush1.bf16.msra.mxu0 0
      %507 = vmatprep.subr.bf16.mxu0 0
      %508 = vmatpush1.bf16.msra.mxu0 0
      %509 = vmatprep.subr.bf16.mxu0 0
      %510 = vmatpush1.bf16.msra.mxu0 0
      %511 = vmatprep.subr.bf16.mxu0 0
      %512 = vmatpush1.bf16.msra.mxu0 0
      %513 = vmatprep.subr.bf16.mxu0 0
      %514 = vmatpush1.bf16.msra.mxu0 0
      %515 = vmatprep.subr.bf16.mxu0 0
      %516 = vmatpush1.bf16.msra.mxu0 0
      %517 = vmatprep.subr.bf16.mxu0 0
      %518 = vmatpush1.bf16.msra.mxu0 0
      %519 = vmatprep.mubr.bf16.mxu0 0
      %520 = vmatmul.mubr.bf16.gmra.mrb[0].mxu0 %v431
      %v521 = vpop.f32.mrb[0].mxu0
      %v522 = vadd.f32 %v385, %v521
      %v523 = vpop.f32.mrb[0].mxu0
      %v524 = vpop.f32.mrb[0].mxu0
      %v525 = vadd.f32 %v388, %v524
      %v526 = vpop.f32.mrb[0].mxu0
      %527 = vmatprep.mubr.bf16.mxu0 0
      %528 = vmatmul.mubr.bf16.gmra.mrb[0].mxu0 %v432
      %v529 = vpop.f32.mrb[0].mxu0
      %v530 = vadd.f32 %v393, %v529
      %v531 = vpop.f32.mrb[0].mxu0
      %v532 = vpop.f32.mrb[0].mxu0
      %v533 = vadd.f32 %v396, %v532
      %v534 = vpop.f32.mrb[0].mxu0
      %535 = vmatprep.mubr.bf16.mxu0 0
      %536 = vmatmul.mubr.bf16.gmra.mrb[0].mxu0 %v433
      %v537 = vpop.f32.mrb[0].mxu0
      %v538 = vadd.f32 %v401, %v537
      %v539 = vpop.f32.mrb[0].mxu0
      %v540 = vpop.f32.mrb[0].mxu0
      %v541 = vadd.f32 %v404, %v540
      %v542 = vpop.f32.mrb[0].mxu0
      %543 = vmatprep.mubr.bf16.mxu0 0
      %544 = vmatmul.mubr.bf16.gmra.mrb[0].mxu0 %v434
      %v545 = vpop.f32.mrb[0].mxu0
      %v546 = vadd.f32 %v409, %v545
      %v547 = vpop.f32.mrb[0].mxu0
      %v548 = vpop.f32.mrb[0].mxu0
      %v549 = vadd.f32 %v412, %v548
      %v550 = vpop.f32.mrb[0].mxu0
      %551 = vdwg.mxu0
      %v552 = vld [vmem:[%s210] sm:$0xf]
      %v553 = vld [vmem:[%s210 + $0x4] sm:$0x1]
      %v554 = vld [vmem:[%s210 + $0x8] sm:$0xf]
      %v555 = vld [vmem:[%s210 + $0xc] sm:$0x1]
      %v556 = vld [vmem:[%s210 + $0x10] sm:$0xf]
      %v557 = vld [vmem:[%s210 + $0x14] sm:$0x1]
      %v558 = vld [vmem:[%s210 + $0x18] sm:$0xf]
      %v559 = vld [vmem:[%s210 + $0x1c] sm:$0x1]
      %v560 = vld [vmem:[%s210 + $0x20] sm:$0xf]
      %v561 = vld [vmem:[%s210 + $0x24] sm:$0x1]
      %v562 = vld [vmem:[%s210 + $0x28] sm:$0xf]
      %v563 = vld [vmem:[%s210 + $0x2c] sm:$0x1]
      %v564 = vld [vmem:[%s210 + $0x30] sm:$0xf]
      %v565 = vld [vmem:[%s210 + $0x34] sm:$0x1]
      %v566 = vld [vmem:[%s210 + $0x38] sm:$0xf]
      %v567 = vld [vmem:[%s210 + $0x3c] sm:$0x1]
      %vm568 = vsmask.f32 3328
      %vm569 = vsmask.f32 7440
      %vm570 = vmor %vm568, %vm569
      %v572 = vshrl.u32 %v552, 16
      %v574 = vrot.slane %v572, 4
      %v575 = vshll.u32 %v552, 16
      %v577 = vrot.slane %v575, 5
      %v578 = vor.u32 %v574, %v577
      %v579 = vrot.slane %v578, 4
      %v581 = vshll.u32 %v553, 16
      %v583 = vrot.slane %v581, 5
      %v584 = vsel %vm570, %v579, %v583
      %v586 = vshrl.u32 %v554, 16
      %v588 = vrot.slane %v586, 4
      %v589 = vshll.u32 %v554, 16
      %v591 = vrot.slane %v589, 5
      %v592 = vor.u32 %v588, %v591
      %v593 = vrot.slane %v592, 4
      %v595 = vshll.u32 %v555, 16
      %v597 = vrot.slane %v595, 5
      %v598 = vsel %vm570, %v593, %v597
      %v600 = vshrl.u32 %v556, 16
      %v602 = vrot.slane %v600, 4
      %v603 = vshll.u32 %v556, 16
      %v605 = vrot.slane %v603, 5
      %v606 = vor.u32 %v602, %v605
      %v607 = vrot.slane %v606, 4
      %v609 = vshll.u32 %v557, 16
      %v611 = vrot.slane %v609, 5
      %v612 = vsel %vm570, %v607, %v611
      %v614 = vshrl.u32 %v558, 16
      %v616 = vrot.slane %v614, 4
      %v617 = vshll.u32 %v558, 16
      %v619 = vrot.slane %v617, 5
      %v620 = vor.u32 %v616, %v619
      %v621 = vrot.slane %v620, 4
      %v623 = vshll.u32 %v559, 16
      %v625 = vrot.slane %v623, 5
      %v626 = vsel %vm570, %v621, %v625
      %v628 = vshrl.u32 %v560, 16
      %v630 = vrot.slane %v628, 4
      %v631 = vshll.u32 %v560, 16
      %v633 = vrot.slane %v631, 5
      %v634 = vor.u32 %v630, %v633
      %v635 = vrot.slane %v634, 4
      %v637 = vshll.u32 %v561, 16
      %v639 = vrot.slane %v637, 5
      %v640 = vsel %vm570, %v635, %v639
      %v642 = vshrl.u32 %v562, 16
      %v644 = vrot.slane %v642, 4
      %v645 = vshll.u32 %v562, 16
      %v647 = vrot.slane %v645, 5
      %v648 = vor.u32 %v644, %v647
      %v649 = vrot.slane %v648, 4
      %v651 = vshll.u32 %v563, 16
      %v653 = vrot.slane %v651, 5
      %v654 = vsel %vm570, %v649, %v653
      %v656 = vshrl.u32 %v564, 16
      %v658 = vrot.slane %v656, 4
      %v659 = vshll.u32 %v564, 16
      %v661 = vrot.slane %v659, 5
      %v662 = vor.u32 %v658, %v661
      %v663 = vrot.slane %v662, 4
      %v665 = vshll.u32 %v565, 16
      %v667 = vrot.slane %v665, 5
      %v668 = vsel %vm570, %v663, %v667
      %v670 = vshrl.u32 %v566, 16
      %v672 = vrot.slane %v670, 4
      %v673 = vshll.u32 %v566, 16
      %v675 = vrot.slane %v673, 5
      %v676 = vor.u32 %v672, %v675
      %v677 = vrot.slane %v676, 4
      %v679 = vshll.u32 %v567, 16
      %v681 = vrot.slane %v679, 5
      %v682 = vsel %vm570, %v677, %v681
      %s683 = scalar_lea.vmem %s215, 128
      %v684 = vld [vmem:[%s683] sm:$0xf]
      %v685 = vld [vmem:[%s683 + $0x4] sm:$0xf]
      %v686 = vld [vmem:[%s683 + $0x8] sm:$0xf]
      %v687 = vld [vmem:[%s683 + $0xc] sm:$0xf]
      %v688 = vld [vmem:[%s683 + $0x10] sm:$0xf]
      %v689 = vld [vmem:[%s683 + $0x14] sm:$0xf]
      %v690 = vld [vmem:[%s683 + $0x18] sm:$0xf]
      %v691 = vld [vmem:[%s683 + $0x1c] sm:$0xf]
      %v692 = vld [vmem:[%s683 + $0x20] sm:$0xf]
      %v693 = vld [vmem:[%s683 + $0x24] sm:$0xf]
      %v694 = vld [vmem:[%s683 + $0x28] sm:$0xf]
      %v695 = vld [vmem:[%s683 + $0x2c] sm:$0xf]
      %v696 = vld [vmem:[%s683 + $0x30] sm:$0xf]
      %v697 = vld [vmem:[%s683 + $0x34] sm:$0xf]
      %v698 = vld [vmem:[%s683 + $0x38] sm:$0xf]
      %v699 = vld [vmem:[%s683 + $0x3c] sm:$0xf]
      %v700 = vunpack.c.l.b16 %v584
      %v701 = vunpack.c.l.b16 %v598
      %v702 = vunpack.c.l.b16 %v612
      %v703 = vunpack.c.l.b16 %v626
      %v704 = vunpack.c.l.b16 %v640
      %v705 = vunpack.c.l.b16 %v654
      %v706 = vunpack.c.l.b16 %v668
      %v707 = vunpack.c.l.b16 %v682
      %v708 = vpack.c.b16 %v701, %v700
      %v709 = vpack.c.b16 %v703, %v702
      %v710 = vpack.c.b16 %v705, %v704
      %v711 = vpack.c.b16 %v707, %v706
      %v732 = vunpack.c.l.b16 %v684
      %v733 = vunpack.c.l.b16 %v685
      %v734 = vunpack.c.l.b16 %v686
      %v735 = vunpack.c.l.b16 %v687
      %v736 = vunpack.c.l.b16 %v688
      %v737 = vunpack.c.l.b16 %v689
      %v738 = vunpack.c.l.b16 %v690
      %v739 = vunpack.c.l.b16 %v691
      %v740 = vunpack.c.l.b16 %v692
      %v741 = vunpack.c.l.b16 %v693
      %v742 = vunpack.c.l.b16 %v694
      %v743 = vunpack.c.l.b16 %v695
      %v744 = vunpack.c.l.b16 %v696
      %v745 = vunpack.c.l.b16 %v697
      %v746 = vunpack.c.l.b16 %v698
      %v747 = vunpack.c.l.b16 %v699
      %v748 = vpack.c.b16 %v733, %v732
      %v749 = vpack.c.b16 %v735, %v734
      %v750 = vpack.c.b16 %v737, %v736
      %v751 = vpack.c.b16 %v739, %v738
      %v752 = vpack.c.b16 %v741, %v740
      %v753 = vpack.c.b16 %v743, %v742
      %v754 = vpack.c.b16 %v745, %v744
      %v755 = vpack.c.b16 %v747, %v746
      %764 = vmatprep.subr.bf16.mxu0 0
      %765 = vmatpush1.bf16.msra.mxu0 %v748
      %766 = vmatprep.subr.bf16.mxu0 0
      %767 = vmatpush1.bf16.msra.mxu0 %v749
      %768 = vmatprep.subr.bf16.mxu0 0
      %769 = vmatpush1.bf16.msra.mxu0 %v750
      %770 = vmatprep.subr.bf16.mxu0 0
      %771 = vmatpush1.bf16.msra.mxu0 %v751
      %772 = vmatprep.subr.bf16.mxu0 0
      %773 = vmatpush1.bf16.msra.mxu0 %v752
      %774 = vmatprep.subr.bf16.mxu0 0
      %775 = vmatpush1.bf16.msra.mxu0 %v753
      %776 = vmatprep.subr.bf16.mxu0 0
      %777 = vmatpush1.bf16.msra.mxu0 %v754
      %778 = vmatprep.subr.bf16.mxu0 0
      %779 = vmatpush1.bf16.msra.mxu0 %v755
      %780 = vmatprep.subr.bf16.mxu0 0
      %781 = vmatpush1.bf16.msra.mxu0 0
      %782 = vmatprep.subr.bf16.mxu0 0
      %783 = vmatpush1.bf16.msra.mxu0 0
      %784 = vmatprep.subr.bf16.mxu0 0
      %785 = vmatpush1.bf16.msra.mxu0 0
      %786 = vmatprep.subr.bf16.mxu0 0
      %787 = vmatpush1.bf16.msra.mxu0 0
      %788 = vmatprep.subr.bf16.mxu0 0
      %789 = vmatpush1.bf16.msra.mxu0 0
      %790 = vmatprep.subr.bf16.mxu0 0
      %791 = vmatpush1.bf16.msra.mxu0 0
      %792 = vmatprep.subr.bf16.mxu0 0
      %793 = vmatpush1.bf16.msra.mxu0 0
      %794 = vmatprep.subr.bf16.mxu0 0
      %795 = vmatpush1.bf16.msra.mxu0 0
      %796 = vmatprep.mubr.bf16.mxu0 0
      %797 = vmatmul.mubr.bf16.gmra.mrb[0].mxu0 %v708
      %v798 = vpop.f32.mrb[0].mxu0
      %v799 = vadd.f32 0.0, %v798
      %v800 = vpop.f32.mrb[0].mxu0
      %v801 = vpop.f32.mrb[0].mxu0
      %v802 = vadd.f32 0.0, %v801
      %v803 = vpop.f32.mrb[0].mxu0
      %804 = vmatprep.mubr.bf16.mxu0 0
      %805 = vmatmul.mubr.bf16.gmra.mrb[0].mxu0 %v709
      %v806 = vpop.f32.mrb[0].mxu0
      %v807 = vadd.f32 0.0, %v806
      %v808 = vpop.f32.mrb[0].mxu0
      %v809 = vpop.f32.mrb[0].mxu0
      %v810 = vadd.f32 0.0, %v809
      %v811 = vpop.f32.mrb[0].mxu0
      %812 = vmatprep.mubr.bf16.mxu0 0
      %813 = vmatmul.mubr.bf16.gmra.mrb[0].mxu0 %v710
      %v814 = vpop.f32.mrb[0].mxu0
      %v815 = vadd.f32 0.0, %v814
      %v816 = vpop.f32.mrb[0].mxu0
      %v817 = vpop.f32.mrb[0].mxu0
      %v818 = vadd.f32 0.0, %v817
      %v819 = vpop.f32.mrb[0].mxu0
      %820 = vmatprep.mubr.bf16.mxu0 0
      %821 = vmatmul.mubr.bf16.gmra.mrb[0].mxu0 %v711
      %v822 = vpop.f32.mrb[0].mxu0
      %v823 = vadd.f32 0.0, %v822
      %v824 = vpop.f32.mrb[0].mxu0
      %v825 = vpop.f32.mrb[0].mxu0
      %v826 = vadd.f32 0.0, %v825
      %v827 = vpop.f32.mrb[0].mxu0
      %828 = vdwg.mxu0
      %v829 = vadd.f32 %v522, %v799
      %v830 = vadd.f32 %v525, %v802
      %v831 = vadd.f32 %v530, %v807
      %v832 = vadd.f32 %v533, %v810
      %v833 = vadd.f32 %v538, %v815
      %v834 = vadd.f32 %v541, %v818
      %v835 = vadd.f32 %v546, %v823
      %v836 = vadd.f32 %v549, %v826
      %s837 = scalar_lea.vmem %s210, 144
      %v838 = vld [vmem:[%s837] sm:$0xf]
      %v839 = vld [vmem:[%s837 + $0x8] sm:$0xf]
      %v840 = vld [vmem:[%s837 + $0x10] sm:$0xf]
      %v841 = vld [vmem:[%s837 + $0x18] sm:$0xf]
      %v842 = vld [vmem:[%s837 + $0x20] sm:$0xf]
      %v843 = vld [vmem:[%s837 + $0x28] sm:$0xf]
      %v844 = vld [vmem:[%s837 + $0x30] sm:$0xf]
      %v845 = vld [vmem:[%s837 + $0x38] sm:$0xf]
      %s846 = scalar_lea.vmem %s215, 192
      %v847 = vld [vmem:[%s846] sm:$0xf]
      %v848 = vld [vmem:[%s846 + $0x4] sm:$0xf]
      %v849 = vld [vmem:[%s846 + $0x8] sm:$0xf]
      %v850 = vld [vmem:[%s846 + $0xc] sm:$0xf]
      %v851 = vld [vmem:[%s846 + $0x10] sm:$0xf]
      %v852 = vld [vmem:[%s846 + $0x14] sm:$0xf]
      %v853 = vld [vmem:[%s846 + $0x18] sm:$0xf]
      %v854 = vld [vmem:[%s846 + $0x1c] sm:$0xf]
      %v855 = vld [vmem:[%s846 + $0x20] sm:$0xf]
      %v856 = vld [vmem:[%s846 + $0x24] sm:$0xf]
      %v857 = vld [vmem:[%s846 + $0x28] sm:$0xf]
      %v858 = vld [vmem:[%s846 + $0x2c] sm:$0xf]
      %v859 = vld [vmem:[%s846 + $0x30] sm:$0xf]
      %v860 = vld [vmem:[%s846 + $0x34] sm:$0xf]
      %v861 = vld [vmem:[%s846 + $0x38] sm:$0xf]
      %v862 = vld [vmem:[%s846 + $0x3c] sm:$0xf]
      %v871 = vunpack.c.l.b16 %v838
      %v872 = vunpack.c.l.b16 %v839
      %v873 = vunpack.c.l.b16 %v840
      %v874 = vunpack.c.l.b16 %v841
      %v875 = vunpack.c.l.b16 %v842
      %v876 = vunpack.c.l.b16 %v843
      %v877 = vunpack.c.l.b16 %v844
      %v878 = vunpack.c.l.b16 %v845
      %v879 = vpack.c.b16 %v872, %v871
      %v880 = vpack.c.b16 %v874, %v873
      %v881 = vpack.c.b16 %v876, %v875
      %v882 = vpack.c.b16 %v878, %v877
      %v903 = vunpack.c.l.b16 %v847
      %v904 = vunpack.c.l.b16 %v848
      %v905 = vunpack.c.l.b16 %v849
      %v906 = vunpack.c.l.b16 %v850
      %v907 = vunpack.c.l.b16 %v851
      %v908 = vunpack.c.l.b16 %v852
      %v909 = vunpack.c.l.b16 %v853
      %v910 = vunpack.c.l.b16 %v854
      %v911 = vunpack.c.l.b16 %v855
      %v912 = vunpack.c.l.b16 %v856
      %v913 = vunpack.c.l.b16 %v857
      %v914 = vunpack.c.l.b16 %v858
      %v915 = vunpack.c.l.b16 %v859
      %v916 = vunpack.c.l.b16 %v860
      %v917 = vunpack.c.l.b16 %v861
      %v918 = vunpack.c.l.b16 %v862
      %v919 = vpack.c.b16 %v904, %v903
      %v920 = vpack.c.b16 %v906, %v905
      %v921 = vpack.c.b16 %v908, %v907
      %v922 = vpack.c.b16 %v910, %v909
      %v923 = vpack.c.b16 %v912, %v911
      %v924 = vpack.c.b16 %v914, %v913
      %v925 = vpack.c.b16 %v916, %v915
      %v926 = vpack.c.b16 %v918, %v917
      %935 = vmatprep.subr.bf16.mxu0 0
      %936 = vmatpush1.bf16.msra.mxu0 %v919
      %937 = vmatprep.subr.bf16.mxu0 0
      %938 = vmatpush1.bf16.msra.mxu0 %v920
      %939 = vmatprep.subr.bf16.mxu0 0
      %940 = vmatpush1.bf16.msra.mxu0 %v921
      %941 = vmatprep.subr.bf16.mxu0 0
      %942 = vmatpush1.bf16.msra.mxu0 %v922
      %943 = vmatprep.subr.bf16.mxu0 0
      %944 = vmatpush1.bf16.msra.mxu0 %v923
      %945 = vmatprep.subr.bf16.mxu0 0
      %946 = vmatpush1.bf16.msra.mxu0 %v924
      %947 = vmatprep.subr.bf16.mxu0 0
      %948 = vmatpush1.bf16.msra.mxu0 %v925
      %949 = vmatprep.subr.bf16.mxu0 0
      %950 = vmatpush1.bf16.msra.mxu0 %v926
      %951 = vmatprep.subr.bf16.mxu0 0
      %952 = vmatpush1.bf16.msra.mxu0 0
      %953 = vmatprep.subr.bf16.mxu0 0
      %954 = vmatpush1.bf16.msra.mxu0 0
      %955 = vmatprep.subr.bf16.mxu0 0
      %956 = vmatpush1.bf16.msra.mxu0 0
      %957 = vmatprep.subr.bf16.mxu0 0
      %958 = vmatpush1.bf16.msra.mxu0 0
      %959 = vmatprep.subr.bf16.mxu0 0
      %960 = vmatpush1.bf16.msra.mxu0 0
      %961 = vmatprep.subr.bf16.mxu0 0
      %962 = vmatpush1.bf16.msra.mxu0 0
      %963 = vmatprep.subr.bf16.mxu0 0
      %964 = vmatpush1.bf16.msra.mxu0 0
      %965 = vmatprep.subr.bf16.mxu0 0
      %966 = vmatpush1.bf16.msra.mxu0 0
      %967 = vmatprep.mubr.bf16.mxu0 0
      %968 = vmatmul.mubr.bf16.gmra.mrb[0].mxu0 %v879
      %v969 = vpop.f32.mrb[0].mxu0
      %v970 = vadd.f32 0.0, %v969
      %v971 = vpop.f32.mrb[0].mxu0
      %v972 = vpop.f32.mrb[0].mxu0
      %v973 = vadd.f32 0.0, %v972
      %v974 = vpop.f32.mrb[0].mxu0
      %975 = vmatprep.mubr.bf16.mxu0 0
      %976 = vmatmul.mubr.bf16.gmra.mrb[0].mxu0 %v880
      %v977 = vpop.f32.mrb[0].mxu0
      %v978 = vadd.f32 0.0, %v977
      %v979 = vpop.f32.mrb[0].mxu0
      %v980 = vpop.f32.mrb[0].mxu0
      %v981 = vadd.f32 0.0, %v980
      %v982 = vpop.f32.mrb[0].mxu0
      %983 = vmatprep.mubr.bf16.mxu0 0
      %984 = vmatmul.mubr.bf16.gmra.mrb[0].mxu0 %v881
      %v985 = vpop.f32.mrb[0].mxu0
      %v986 = vadd.f32 0.0, %v985
      %v987 = vpop.f32.mrb[0].mxu0
      %v988 = vpop.f32.mrb[0].mxu0
      %v989 = vadd.f32 0.0, %v988
      %v990 = vpop.f32.mrb[0].mxu0
      %991 = vmatprep.mubr.bf16.mxu0 0
      %992 = vmatmul.mubr.bf16.gmra.mrb[0].mxu0 %v882
      %v993 = vpop.f32.mrb[0].mxu0
      %v994 = vadd.f32 0.0, %v993
      %v995 = vpop.f32.mrb[0].mxu0
      %v996 = vpop.f32.mrb[0].mxu0
      %v997 = vadd.f32 0.0, %v996
      %v998 = vpop.f32.mrb[0].mxu0
      %999 = vdwg.mxu0
      %v1000 = vadd.f32 %v829, %v970
      %v1001 = vadd.f32 %v830, %v973
      %v1002 = vadd.f32 %v831, %v978
      %v1003 = vadd.f32 %v832, %v981
      %v1004 = vadd.f32 %v833, %v986
      %v1005 = vadd.f32 %v834, %v989
      %v1006 = vadd.f32 %v835, %v994
      %v1007 = vadd.f32 %v836, %v997
      %s1008 = scalar_lea.vmem %s210, 216
      %v1009 = vld [vmem:[%s1008] sm:$0xf]
      %v1010 = vld [vmem:[%s1008 + $0x8] sm:$0xf]
      %v1011 = vld [vmem:[%s1008 + $0x10] sm:$0xf]
      %v1012 = vld [vmem:[%s1008 + $0x18] sm:$0xf]
      %v1013 = vld [vmem:[%s1008 + $0x20] sm:$0xf]
      %v1014 = vld [vmem:[%s1008 + $0x28] sm:$0xf]
      %v1015 = vld [vmem:[%s1008 + $0x30] sm:$0xf]
      %v1016 = vld [vmem:[%s1008 + $0x38] sm:$0xf]
      %s1017 = scalar_lea.vmem %s215, 256
      %v1018 = vld [vmem:[%s1017] sm:$0xf]
      %v1019 = vld [vmem:[%s1017 + $0x4] sm:$0xf]
      %v1020 = vld [vmem:[%s1017 + $0x8] sm:$0xf]
      %v1021 = vld [vmem:[%s1017 + $0xc] sm:$0xf]
      %v1022 = vld [vmem:[%s1017 + $0x10] sm:$0xf]
      %v1023 = vld [vmem:[%s1017 + $0x14] sm:$0xf]
      %v1024 = vld [vmem:[%s1017 + $0x18] sm:$0xf]
      %v1025 = vld [vmem:[%s1017 + $0x1c] sm:$0xf]
      %v1026 = vld [vmem:[%s1017 + $0x20] sm:$0xf]
      %v1027 = vld [vmem:[%s1017 + $0x24] sm:$0xf]
      %v1028 = vld [vmem:[%s1017 + $0x28] sm:$0xf]
      %v1029 = vld [vmem:[%s1017 + $0x2c] sm:$0xf]
      %v1030 = vld [vmem:[%s1017 + $0x30] sm:$0xf]
      %v1031 = vld [vmem:[%s1017 + $0x34] sm:$0xf]
      %v1032 = vld [vmem:[%s1017 + $0x38] sm:$0xf]
      %v1033 = vld [vmem:[%s1017 + $0x3c] sm:$0xf]
      %v1042 = vunpack.c.l.b16 %v1009
      %v1043 = vunpack.c.l.b16 %v1010
      %v1044 = vunpack.c.l.b16 %v1011
      %v1045 = vunpack.c.l.b16 %v1012
      %v1046 = vunpack.c.l.b16 %v1013
      %v1047 = vunpack.c.l.b16 %v1014
      %v1048 = vunpack.c.l.b16 %v1015
      %v1049 = vunpack.c.l.b16 %v1016
      %v1050 = vpack.c.b16 %v1043, %v1042
      %v1051 = vpack.c.b16 %v1045, %v1044
      %v1052 = vpack.c.b16 %v1047, %v1046
      %v1053 = vpack.c.b16 %v1049, %v1048
      %v1074 = vunpack.c.l.b16 %v1018
      %v1075 = vunpack.c.l.b16 %v1019
      %v1076 = vunpack.c.l.b16 %v1020
      %v1077 = vunpack.c.l.b16 %v1021
      %v1078 = vunpack.c.l.b16 %v1022
      %v1079 = vunpack.c.l.b16 %v1023
      %v1080 = vunpack.c.l.b16 %v1024
      %v1081 = vunpack.c.l.b16 %v1025
      %v1082 = vunpack.c.l.b16 %v1026
      %v1083 = vunpack.c.l.b16 %v1027
      %v1084 = vunpack.c.l.b16 %v1028
      %v1085 = vunpack.c.l.b16 %v1029
      %v1086 = vunpack.c.l.b16 %v1030
      %v1087 = vunpack.c.l.b16 %v1031
      %v1088 = vunpack.c.l.b16 %v1032
      %v1089 = vunpack.c.l.b16 %v1033
      %v1090 = vpack.c.b16 %v1075, %v1074
      %v1091 = vpack.c.b16 %v1077, %v1076
      %v1092 = vpack.c.b16 %v1079, %v1078
      %v1093 = vpack.c.b16 %v1081, %v1080
      %v1094 = vpack.c.b16 %v1083, %v1082
      %v1095 = vpack.c.b16 %v1085, %v1084
      %v1096 = vpack.c.b16 %v1087, %v1086
      %v1097 = vpack.c.b16 %v1089, %v1088
      %1106 = vmatprep.subr.bf16.mxu0 0
      %1107 = vmatpush1.bf16.msra.mxu0 %v1090
      %1108 = vmatprep.subr.bf16.mxu0 0
      %1109 = vmatpush1.bf16.msra.mxu0 %v1091
      %1110 = vmatprep.subr.bf16.mxu0 0
      %1111 = vmatpush1.bf16.msra.mxu0 %v1092
      %1112 = vmatprep.subr.bf16.mxu0 0
      %1113 = vmatpush1.bf16.msra.mxu0 %v1093
      %1114 = vmatprep.subr.bf16.mxu0 0
      %1115 = vmatpush1.bf16.msra.mxu0 %v1094
      %1116 = vmatprep.subr.bf16.mxu0 0
      %1117 = vmatpush1.bf16.msra.mxu0 %v1095
      %1118 = vmatprep.subr.bf16.mxu0 0
      %1119 = vmatpush1.bf16.msra.mxu0 %v1096
      %1120 = vmatprep.subr.bf16.mxu0 0
      %1121 = vmatpush1.bf16.msra.mxu0 %v1097
      %1122 = vmatprep.subr.bf16.mxu0 0
      %1123 = vmatpush1.bf16.msra.mxu0 0
      %1124 = vmatprep.subr.bf16.mxu0 0
      %1125 = vmatpush1.bf16.msra.mxu0 0
      %1126 = vmatprep.subr.bf16.mxu0 0
      %1127 = vmatpush1.bf16.msra.mxu0 0
      %1128 = vmatprep.subr.bf16.mxu0 0
      %1129 = vmatpush1.bf16.msra.mxu0 0
      %1130 = vmatprep.subr.bf16.mxu0 0
      %1131 = vmatpush1.bf16.msra.mxu0 0
      %1132 = vmatprep.subr.bf16.mxu0 0
      %1133 = vmatpush1.bf16.msra.mxu0 0
      %1134 = vmatprep.subr.bf16.mxu0 0
      %1135 = vmatpush1.bf16.msra.mxu0 0
      %1136 = vmatprep.subr.bf16.mxu0 0
      %1137 = vmatpush1.bf16.msra.mxu0 0
      %1138 = vmatprep.mubr.bf16.mxu0 0
      %1139 = vmatmul.mubr.bf16.gmra.mrb[0].mxu0 %v1050
      %v1140 = vpop.f32.mrb[0].mxu0
      %v1141 = vadd.f32 0.0, %v1140
      %v1142 = vpop.f32.mrb[0].mxu0
      %v1143 = vpop.f32.mrb[0].mxu0
      %v1144 = vadd.f32 0.0, %v1143
      %v1145 = vpop.f32.mrb[0].mxu0
      %1146 = vmatprep.mubr.bf16.mxu0 0
      %1147 = vmatmul.mubr.bf16.gmra.mrb[0].mxu0 %v1051
      %v1148 = vpop.f32.mrb[0].mxu0
      %v1149 = vadd.f32 0.0, %v1148
      %v1150 = vpop.f32.mrb[0].mxu0
      %v1151 = vpop.f32.mrb[0].mxu0
      %v1152 = vadd.f32 0.0, %v1151
      %v1153 = vpop.f32.mrb[0].mxu0
      %1154 = vmatprep.mubr.bf16.mxu0 0
      %1155 = vmatmul.mubr.bf16.gmra.mrb[0].mxu0 %v1052
      %v1156 = vpop.f32.mrb[0].mxu0
      %v1157 = vadd.f32 0.0, %v1156
      %v1158 = vpop.f32.mrb[0].mxu0
      %v1159 = vpop.f32.mrb[0].mxu0
      %v1160 = vadd.f32 0.0, %v1159
      %v1161 = vpop.f32.mrb[0].mxu0
      %1162 = vmatprep.mubr.bf16.mxu0 0
      %1163 = vmatmul.mubr.bf16.gmra.mrb[0].mxu0 %v1053
      %v1164 = vpop.f32.mrb[0].mxu0
      %v1165 = vadd.f32 0.0, %v1164
      %v1166 = vpop.f32.mrb[0].mxu0
      %v1167 = vpop.f32.mrb[0].mxu0
      %v1168 = vadd.f32 0.0, %v1167
      %v1169 = vpop.f32.mrb[0].mxu0
      %1170 = vdwg.mxu0
      %v1171 = vadd.f32 %v1000, %v1141
      %v1172 = vadd.f32 %v1001, %v1144
      %v1173 = vadd.f32 %v1002, %v1149
      %v1174 = vadd.f32 %v1003, %v1152
      %v1175 = vadd.f32 %v1004, %v1157
      %v1176 = vadd.f32 %v1005, %v1160
      %v1177 = vadd.f32 %v1006, %v1165
      %v1178 = vadd.f32 %v1007, %v1168
      %v1179 = vld [vmem:[%s837] sm:$0xf]
      %v1180 = vld [vmem:[%s837 + $0x4] sm:$0x1]
      %v1181 = vld [vmem:[%s837 + $0x8] sm:$0xf]
      %v1182 = vld [vmem:[%s837 + $0xc] sm:$0x1]
      %v1183 = vld [vmem:[%s837 + $0x10] sm:$0xf]
      %v1184 = vld [vmem:[%s837 + $0x14] sm:$0x1]
      %v1185 = vld [vmem:[%s837 + $0x18] sm:$0xf]
      %v1186 = vld [vmem:[%s837 + $0x1c] sm:$0x1]
      %v1187 = vld [vmem:[%s837 + $0x20] sm:$0xf]
      %v1188 = vld [vmem:[%s837 + $0x24] sm:$0x1]
      %v1189 = vld [vmem:[%s837 + $0x28] sm:$0xf]
      %v1190 = vld [vmem:[%s837 + $0x2c] sm:$0x1]
      %v1191 = vld [vmem:[%s837 + $0x30] sm:$0xf]
      %v1192 = vld [vmem:[%s837 + $0x34] sm:$0x1]
      %v1193 = vld [vmem:[%s837 + $0x38] sm:$0xf]
      %v1194 = vld [vmem:[%s837 + $0x3c] sm:$0x1]
      %v1196 = vshrl.u32 %v1179, 16
      %v1198 = vrot.slane %v1196, 4
      %v1199 = vshll.u32 %v1179, 16
      %v1201 = vrot.slane %v1199, 5
      %v1202 = vor.u32 %v1198, %v1201
      %v1203 = vrot.slane %v1202, 4
      %v1205 = vshll.u32 %v1180, 16
      %v1207 = vrot.slane %v1205, 5
      %v1208 = vsel %vm570, %v1203, %v1207
      %v1210 = vshrl.u32 %v1181, 16
      %v1212 = vrot.slane %v1210, 4
      %v1213 = vshll.u32 %v1181, 16
      %v1215 = vrot.slane %v1213, 5
      %v1216 = vor.u32 %v1212, %v1215
      %v1217 = vrot.slane %v1216, 4
      %v1219 = vshll.u32 %v1182, 16
      %v1221 = vrot.slane %v1219, 5
      %v1222 = vsel %vm570, %v1217, %v1221
      %v1224 = vshrl.u32 %v1183, 16
      %v1226 = vrot.slane %v1224, 4
      %v1227 = vshll.u32 %v1183, 16
      %v1229 = vrot.slane %v1227, 5
      %v1230 = vor.u32 %v1226, %v1229
      %v1231 = vrot.slane %v1230, 4
      %v1233 = vshll.u32 %v1184, 16
      %v1235 = vrot.slane %v1233, 5
      %v1236 = vsel %vm570, %v1231, %v1235
      %v1238 = vshrl.u32 %v1185, 16
      %v1240 = vrot.slane %v1238, 4
      %v1241 = vshll.u32 %v1185, 16
      %v1243 = vrot.slane %v1241, 5
      %v1244 = vor.u32 %v1240, %v1243
      %v1245 = vrot.slane %v1244, 4
      %v1247 = vshll.u32 %v1186, 16
      %v1249 = vrot.slane %v1247, 5
      %v1250 = vsel %vm570, %v1245, %v1249
      %v1252 = vshrl.u32 %v1187, 16
      %v1254 = vrot.slane %v1252, 4
      %v1255 = vshll.u32 %v1187, 16
      %v1257 = vrot.slane %v1255, 5
      %v1258 = vor.u32 %v1254, %v1257
      %v1259 = vrot.slane %v1258, 4
      %v1261 = vshll.u32 %v1188, 16
      %v1263 = vrot.slane %v1261, 5
      %v1264 = vsel %vm570, %v1259, %v1263
      %v1266 = vshrl.u32 %v1189, 16
      %v1268 = vrot.slane %v1266, 4
      %v1269 = vshll.u32 %v1189, 16
      %v1271 = vrot.slane %v1269, 5
      %v1272 = vor.u32 %v1268, %v1271
      %v1273 = vrot.slane %v1272, 4
      %v1275 = vshll.u32 %v1190, 16
      %v1277 = vrot.slane %v1275, 5
      %v1278 = vsel %vm570, %v1273, %v1277
      %v1280 = vshrl.u32 %v1191, 16
      %v1282 = vrot.slane %v1280, 4
      %v1283 = vshll.u32 %v1191, 16
      %v1285 = vrot.slane %v1283, 5
      %v1286 = vor.u32 %v1282, %v1285
      %v1287 = vrot.slane %v1286, 4
      %v1289 = vshll.u32 %v1192, 16
      %v1291 = vrot.slane %v1289, 5
      %v1292 = vsel %vm570, %v1287, %v1291
      %v1294 = vshrl.u32 %v1193, 16
      %v1296 = vrot.slane %v1294, 4
      %v1297 = vshll.u32 %v1193, 16
      %v1299 = vrot.slane %v1297, 5
      %v1300 = vor.u32 %v1296, %v1299
      %v1301 = vrot.slane %v1300, 4
      %v1303 = vshll.u32 %v1194, 16
      %v1305 = vrot.slane %v1303, 5
      %v1306 = vsel %vm570, %v1301, %v1305
      %s1307 = scalar_lea.vmem %s215, 320
      %v1308 = vld [vmem:[%s1307] sm:$0xf]
      %v1309 = vld [vmem:[%s1307 + $0x4] sm:$0xf]
      %v1310 = vld [vmem:[%s1307 + $0x8] sm:$0xf]
      %v1311 = vld [vmem:[%s1307 + $0xc] sm:$0xf]
      %v1312 = vld [vmem:[%s1307 + $0x10] sm:$0xf]
      %v1313 = vld [vmem:[%s1307 + $0x14] sm:$0xf]
      %v1314 = vld [vmem:[%s1307 + $0x18] sm:$0xf]
      %v1315 = vld [vmem:[%s1307 + $0x1c] sm:$0xf]
      %v1316 = vld [vmem:[%s1307 + $0x20] sm:$0xf]
      %v1317 = vld [vmem:[%s1307 + $0x24] sm:$0xf]
      %v1318 = vld [vmem:[%s1307 + $0x28] sm:$0xf]
      %v1319 = vld [vmem:[%s1307 + $0x2c] sm:$0xf]
      %v1320 = vld [vmem:[%s1307 + $0x30] sm:$0xf]
      %v1321 = vld [vmem:[%s1307 + $0x34] sm:$0xf]
      %v1322 = vld [vmem:[%s1307 + $0x38] sm:$0xf]
      %v1323 = vld [vmem:[%s1307 + $0x3c] sm:$0xf]
      %v1324 = vunpack.c.l.b16 %v1208
      %v1325 = vunpack.c.l.b16 %v1222
      %v1326 = vunpack.c.l.b16 %v1236
      %v1327 = vunpack.c.l.b16 %v1250
      %v1328 = vunpack.c.l.b16 %v1264
      %v1329 = vunpack.c.l.b16 %v1278
      %v1330 = vunpack.c.l.b16 %v1292
      %v1331 = vunpack.c.l.b16 %v1306
      %v1332 = vpack.c.b16 %v1325, %v1324
      %v1333 = vpack.c.b16 %v1327, %v1326
      %v1334 = vpack.c.b16 %v1329, %v1328
      %v1335 = vpack.c.b16 %v1331, %v1330
      %v1356 = vunpack.c.l.b16 %v1308
      %v1357 = vunpack.c.l.b16 %v1309
      %v1358 = vunpack.c.l.b16 %v1310
      %v1359 = vunpack.c.l.b16 %v1311
      %v1360 = vunpack.c.l.b16 %v1312
      %v1361 = vunpack.c.l.b16 %v1313
      %v1362 = vunpack.c.l.b16 %v1314
      %v1363 = vunpack.c.l.b16 %v1315
      %v1364 = vunpack.c.l.b16 %v1316
      %v1365 = vunpack.c.l.b16 %v1317
      %v1366 = vunpack.c.l.b16 %v1318
      %v1367 = vunpack.c.l.b16 %v1319
      %v1368 = vunpack.c.l.b16 %v1320
      %v1369 = vunpack.c.l.b16 %v1321
      %v1370 = vunpack.c.l.b16 %v1322
      %v1371 = vunpack.c.l.b16 %v1323
      %v1372 = vpack.c.b16 %v1357, %v1356
      %v1373 = vpack.c.b16 %v1359, %v1358
      %v1374 = vpack.c.b16 %v1361, %v1360
      %v1375 = vpack.c.b16 %v1363, %v1362
      %v1376 = vpack.c.b16 %v1365, %v1364
      %v1377 = vpack.c.b16 %v1367, %v1366
      %v1378 = vpack.c.b16 %v1369, %v1368
      %v1379 = vpack.c.b16 %v1371, %v1370
      %1388 = vmatprep.subr.bf16.mxu0 0
      %1389 = vmatpush1.bf16.msra.mxu0 %v1372
      %1390 = vmatprep.subr.bf16.mxu0 0
      %1391 = vmatpush1.bf16.msra.mxu0 %v1373
      %1392 = vmatprep.subr.bf16.mxu0 0
      %1393 = vmatpush1.bf16.msra.mxu0 %v1374
      %1394 = vmatprep.subr.bf16.mxu0 0
      %1395 = vmatpush1.bf16.msra.mxu0 %v1375
      %1396 = vmatprep.subr.bf16.mxu0 0
      %1397 = vmatpush1.bf16.msra.mxu0 %v1376
      %1398 = vmatprep.subr.bf16.mxu0 0
      %1399 = vmatpush1.bf16.msra.mxu0 %v1377
      %1400 = vmatprep.subr.bf16.mxu0 0
      %1401 = vmatpush1.bf16.msra.mxu0 %v1378
      %1402 = vmatprep.subr.bf16.mxu0 0
      %1403 = vmatpush1.bf16.msra.mxu0 %v1379
      %1404 = vmatprep.subr.bf16.mxu0 0
      %1405 = vmatpush1.bf16.msra.mxu0 0
      %1406 = vmatprep.subr.bf16.mxu0 0
      %1407 = vmatpush1.bf16.msra.mxu0 0
      %1408 = vmatprep.subr.bf16.mxu0 0
      %1409 = vmatpush1.bf16.msra.mxu0 0
      %1410 = vmatprep.subr.bf16.mxu0 0
      %1411 = vmatpush1.bf16.msra.mxu0 0
      %1412 = vmatprep.subr.bf16.mxu0 0
      %1413 = vmatpush1.bf16.msra.mxu0 0
      %1414 = vmatprep.subr.bf16.mxu0 0
      %1415 = vmatpush1.bf16.msra.mxu0 0
      %1416 = vmatprep.subr.bf16.mxu0 0
      %1417 = vmatpush1.bf16.msra.mxu0 0
      %1418 = vmatprep.subr.bf16.mxu0 0
      %1419 = vmatpush1.bf16.msra.mxu0 0
      %1420 = vmatprep.mubr.bf16.mxu0 0
      %1421 = vmatmul.mubr.bf16.gmra.mrb[0].mxu0 %v1332
      %v1422 = vpop.f32.mrb[0].mxu0
      %v1423 = vadd.f32 0.0, %v1422
      %v1424 = vpop.f32.mrb[0].mxu0
      %v1425 = vpop.f32.mrb[0].mxu0
      %v1426 = vadd.f32 0.0, %v1425
      %v1427 = vpop.f32.mrb[0].mxu0
      %1428 = vmatprep.mubr.bf16.mxu0 0
      %1429 = vmatmul.mubr.bf16.gmra.mrb[0].mxu0 %v1333
      %v1430 = vpop.f32.mrb[0].mxu0
      %v1431 = vadd.f32 0.0, %v1430
      %v1432 = vpop.f32.mrb[0].mxu0
      %v1433 = vpop.f32.mrb[0].mxu0
      %v1434 = vadd.f32 0.0, %v1433
      %v1435 = vpop.f32.mrb[0].mxu0
      %1436 = vmatprep.mubr.bf16.mxu0 0
      %1437 = vmatmul.mubr.bf16.gmra.mrb[0].mxu0 %v1334
      %v1438 = vpop.f32.mrb[0].mxu0
      %v1439 = vadd.f32 0.0, %v1438
      %v1440 = vpop.f32.mrb[0].mxu0
      %v1441 = vpop.f32.mrb[0].mxu0
      %v1442 = vadd.f32 0.0, %v1441
      %v1443 = vpop.f32.mrb[0].mxu0
      %1444 = vmatprep.mubr.bf16.mxu0 0
      %1445 = vmatmul.mubr.bf16.gmra.mrb[0].mxu0 %v1335
      %v1446 = vpop.f32.mrb[0].mxu0
      %v1447 = vadd.f32 0.0, %v1446
      %v1448 = vpop.f32.mrb[0].mxu0
      %v1449 = vpop.f32.mrb[0].mxu0
      %v1450 = vadd.f32 0.0, %v1449
      %v1451 = vpop.f32.mrb[0].mxu0
      %1452 = vdwg.mxu0
      %v1453 = vadd.f32 %v1171, %v1423
      %v1454 = vadd.f32 %v1172, %v1426
      %v1455 = vadd.f32 %v1173, %v1431
      %v1456 = vadd.f32 %v1174, %v1434
      %v1457 = vadd.f32 %v1175, %v1439
      %v1458 = vadd.f32 %v1176, %v1442
      %v1459 = vadd.f32 %v1177, %v1447
      %v1460 = vadd.f32 %v1178, %v1450
      %s1461 = scalar_lea.vmem %s210, 8
      %v1462 = vld [vmem:[%s1461] sm:$0xf]
      %v1463 = vld [vmem:[%s1461 + $0x8] sm:$0xf]
      %v1464 = vld [vmem:[%s1461 + $0x10] sm:$0xf]
      %v1465 = vld [vmem:[%s1461 + $0x18] sm:$0xf]
      %v1466 = vld [vmem:[%s1461 + $0x20] sm:$0xf]
      %v1467 = vld [vmem:[%s1461 + $0x28] sm:$0xf]
      %v1468 = vld [vmem:[%s1461 + $0x30] sm:$0xf]
      %v1469 = vld [vmem:[%s1461 + $0x38] sm:$0xf]
      %s1470 = scalar_lea.vmem %s215, 384
      %v1471 = vld [vmem:[%s1470] sm:$0xf]
      %v1472 = vld [vmem:[%s1470 + $0x4] sm:$0xf]
      %v1473 = vld [vmem:[%s1470 + $0x8] sm:$0xf]
      %v1474 = vld [vmem:[%s1470 + $0xc] sm:$0xf]
      %v1475 = vld [vmem:[%s1470 + $0x10] sm:$0xf]
      %v1476 = vld [vmem:[%s1470 + $0x14] sm:$0xf]
      %v1477 = vld [vmem:[%s1470 + $0x18] sm:$0xf]
      %v1478 = vld [vmem:[%s1470 + $0x1c] sm:$0xf]
      %v1479 = vld [vmem:[%s1470 + $0x20] sm:$0xf]
      %v1480 = vld [vmem:[%s1470 + $0x24] sm:$0xf]
      %v1481 = vld [vmem:[%s1470 + $0x28] sm:$0xf]
      %v1482 = vld [vmem:[%s1470 + $0x2c] sm:$0xf]
      %v1483 = vld [vmem:[%s1470 + $0x30] sm:$0xf]
      %v1484 = vld [vmem:[%s1470 + $0x34] sm:$0xf]
      %v1485 = vld [vmem:[%s1470 + $0x38] sm:$0xf]
      %v1486 = vld [vmem:[%s1470 + $0x3c] sm:$0xf]
      %v1495 = vunpack.c.l.b16 %v1462
      %v1496 = vunpack.c.l.b16 %v1463
      %v1497 = vunpack.c.l.b16 %v1464
      %v1498 = vunpack.c.l.b16 %v1465
      %v1499 = vunpack.c.l.b16 %v1466
      %v1500 = vunpack.c.l.b16 %v1467
      %v1501 = vunpack.c.l.b16 %v1468
      %v1502 = vunpack.c.l.b16 %v1469
      %v1503 = vpack.c.b16 %v1496, %v1495
      %v1504 = vpack.c.b16 %v1498, %v1497
      %v1505 = vpack.c.b16 %v1500, %v1499
      %v1506 = vpack.c.b16 %v1502, %v1501
      %v1527 = vunpack.c.l.b16 %v1471
      %v1528 = vunpack.c.l.b16 %v1472
      %v1529 = vunpack.c.l.b16 %v1473
      %v1530 = vunpack.c.l.b16 %v1474
      %v1531 = vunpack.c.l.b16 %v1475
      %v1532 = vunpack.c.l.b16 %v1476
      %v1533 = vunpack.c.l.b16 %v1477
      %v1534 = vunpack.c.l.b16 %v1478
      %v1535 = vunpack.c.l.b16 %v1479
      %v1536 = vunpack.c.l.b16 %v1480
      %v1537 = vunpack.c.l.b16 %v1481
      %v1538 = vunpack.c.l.b16 %v1482
      %v1539 = vunpack.c.l.b16 %v1483
      %v1540 = vunpack.c.l.b16 %v1484
      %v1541 = vunpack.c.l.b16 %v1485
      %v1542 = vunpack.c.l.b16 %v1486
      %v1543 = vpack.c.b16 %v1528, %v1527
      %v1544 = vpack.c.b16 %v1530, %v1529
      %v1545 = vpack.c.b16 %v1532, %v1531
      %v1546 = vpack.c.b16 %v1534, %v1533
      %v1547 = vpack.c.b16 %v1536, %v1535
      %v1548 = vpack.c.b16 %v1538, %v1537
      %v1549 = vpack.c.b16 %v1540, %v1539
      %v1550 = vpack.c.b16 %v1542, %v1541
      %1559 = vmatprep.subr.bf16.mxu0 0
      %1560 = vmatpush1.bf16.msra.mxu0 %v1543
      %1561 = vmatprep.subr.bf16.mxu0 0
      %1562 = vmatpush1.bf16.msra.mxu0 %v1544
      %1563 = vmatprep.subr.bf16.mxu0 0
      %1564 = vmatpush1.bf16.msra.mxu0 %v1545
      %1565 = vmatprep.subr.bf16.mxu0 0
      %1566 = vmatpush1.bf16.msra.mxu0 %v1546
      %1567 = vmatprep.subr.bf16.mxu0 0
      %1568 = vmatpush1.bf16.msra.mxu0 %v1547
      %1569 = vmatprep.subr.bf16.mxu0 0
      %1570 = vmatpush1.bf16.msra.mxu0 %v1548
      %1571 = vmatprep.subr.bf16.mxu0 0
      %1572 = vmatpush1.bf16.msra.mxu0 %v1549
      %1573 = vmatprep.subr.bf16.mxu0 0
      %1574 = vmatpush1.bf16.msra.mxu0 %v1550
      %1575 = vmatprep.subr.bf16.mxu0 0
      %1576 = vmatpush1.bf16.msra.mxu0 0
      %1577 = vmatprep.subr.bf16.mxu0 0
      %1578 = vmatpush1.bf16.msra.mxu0 0
      %1579 = vmatprep.subr.bf16.mxu0 0
      %1580 = vmatpush1.bf16.msra.mxu0 0
      %1581 = vmatprep.subr.bf16.mxu0 0
      %1582 = vmatpush1.bf16.msra.mxu0 0
      %1583 = vmatprep.subr.bf16.mxu0 0
      %1584 = vmatpush1.bf16.msra.mxu0 0
      %1585 = vmatprep.subr.bf16.mxu0 0
      %1586 = vmatpush1.bf16.msra.mxu0 0
      %1587 = vmatprep.subr.bf16.mxu0 0
      %1588 = vmatpush1.bf16.msra.mxu0 0
      %1589 = vmatprep.subr.bf16.mxu0 0
      %1590 = vmatpush1.bf16.msra.mxu0 0
      %1591 = vmatprep.mubr.bf16.mxu0 0
      %1592 = vmatmul.mubr.bf16.gmra.mrb[0].mxu0 %v1503
      %v1593 = vpop.f32.mrb[0].mxu0
      %v1594 = vadd.f32 0.0, %v1593
      %v1595 = vpop.f32.mrb[0].mxu0
      %v1596 = vpop.f32.mrb[0].mxu0
      %v1597 = vadd.f32 0.0, %v1596
      %v1598 = vpop.f32.mrb[0].mxu0
      %1599 = vmatprep.mubr.bf16.mxu0 0
      %1600 = vmatmul.mubr.bf16.gmra.mrb[0].mxu0 %v1504
      %v1601 = vpop.f32.mrb[0].mxu0
      %v1602 = vadd.f32 0.0, %v1601
      %v1603 = vpop.f32.mrb[0].mxu0
      %v1604 = vpop.f32.mrb[0].mxu0
      %v1605 = vadd.f32 0.0, %v1604
      %v1606 = vpop.f32.mrb[0].mxu0
      %1607 = vmatprep.mubr.bf16.mxu0 0
      %1608 = vmatmul.mubr.bf16.gmra.mrb[0].mxu0 %v1505
      %v1609 = vpop.f32.mrb[0].mxu0
      %v1610 = vadd.f32 0.0, %v1609
      %v1611 = vpop.f32.mrb[0].mxu0
      %v1612 = vpop.f32.mrb[0].mxu0
      %v1613 = vadd.f32 0.0, %v1612
      %v1614 = vpop.f32.mrb[0].mxu0
      %1615 = vmatprep.mubr.bf16.mxu0 0
      %1616 = vmatmul.mubr.bf16.gmra.mrb[0].mxu0 %v1506
      %v1617 = vpop.f32.mrb[0].mxu0
      %v1618 = vadd.f32 0.0, %v1617
      %v1619 = vpop.f32.mrb[0].mxu0
      %v1620 = vpop.f32.mrb[0].mxu0
      %v1621 = vadd.f32 0.0, %v1620
      %v1622 = vpop.f32.mrb[0].mxu0
      %1623 = vdwg.mxu0
      %v1624 = vadd.f32 %v1453, %v1594
      %v1625 = vadd.f32 %v1454, %v1597
      %v1626 = vadd.f32 %v1455, %v1602
      %v1627 = vadd.f32 %v1456, %v1605
      %v1628 = vadd.f32 %v1457, %v1610
      %v1629 = vadd.f32 %v1458, %v1613
      %v1630 = vadd.f32 %v1459, %v1618
      %v1631 = vadd.f32 %v1460, %v1621
      %s1632 = scalar_lea.vmem %s210, 80
      %v1633 = vld [vmem:[%s1632] sm:$0xf]
      %v1634 = vld [vmem:[%s1632 + $0x8] sm:$0xf]
      %v1635 = vld [vmem:[%s1632 + $0x10] sm:$0xf]
      %v1636 = vld [vmem:[%s1632 + $0x18] sm:$0xf]
      %v1637 = vld [vmem:[%s1632 + $0x20] sm:$0xf]
      %v1638 = vld [vmem:[%s1632 + $0x28] sm:$0xf]
      %v1639 = vld [vmem:[%s1632 + $0x30] sm:$0xf]
      %v1640 = vld [vmem:[%s1632 + $0x38] sm:$0xf]
      %s1641 = scalar_lea.vmem %s215, 448
      %v1642 = vld [vmem:[%s1641] sm:$0xf]
      %v1643 = vld [vmem:[%s1641 + $0x4] sm:$0xf]
      %v1644 = vld [vmem:[%s1641 + $0x8] sm:$0xf]
      %v1645 = vld [vmem:[%s1641 + $0xc] sm:$0xf]
      %v1646 = vld [vmem:[%s1641 + $0x10] sm:$0xf]
      %v1647 = vld [vmem:[%s1641 + $0x14] sm:$0xf]
      %v1648 = vld [vmem:[%s1641 + $0x18] sm:$0xf]
      %v1649 = vld [vmem:[%s1641 + $0x1c] sm:$0xf]
      %v1650 = vld [vmem:[%s1641 + $0x20] sm:$0xf]
      %v1651 = vld [vmem:[%s1641 + $0x24] sm:$0xf]
      %v1652 = vld [vmem:[%s1641 + $0x28] sm:$0xf]
      %v1653 = vld [vmem:[%s1641 + $0x2c] sm:$0xf]
      %v1654 = vld [vmem:[%s1641 + $0x30] sm:$0xf]
      %v1655 = vld [vmem:[%s1641 + $0x34] sm:$0xf]
      %v1656 = vld [vmem:[%s1641 + $0x38] sm:$0xf]
      %v1657 = vld [vmem:[%s1641 + $0x3c] sm:$0xf]
      %v1666 = vunpack.c.l.b16 %v1633
      %v1667 = vunpack.c.l.b16 %v1634
      %v1668 = vunpack.c.l.b16 %v1635
      %v1669 = vunpack.c.l.b16 %v1636
      %v1670 = vunpack.c.l.b16 %v1637
      %v1671 = vunpack.c.l.b16 %v1638
      %v1672 = vunpack.c.l.b16 %v1639
      %v1673 = vunpack.c.l.b16 %v1640
      %v1674 = vpack.c.b16 %v1667, %v1666
      %v1675 = vpack.c.b16 %v1669, %v1668
      %v1676 = vpack.c.b16 %v1671, %v1670
      %v1677 = vpack.c.b16 %v1673, %v1672
      %v1698 = vunpack.c.l.b16 %v1642
      %v1699 = vunpack.c.l.b16 %v1643
      %v1700 = vunpack.c.l.b16 %v1644
      %v1701 = vunpack.c.l.b16 %v1645
      %v1702 = vunpack.c.l.b16 %v1646
      %v1703 = vunpack.c.l.b16 %v1647
      %v1704 = vunpack.c.l.b16 %v1648
      %v1705 = vunpack.c.l.b16 %v1649
      %v1706 = vunpack.c.l.b16 %v1650
      %v1707 = vunpack.c.l.b16 %v1651
      %v1708 = vunpack.c.l.b16 %v1652
      %v1709 = vunpack.c.l.b16 %v1653
      %v1710 = vunpack.c.l.b16 %v1654
      %v1711 = vunpack.c.l.b16 %v1655
      %v1712 = vunpack.c.l.b16 %v1656
      %v1713 = vunpack.c.l.b16 %v1657
      %v1714 = vpack.c.b16 %v1699, %v1698
      %v1715 = vpack.c.b16 %v1701, %v1700
      %v1716 = vpack.c.b16 %v1703, %v1702
      %v1717 = vpack.c.b16 %v1705, %v1704
      %v1718 = vpack.c.b16 %v1707, %v1706
      %v1719 = vpack.c.b16 %v1709, %v1708
      %v1720 = vpack.c.b16 %v1711, %v1710
      %v1721 = vpack.c.b16 %v1713, %v1712
      %1730 = vmatprep.subr.bf16.mxu0 0
      %1731 = vmatpush1.bf16.msra.mxu0 %v1714
      %1732 = vmatprep.subr.bf16.mxu0 0
      %1733 = vmatpush1.bf16.msra.mxu0 %v1715
      %1734 = vmatprep.subr.bf16.mxu0 0
      %1735 = vmatpush1.bf16.msra.mxu0 %v1716
      %1736 = vmatprep.subr.bf16.mxu0 0
      %1737 = vmatpush1.bf16.msra.mxu0 %v1717
      %1738 = vmatprep.subr.bf16.mxu0 0
      %1739 = vmatpush1.bf16.msra.mxu0 %v1718
      %1740 = vmatprep.subr.bf16.mxu0 0
      %1741 = vmatpush1.bf16.msra.mxu0 %v1719
      %1742 = vmatprep.subr.bf16.mxu0 0
      %1743 = vmatpush1.bf16.msra.mxu0 %v1720
      %1744 = vmatprep.subr.bf16.mxu0 0
      %1745 = vmatpush1.bf16.msra.mxu0 %v1721
      %1746 = vmatprep.subr.bf16.mxu0 0
      %1747 = vmatpush1.bf16.msra.mxu0 0
      %1748 = vmatprep.subr.bf16.mxu0 0
      %1749 = vmatpush1.bf16.msra.mxu0 0
      %1750 = vmatprep.subr.bf16.mxu0 0
      %1751 = vmatpush1.bf16.msra.mxu0 0
      %1752 = vmatprep.subr.bf16.mxu0 0
      %1753 = vmatpush1.bf16.msra.mxu0 0
      %1754 = vmatprep.subr.bf16.mxu0 0
      %1755 = vmatpush1.bf16.msra.mxu0 0
      %1756 = vmatprep.subr.bf16.mxu0 0
      %1757 = vmatpush1.bf16.msra.mxu0 0
      %1758 = vmatprep.subr.bf16.mxu0 0
      %1759 = vmatpush1.bf16.msra.mxu0 0
      %1760 = vmatprep.subr.bf16.mxu0 0
      %1761 = vmatpush1.bf16.msra.mxu0 0
      %1762 = vmatprep.mubr.bf16.mxu0 0
      %1763 = vmatmul.mubr.bf16.gmra.mrb[0].mxu0 %v1674
      %v1764 = vpop.f32.mrb[0].mxu0
      %v1765 = vadd.f32 0.0, %v1764
      %v1766 = vpop.f32.mrb[0].mxu0
      %v1767 = vpop.f32.mrb[0].mxu0
      %v1768 = vadd.f32 0.0, %v1767
      %v1769 = vpop.f32.mrb[0].mxu0
      %1770 = vmatprep.mubr.bf16.mxu0 0
      %1771 = vmatmul.mubr.bf16.gmra.mrb[0].mxu0 %v1675
      %v1772 = vpop.f32.mrb[0].mxu0
      %v1773 = vadd.f32 0.0, %v1772
      %v1774 = vpop.f32.mrb[0].mxu0
      %v1775 = vpop.f32.mrb[0].mxu0
      %v1776 = vadd.f32 0.0, %v1775
      %v1777 = vpop.f32.mrb[0].mxu0
      %1778 = vmatprep.mubr.bf16.mxu0 0
      %1779 = vmatmul.mubr.bf16.gmra.mrb[0].mxu0 %v1676
      %v1780 = vpop.f32.mrb[0].mxu0
      %v1781 = vadd.f32 0.0, %v1780
      %v1782 = vpop.f32.mrb[0].mxu0
      %v1783 = vpop.f32.mrb[0].mxu0
      %v1784 = vadd.f32 0.0, %v1783
      %v1785 = vpop.f32.mrb[0].mxu0
      %1786 = vmatprep.mubr.bf16.mxu0 0
      %1787 = vmatmul.mubr.bf16.gmra.mrb[0].mxu0 %v1677
      %v1788 = vpop.f32.mrb[0].mxu0
      %v1789 = vadd.f32 0.0, %v1788
      %v1790 = vpop.f32.mrb[0].mxu0
      %v1791 = vpop.f32.mrb[0].mxu0
      %v1792 = vadd.f32 0.0, %v1791
      %v1793 = vpop.f32.mrb[0].mxu0
      %1794 = vdwg.mxu0
      %v1795 = vadd.f32 %v1624, %v1765
      %v1796 = vadd.f32 %v1625, %v1768
      %v1797 = vadd.f32 %v1626, %v1773
      %v1798 = vadd.f32 %v1627, %v1776
      %v1799 = vadd.f32 %v1628, %v1781
      %v1800 = vadd.f32 %v1629, %v1784
      %v1801 = vadd.f32 %v1630, %v1789
      %v1802 = vadd.f32 %v1631, %v1792
      %v1803 = vld [vmem:[%s1461] sm:$0xf]
      %v1804 = vld [vmem:[%s1461 + $0x4] sm:$0x1]
      %v1805 = vld [vmem:[%s1461 + $0x8] sm:$0xf]
      %v1806 = vld [vmem:[%s1461 + $0xc] sm:$0x1]
      %v1807 = vld [vmem:[%s1461 + $0x10] sm:$0xf]
      %v1808 = vld [vmem:[%s1461 + $0x14] sm:$0x1]
      %v1809 = vld [vmem:[%s1461 + $0x18] sm:$0xf]
      %v1810 = vld [vmem:[%s1461 + $0x1c] sm:$0x1]
      %v1811 = vld [vmem:[%s1461 + $0x20] sm:$0xf]
      %v1812 = vld [vmem:[%s1461 + $0x24] sm:$0x1]
      %v1813 = vld [vmem:[%s1461 + $0x28] sm:$0xf]
      %v1814 = vld [vmem:[%s1461 + $0x2c] sm:$0x1]
      %v1815 = vld [vmem:[%s1461 + $0x30] sm:$0xf]
      %v1816 = vld [vmem:[%s1461 + $0x34] sm:$0x1]
      %v1817 = vld [vmem:[%s1461 + $0x38] sm:$0xf]
      %v1818 = vld [vmem:[%s1461 + $0x3c] sm:$0x1]
      %v1820 = vshrl.u32 %v1803, 16
      %v1822 = vrot.slane %v1820, 4
      %v1823 = vshll.u32 %v1803, 16
      %v1825 = vrot.slane %v1823, 5
      %v1826 = vor.u32 %v1822, %v1825
      %v1827 = vrot.slane %v1826, 4
      %v1829 = vshll.u32 %v1804, 16
      %v1831 = vrot.slane %v1829, 5
      %v1832 = vsel %vm570, %v1827, %v1831
      %v1834 = vshrl.u32 %v1805, 16
      %v1836 = vrot.slane %v1834, 4
      %v1837 = vshll.u32 %v1805, 16
      %v1839 = vrot.slane %v1837, 5
      %v1840 = vor.u32 %v1836, %v1839
      %v1841 = vrot.slane %v1840, 4
      %v1843 = vshll.u32 %v1806, 16
      %v1845 = vrot.slane %v1843, 5
      %v1846 = vsel %vm570, %v1841, %v1845
      %v1848 = vshrl.u32 %v1807, 16
      %v1850 = vrot.slane %v1848, 4
      %v1851 = vshll.u32 %v1807, 16
      %v1853 = vrot.slane %v1851, 5
      %v1854 = vor.u32 %v1850, %v1853
      %v1855 = vrot.slane %v1854, 4
      %v1857 = vshll.u32 %v1808, 16
      %v1859 = vrot.slane %v1857, 5
      %v1860 = vsel %vm570, %v1855, %v1859
      %v1862 = vshrl.u32 %v1809, 16
      %v1864 = vrot.slane %v1862, 4
      %v1865 = vshll.u32 %v1809, 16
      %v1867 = vrot.slane %v1865, 5
      %v1868 = vor.u32 %v1864, %v1867
      %v1869 = vrot.slane %v1868, 4
      %v1871 = vshll.u32 %v1810, 16
      %v1873 = vrot.slane %v1871, 5
      %v1874 = vsel %vm570, %v1869, %v1873
      %v1876 = vshrl.u32 %v1811, 16
      %v1878 = vrot.slane %v1876, 4
      %v1879 = vshll.u32 %v1811, 16
      %v1881 = vrot.slane %v1879, 5
      %v1882 = vor.u32 %v1878, %v1881
      %v1883 = vrot.slane %v1882, 4
      %v1885 = vshll.u32 %v1812, 16
      %v1887 = vrot.slane %v1885, 5
      %v1888 = vsel %vm570, %v1883, %v1887
      %v1890 = vshrl.u32 %v1813, 16
      %v1892 = vrot.slane %v1890, 4
      %v1893 = vshll.u32 %v1813, 16
      %v1895 = vrot.slane %v1893, 5
      %v1896 = vor.u32 %v1892, %v1895
      %v1897 = vrot.slane %v1896, 4
      %v1899 = vshll.u32 %v1814, 16
      %v1901 = vrot.slane %v1899, 5
      %v1902 = vsel %vm570, %v1897, %v1901
      %v1904 = vshrl.u32 %v1815, 16
      %v1906 = vrot.slane %v1904, 4
      %v1907 = vshll.u32 %v1815, 16
      %v1909 = vrot.slane %v1907, 5
      %v1910 = vor.u32 %v1906, %v1909
      %v1911 = vrot.slane %v1910, 4
      %v1913 = vshll.u32 %v1816, 16
      %v1915 = vrot.slane %v1913, 5
      %v1916 = vsel %vm570, %v1911, %v1915
      %v1918 = vshrl.u32 %v1817, 16
      %v1920 = vrot.slane %v1918, 4
      %v1921 = vshll.u32 %v1817, 16
      %v1923 = vrot.slane %v1921, 5
      %v1924 = vor.u32 %v1920, %v1923
      %v1925 = vrot.slane %v1924, 4
      %v1927 = vshll.u32 %v1818, 16
      %v1929 = vrot.slane %v1927, 5
      %v1930 = vsel %vm570, %v1925, %v1929
      %s1931 = scalar_lea.vmem %s215, 512
      %v1932 = vld [vmem:[%s1931] sm:$0xf]
      %v1933 = vld [vmem:[%s1931 + $0x4] sm:$0xf]
      %v1934 = vld [vmem:[%s1931 + $0x8] sm:$0xf]
      %v1935 = vld [vmem:[%s1931 + $0xc] sm:$0xf]
      %v1936 = vld [vmem:[%s1931 + $0x10] sm:$0xf]
      %v1937 = vld [vmem:[%s1931 + $0x14] sm:$0xf]
      %v1938 = vld [vmem:[%s1931 + $0x18] sm:$0xf]
      %v1939 = vld [vmem:[%s1931 + $0x1c] sm:$0xf]
      %v1940 = vld [vmem:[%s1931 + $0x20] sm:$0xf]
      %v1941 = vld [vmem:[%s1931 + $0x24] sm:$0xf]
      %v1942 = vld [vmem:[%s1931 + $0x28] sm:$0xf]
      %v1943 = vld [vmem:[%s1931 + $0x2c] sm:$0xf]
      %v1944 = vld [vmem:[%s1931 + $0x30] sm:$0xf]
      %v1945 = vld [vmem:[%s1931 + $0x34] sm:$0xf]
      %v1946 = vld [vmem:[%s1931 + $0x38] sm:$0xf]
      %v1947 = vld [vmem:[%s1931 + $0x3c] sm:$0xf]
      %v1948 = vunpack.c.l.b16 %v1832
      %v1949 = vunpack.c.l.b16 %v1846
      %v1950 = vunpack.c.l.b16 %v1860
      %v1951 = vunpack.c.l.b16 %v1874
      %v1952 = vunpack.c.l.b16 %v1888
      %v1953 = vunpack.c.l.b16 %v1902
      %v1954 = vunpack.c.l.b16 %v1916
      %v1955 = vunpack.c.l.b16 %v1930
      %v1956 = vpack.c.b16 %v1949, %v1948
      %v1957 = vpack.c.b16 %v1951, %v1950
      %v1958 = vpack.c.b16 %v1953, %v1952
      %v1959 = vpack.c.b16 %v1955, %v1954
      %v1980 = vunpack.c.l.b16 %v1932
      %v1981 = vunpack.c.l.b16 %v1933
      %v1982 = vunpack.c.l.b16 %v1934
      %v1983 = vunpack.c.l.b16 %v1935
      %v1984 = vunpack.c.l.b16 %v1936
      %v1985 = vunpack.c.l.b16 %v1937
      %v1986 = vunpack.c.l.b16 %v1938
      %v1987 = vunpack.c.l.b16 %v1939
      %v1988 = vunpack.c.l.b16 %v1940
      %v1989 = vunpack.c.l.b16 %v1941
      %v1990 = vunpack.c.l.b16 %v1942
      %v1991 = vunpack.c.l.b16 %v1943
      %v1992 = vunpack.c.l.b16 %v1944
      %v1993 = vunpack.c.l.b16 %v1945
      %v1994 = vunpack.c.l.b16 %v1946
      %v1995 = vunpack.c.l.b16 %v1947
      %v1996 = vpack.c.b16 %v1981, %v1980
      %v1997 = vpack.c.b16 %v1983, %v1982
      %v1998 = vpack.c.b16 %v1985, %v1984
      %v1999 = vpack.c.b16 %v1987, %v1986
      %v2000 = vpack.c.b16 %v1989, %v1988
      %v2001 = vpack.c.b16 %v1991, %v1990
      %v2002 = vpack.c.b16 %v1993, %v1992
      %v2003 = vpack.c.b16 %v1995, %v1994
      %2012 = vmatprep.subr.bf16.mxu0 0
      %2013 = vmatpush1.bf16.msra.mxu0 %v1996
      %2014 = vmatprep.subr.bf16.mxu0 0
      %2015 = vmatpush1.bf16.msra.mxu0 %v1997
      %2016 = vmatprep.subr.bf16.mxu0 0
      %2017 = vmatpush1.bf16.msra.mxu0 %v1998
      %2018 = vmatprep.subr.bf16.mxu0 0
      %2019 = vmatpush1.bf16.msra.mxu0 %v1999
      %2020 = vmatprep.subr.bf16.mxu0 0
      %2021 = vmatpush1.bf16.msra.mxu0 %v2000
      %2022 = vmatprep.subr.bf16.mxu0 0
      %2023 = vmatpush1.bf16.msra.mxu0 %v2001
      %2024 = vmatprep.subr.bf16.mxu0 0
      %2025 = vmatpush1.bf16.msra.mxu0 %v2002
      %2026 = vmatprep.subr.bf16.mxu0 0
      %2027 = vmatpush1.bf16.msra.mxu0 %v2003
      %2028 = vmatprep.subr.bf16.mxu0 0
      %2029 = vmatpush1.bf16.msra.mxu0 0
      %2030 = vmatprep.subr.bf16.mxu0 0
      %2031 = vmatpush1.bf16.msra.mxu0 0
      %2032 = vmatprep.subr.bf16.mxu0 0
      %2033 = vmatpush1.bf16.msra.mxu0 0
      %2034 = vmatprep.subr.bf16.mxu0 0
      %2035 = vmatpush1.bf16.msra.mxu0 0
      %2036 = vmatprep.subr.bf16.mxu0 0
      %2037 = vmatpush1.bf16.msra.mxu0 0
      %2038 = vmatprep.subr.bf16.mxu0 0
      %2039 = vmatpush1.bf16.msra.mxu0 0
      %2040 = vmatprep.subr.bf16.mxu0 0
      %2041 = vmatpush1.bf16.msra.mxu0 0
      %2042 = vmatprep.subr.bf16.mxu0 0
      %2043 = vmatpush1.bf16.msra.mxu0 0
      %2044 = vmatprep.mubr.bf16.mxu0 0
      %2045 = vmatmul.mubr.bf16.gmra.mrb[0].mxu0 %v1956
      %v2046 = vpop.f32.mrb[0].mxu0
      %v2047 = vadd.f32 0.0, %v2046
      %v2048 = vpop.f32.mrb[0].mxu0
      %v2049 = vpop.f32.mrb[0].mxu0
      %v2050 = vadd.f32 0.0, %v2049
      %v2051 = vpop.f32.mrb[0].mxu0
      %2052 = vmatprep.mubr.bf16.mxu0 0
      %2053 = vmatmul.mubr.bf16.gmra.mrb[0].mxu0 %v1957
      %v2054 = vpop.f32.mrb[0].mxu0
      %v2055 = vadd.f32 0.0, %v2054
      %v2056 = vpop.f32.mrb[0].mxu0
      %v2057 = vpop.f32.mrb[0].mxu0
      %v2058 = vadd.f32 0.0, %v2057
      %v2059 = vpop.f32.mrb[0].mxu0
      %2060 = vmatprep.mubr.bf16.mxu0 0
      %2061 = vmatmul.mubr.bf16.gmra.mrb[0].mxu0 %v1958
      %v2062 = vpop.f32.mrb[0].mxu0
      %v2063 = vadd.f32 0.0, %v2062
      %v2064 = vpop.f32.mrb[0].mxu0
      %v2065 = vpop.f32.mrb[0].mxu0
      %v2066 = vadd.f32 0.0, %v2065
      %v2067 = vpop.f32.mrb[0].mxu0
      %2068 = vmatprep.mubr.bf16.mxu0 0
      %2069 = vmatmul.mubr.bf16.gmra.mrb[0].mxu0 %v1959
      %v2070 = vpop.f32.mrb[0].mxu0
      %v2071 = vadd.f32 0.0, %v2070
      %v2072 = vpop.f32.mrb[0].mxu0
      %v2073 = vpop.f32.mrb[0].mxu0
      %v2074 = vadd.f32 0.0, %v2073
      %v2075 = vpop.f32.mrb[0].mxu0
      %2076 = vdwg.mxu0
      %v2077 = vadd.f32 %v1795, %v2047
      %v2078 = vadd.f32 %v1796, %v2050
      %v2079 = vadd.f32 %v1797, %v2055
      %v2080 = vadd.f32 %v1798, %v2058
      %v2081 = vadd.f32 %v1799, %v2063
      %v2082 = vadd.f32 %v1800, %v2066
      %v2083 = vadd.f32 %v1801, %v2071
      %v2084 = vadd.f32 %v1802, %v2074
      %v2085 = vld [vmem:[%s218] sm:$0x1]
      %v2087 = vlaneseq
      %v2088 = vshrl.u32 %v2087, 7
      %v2089 = vsub.s32 0, %v2088
      %v2090 = vrot.slane %v2085, %v2089
      %v2092 = vadd.f32 %v2077, %v2090
      %v2093 = vadd.f32 %v2078, %v2090
      %v2094 = vadd.f32 %v2079, %v2090
      %v2095 = vadd.f32 %v2080, %v2090
      %v2096 = vadd.f32 %v2081, %v2090
      %v2097 = vadd.f32 %v2082, %v2090
      %v2098 = vadd.f32 %v2083, %v2090
      %v2099 = vadd.f32 %v2084, %v2090
      %v2100 = vmax.f32 %v2092, 0.0
      %v2101 = vmax.f32 %v2093, 0.0
      %v2102 = vmax.f32 %v2094, 0.0
      %v2103 = vmax.f32 %v2095, 0.0
      %v2104 = vmax.f32 %v2096, 0.0
      %v2105 = vmax.f32 %v2097, 0.0
      %v2106 = vmax.f32 %v2098, 0.0
      %v2107 = vmax.f32 %v2099, 0.0
      %v2108 = vpack.c.bf16 %v2101, %v2100
      %v2109 = vpack.c.bf16 %v2103, %v2102
      %v2110 = vpack.c.bf16 %v2105, %v2104
      %v2111 = vpack.c.bf16 %v2107, %v2106
      %v2116 = vunpack.c.l.b16 %v2108
      %v2117 = vunpack.c.h.b16 %v2108
      %v2118 = vunpack.c.l.b16 %v2109
      %v2119 = vunpack.c.h.b16 %v2109
      %v2120 = vunpack.c.l.b16 %v2110
      %v2121 = vunpack.c.h.b16 %v2110
      %v2122 = vunpack.c.l.b16 %v2111
      %v2123 = vunpack.c.h.b16 %v2111
      %v2124 = vpack.c.b16 %v2116, %v2116
      %v2125 = vpack.c.b16 %v2117, %v2117
      %v2126 = vpack.c.b16 %v2118, %v2118
      %v2127 = vpack.c.b16 %v2119, %v2119
      %v2128 = vpack.c.b16 %v2120, %v2120
      %v2129 = vpack.c.b16 %v2121, %v2121
      %v2130 = vpack.c.b16 %v2122, %v2122
      %v2131 = vpack.c.b16 %v2123, %v2123
      %2140 = vst [vmem:[%s226] sm:$0xf] %v2124
      %2141 = vst [vmem:[%s226 + $0x4] sm:$0xf] %v2125
      %2142 = vst [vmem:[%s226 + $0x8] sm:$0xf] %v2126
      %2143 = vst [vmem:[%s226 + $0xc] sm:$0xf] %v2127
      %2144 = vst [vmem:[%s226 + $0x10] sm:$0xf] %v2128
      %2145 = vst [vmem:[%s226 + $0x14] sm:$0xf] %v2129
      %2146 = vst [vmem:[%s226 + $0x18] sm:$0xf] %v2130
      %2147 = vst [vmem:[%s226 + $0x1c] sm:$0xf] %v2131
      %p2148 = scmp.lt.s32.totalorder %s18, 1
      %s2149 = scalar_select %p2148, %s18, 1
      %p2150 = scmp.lt.s32.totalorder %s19, 0
      %s2151 = scalar_select %p2150, %s19, 0
      %s2152 = smul.addr %s2149, 8
      %s2153 = sadd.s32 %s2151, %s2152
      %s2154 = smul.addr %s2153, 4
      %s2155 = scalar_lea.vmem %s3, %s2154
      // Predicated region
      $region33: #{conv_block_forward.5} parent=31 // pred_check
        %p2156 = pneg %p124
      $region34: #{conv_block_forward.5} parent=31 // pred_check_branch
        %2158 = sbr.rel (%p2156) target = $region36
      $region35: #{conv_block_forward.5} parent=31 // pred_region
        _
      $region36: #{conv_block_forward.5} parent=31 // pred_fallthru
        _
    $region32: #{conv_block_forward.5} parent=5 // pred_fallthru
      _
    %p2159 = scmp.le.s32.totalorder 2, %s9
    // Predicated region
    $region37: #{conv_block_forward.5} parent=5 // pred_check
      %p2160 = pneg %p2159
    $region38: #{conv_block_forward.5} parent=5 // pred_check_branch
      %2162 = sbr.rel (%p2160) target = $region40
    $region39: #{conv_block_forward.5} parent=5 // pred_region
      %s2163 = ssub.s32 %s9, 2
      // Predicated region
      $region41: #{conv_block_forward.5} parent=39 // pred_check
        %p2164 = pneg %p130
      $region42: #{conv_block_forward.5} parent=39 // pred_check_branch
        %2166 = sbr.rel (%p2164) target = $region44
      $region43: #{conv_block_forward.5} parent=39 // pred_region
        %p2167 = scmp.lt.s32.totalorder %s20, 1
        %s2168 = scalar_select %p2167, %s20, 1
        %p2169 = scmp.lt.s32.totalorder %s21, 0
        %s2170 = scalar_select %p2169, %s21, 0
        %s2171 = smul.addr %s2168, 8
        %s2172 = sadd.s32 %s2170, %s2171
        %s2173 = smul.addr %s2172, 4
        %s2174 = scalar_lea.vmem %s3, %s2173
      $region44: #{conv_block_forward.5} parent=39 // pred_fallthru
        _
    $region40: #{conv_block_forward.5} parent=5 // pred_fallthru
      _
  $region6: #{conv_block_forward.5} parent=0 // loop_footer
    %s13 = sadd.s32 1, %s9
  $region7: #{conv_block_forward.5} parent=0 // loop_footer_branch
    %8 = sbr.rel target = $region3
  $region8: #{conv_block_forward.5} parent=0 // loop_exit
    _

</llo_original>
